<compile_context>
chip_gen: v5e
topology: v5e:2x2
jax: 0.10.0
libtpu: 0.0.40
codegen_flags: <defaults>
</compile_context>

<pallas_src>
import math
import functools

import jax
import jax.numpy as jnp
from jax.experimental import pallas as pl
from jax.experimental.pallas import tpu as pltpu

F32 = jnp.float32
_NUM_TYPES = 10
_LN_EPS = 1e-5


def _round_up(x, m):
    return ((x + m - 1) // m) * m


def _pack_offsets(D, FF, T_future):
    """Static row/column offsets of the packed weight buffers."""
    o = {}
    Cqkv = _round_up(3 * D, 128)            # fused QKV width, lane-padded
    o['Cqkv'] = Cqkv
    o['RW'] = _round_up(max(D, FF), 8)      # row count of the W buffer
    o['w_o'] = Cqkv
    o['w_1'] = Cqkv + D
    o['w_2'] = Cqkv + D + FF
    o['CW'] = Cqkv + D + FF + D
    v = 0
    o['b_qkv'] = v; v += Cqkv
    o['b_o'] = v; v += D
    o['g1'] = v; v += D
    o['b1'] = v; v += D
    o['b_f1'] = v; v += FF
    o['b_f2'] = v; v += D
    o['g2'] = v; v += D
    o['b2'] = v; v += D
    o['CV'] = v
    F2 = FF // 2
    out_dim = 2 * T_future
    o['F2'] = F2
    o['out_dim'] = out_dim
    o['out_pad'] = _round_up(out_dim, 128)  # lane-dense output store
    o['RH'] = _round_up(max(D, FF, F2), 8)
    o['h1'] = 0
    o['h2'] = FF
    o['h3'] = FF + F2
    o['CH'] = FF + F2 + o['out_pad']
    return o


def _layer_norm(x, g, b):
    mu = jnp.mean(x, axis=-1, keepdims=True)
    var = jnp.mean((x - mu) ** 2, axis=-1, keepdims=True)
    return (x - mu) * jax.lax.rsqrt(var + _LN_EPS) * g + b


def _gelu(x):
    # TODO(synk): PyTorch nn.GELU() is erf-exact; the tanh approximation is used
    # here because lax.erf has no guaranteed Mosaic lowering (max abs err ~3e-3).
    c = math.sqrt(2.0 / math.pi)
    return 0.5 * x * (1.0 + jnp.tanh(c * (x + 0.044715 * x * x * x)))


def _encoder_layer(x, Bn, S, add_mask, W_ref, V_ref, l, D, H, FF, off):
    """One post-LN nn.TransformerEncoderLayer (ReLU FFN) on row-flat x: (Bn*S, D)."""
    Dh = D // H
    M = Bn * S
    Cqkv = off['Cqkv']

    # Fused Q/K/V projection: ONE (M, D) x (D, Cqkv) matmul (q-scale folded in).
    wqkv = W_ref[l, 0:D, 0:Cqkv]
    bqkv = V_ref[l, 0:1, off['b_qkv']:off['b_qkv'] + Cqkv]
    qkv = jnp.dot(x, wqkv, preferred_element_type=F32) + bqkv        # (M, Cqkv)

    heads = []
    for h in range(H):                       # static unroll, single-batch einsums
        lo = h * Dh
        qh = qkv[:, lo:lo + Dh].reshape(Bn, S, Dh)
        kh = qkv[:, D + lo:D + lo + Dh].reshape(Bn, S, Dh)
        vh = qkv[:, 2 * D + lo:2 * D + lo + Dh].reshape(Bn, S, Dh)
        s = jnp.einsum('bqd,bkd->bqk', qh, kh, preferred_element_type=F32)
        if add_mask is not None:
            s = s + add_mask                 # pre-broadcast (Bn, S, S), hoisted
        s = s - jnp.max(s, axis=-1, keepdims=True)
        e = jnp.exp(s)
        inv = pl.reciprocal(jnp.sum(e, axis=-1, keepdims=True), approx=True)
        heads.append(jnp.einsum('bqk,bkd->bqd', e * inv, vh,
                                preferred_element_type=F32))
    attn = jnp.concatenate(heads, axis=-1).reshape(M, D)

    wo = W_ref[l, 0:D, off['w_o']:off['w_o'] + D]
    bo = V_ref[l, 0:1, off['b_o']:off['b_o'] + D]
    sa = jnp.dot(attn, wo, preferred_element_type=F32) + bo          # one (D,D) matmul

    g1 = V_ref[l, 0:1, off['g1']:off['g1'] + D]
    b1 = V_ref[l, 0:1, off['b1']:off['b1'] + D]
    x = _layer_norm(x + sa, g1, b1)

    w1 = W_ref[l, 0:D, off['w_1']:off['w_1'] + FF]
    bf1 = V_ref[l, 0:1, off['b_f1']:off['b_f1'] + FF]
    w2 = W_ref[l, 0:FF, off['w_2']:off['w_2'] + D]
    bf2 = V_ref[l, 0:1, off['b_f2']:off['b_f2'] + D]
    ff = jnp.maximum(jnp.dot(x, w1, preferred_element_type=F32) + bf1, 0.0)
    ff = jnp.dot(ff, w2, preferred_element_type=F32) + bf2

    g2 = V_ref[l, 0:1, off['g2']:off['g2'] + D]
    b2 = V_ref[l, 0:1, off['b2']:off['b2'] + D]
    return _layer_norm(x + ff, g2, b2)


# -----------------------------------------------------------------------------
# Fused per-scene kernel: embed -> temporal stack -> social stack -> head
# -----------------------------------------------------------------------------
def _fused_kernel(N, T, D, H, FF, L, Fin, off, r_bias, r_pe,
                  feat_ref, mask_ref, embpe_ref,
                  tW_ref, tV_ref, sW_ref, sV_ref, hW_ref, hV_ref,
                  out_ref):
    M = N * T

    # --- feature embed + agent-type embed folded into ONE matmul + pos-enc ---
    feat = feat_ref[...]                                  # (N*T, F + num_types)
    w_emb = embpe_ref[0:Fin, :]                           # (Fin, D)
    b_emb = embpe_ref[r_bias:r_bias + 1, :]               # (1, D)
    pe = embpe_ref[r_pe:r_pe + T, :]                      # (T, D)

    x = jnp.dot(feat, w_emb, preferred_element_type=F32) + b_emb
    x = (x.reshape(N, T, D) + pe[None, :, :]).reshape(M, D)

    # --- temporal encoder: batch = N agents, seq = T timesteps, no mask ------
    for l in range(L):
        x = _encoder_layer(x, N, T, None, tW_ref, tV_ref, l, D, H, FF, off)

    # last timestep per agent
    agent = x.reshape(N, T, D)[:, T - 1:T, :].reshape(N, D)

    # --- social encoder: batch = 1 scene, seq = N agents, key-padding mask ---
    add_mask = jnp.broadcast_to(mask_ref[...], (1, N, N))  # hoisted out of the loop
    xs = agent
    for l in range(L):
        xs = _encoder_layer(xs, 1, N, add_mask, sW_ref, sV_ref, l, D, H, FF, off)

    ego = xs[0:1, :]                                       # (1, D)

    # --- prediction head: Linear -> GELU -> Linear -> GELU -> Linear (padded) -
    F2 = off['F2']
    out_pad = off['out_pad']
    wh1 = hW_ref[0:D, off['h1']:off['h1'] + FF]
    bh1 = hV_ref[:, off['h1']:off['h1'] + FF]
    wh2 = hW_ref[0:FF, off['h2']:off['h2'] + F2]
    bh2 = hV_ref[:, off['h2']:off['h2'] + F2]
    wh3 = hW_ref[0:F2, off['h3']:off['h3'] + out_pad]
    bh3 = hV_ref[:, off['h3']:off['h3'] + out_pad]

    hid = _gelu(jnp.dot(ego, wh1, preferred_element_type=F32) + bh1)
    hid = _gelu(jnp.dot(hid, wh2, preferred_element_type=F32) + bh2)
    out_ref[...] = jnp.dot(hid, wh3, preferred_element_type=F32) + bh3   # (1, 128)


# -----------------------------------------------------------------------------
# Parameter init: deterministic random weights, packed into flat buffers
# -----------------------------------------------------------------------------
def init_params(key, cfg):
    D = cfg['d_model']; F = cfg['feature_dim']; FF = cfg['dim_feedforward']
    H = cfg['nhead']; L = cfg['num_layers'] // 2; Tf = cfg['T_future']
    NT = _NUM_TYPES
    Dh = D // H
    scale = 1.0 / math.sqrt(Dh)
    off = _pack_offsets(D, FF, Tf)

    keys = iter(jax.random.split(key, 1024))

    def w(shape, s=0.1):
        return jax.random.normal(next(keys), shape, F32) * s

    def pack_layer():
        in_w = w((3 * D, D)); in_b = w((3 * D,), 0.02)    # MHA in_proj (PyTorch layout)
        out_w = w((D, D)); out_b = w((D,), 0.02)
        l1_w = w((FF, D)); l1_b = w((FF,), 0.02)
        l2_w = w((D, FF)); l2_b = w((D,), 0.02)

        Wbuf = jnp.zeros((off['RW'], off['CW']), F32)
        Wbuf = Wbuf.at[0:D, 0:D].set(in_w[:D].T * scale)          # wq (scaled)
        Wbuf = Wbuf.at[0:D, D:2 * D].set(in_w[D:2 * D].T)         # wk
        Wbuf = Wbuf.at[0:D, 2 * D:3 * D].set(in_w[2 * D:].T)      # wv
        Wbuf = Wbuf.at[0:D, off['w_o']:off['w_o'] + D].set(out_w.T)
        Wbuf = Wbuf.at[0:D, off['w_1']:off['w_1'] + FF].set(l1_w.T)
        Wbuf = Wbuf.at[0:FF, off['w_2']:off['w_2'] + D].set(l2_w.T)

        Vbuf = jnp.zeros((1, off['CV']), F32)
        Vbuf = Vbuf.at[0, 0:D].set(in_b[:D] * scale)              # bq (scaled)
        Vbuf = Vbuf.at[0, D:2 * D].set(in_b[D:2 * D])             # bk
        Vbuf = Vbuf.at[0, 2 * D:3 * D].set(in_b[2 * D:])          # bv
        Vbuf = Vbuf.at[0, off['b_o']:off['b_o'] + D].set(out_b)
        Vbuf = Vbuf.at[0, off['g1']:off['g1'] + D].set(jnp.ones((D,), F32))
        Vbuf = Vbuf.at[0, off['b_f1']:off['b_f1'] + FF].set(l1_b)
        Vbuf = Vbuf.at[0, off['b_f2']:off['b_f2'] + D].set(l2_b)
        Vbuf = Vbuf.at[0, off['g2']:off['g2'] + D].set(jnp.ones((D,), F32))
        return Wbuf, Vbuf

    def pack_stack():
        Ws, Vs = zip(*[pack_layer() for _ in range(L)])
        return jnp.stack(Ws), jnp.stack(Vs)                # (L,RW,CW), (L,1,CV)

    tW, tV = pack_stack()
    sW, sV = pack_stack()

    F2, out_dim = off['F2'], off['out_dim']
    h1_w = w((FF, D)); h1_b = w((FF,), 0.02)
    h2_w = w((F2, FF)); h2_b = w((F2,), 0.02)
    h3_w = w((out_dim, F2)); h3_b = w((out_dim,), 0.02)
    HW = jnp.zeros((off['RH'], off['CH']), F32)
    HW = HW.at[0:D, off['h1']:off['h1'] + FF].set(h1_w.T)
    HW = HW.at[0:FF, off['h2']:off['h2'] + F2].set(h2_w.T)
    HW = HW.at[0:F2, off['h3']:off['h3'] + out_dim].set(h3_w.T)
    HV = jnp.zeros((1, off['CH']), F32)
    HV = HV.at[0, off['h1']:off['h1'] + FF].set(h1_b)
    HV = HV.at[0, off['h2']:off['h2'] + F2].set(h2_b)
    HV = HV.at[0, off['h3']:off['h3'] + out_dim].set(h3_b)

    fe_w = w((D, F)); fe_b = w((D,), 0.02)                 # feature_embed
    type_emb = w((NT, D))                                  # agent-type embedding table
    w_embed = jnp.concatenate([fe_w.T, type_emb], axis=0)  # (F+NT, D)

    return dict(w_embed=w_embed, b_embed=fe_b.reshape(1, D),
                tW=tW, tV=tV, sW=sW, sV=sV, hW=HW, hV=HV)


# -----------------------------------------------------------------------------
# Forward pass: one pallas_call, gridded over scenes B
# -----------------------------------------------------------------------------
def trajectory_transformer_forward(params, past, agent_mask, cfg):
    B, N, T, F = past.shape
    assert F >= 7, f'Expected at least 7 features, got {F}'
    D = cfg['d_model']; H = cfg['nhead']; FF = cfg['dim_feedforward']
    Tf = cfg['T_future']; L = cfg['num_layers'] // 2
    NT = _NUM_TYPES
    off = _pack_offsets(D, FF, Tf)
    Fin = F + NT
    out_dim, out_pad = off['out_dim'], off['out_pad']

    # Features + folded one-hot agent type (type = last feature column, as in
    # the PyTorch reference which also feeds that raw column through the embed).
    pastf = past.astype(F32)
    tid = pastf[..., -1].astype(jnp.int32)
    onehot = (tid[..., None] == jnp.arange(NT, dtype=jnp.int32)).astype(F32)
    feat = jnp.concatenate([pastf, onehot], axis=-1).reshape(B, N * T, Fin)

    # Positional-encoding table (T, D) + embed weights packed into ONE buffer.
    pos = jnp.arange(T, dtype=F32)[:, None]
    div = jnp.exp(jnp.arange(0, D, 2, dtype=F32) * (-math.log(10000.0) / D))
    pe = jnp.zeros((T, D), F32)
    pe = pe.at[:, 0::2].set(jnp.sin(pos * div))
    pe = pe.at[:, 1::2].set(jnp.cos(pos * div))
    r_bias = _round_up(Fin, 8)
    r_pe = r_bias + 8
    RE = r_pe + _round_up(T, 8)
    embpe = jnp.zeros((RE, D), F32)
    embpe = embpe.at[0:Fin, :].set(params['w_embed'])
    embpe = embpe.at[r_bias:r_bias + 1, :].set(params['b_embed'])
    embpe = embpe.at[r_pe:r_pe + T, :].set(pe)

    # Key-padding mask with all-invalid fallback (same semantics as PyTorch),
    # as an additive mask.
    any_valid = jnp.any(agent_mask, axis=1, keepdims=True)
    fallback = agent_mask.at[:, 0].set(True)
    mask_eff = jnp.where(any_valid, agent_mask, fallback)
    add_mask = jnp.where(mask_eff, 0.0, -1e30).astype(F32).reshape(B, 1, N)

    kernel = functools.partial(_fused_kernel, N, T, D, H, FF, L, Fin, off,
                               r_bias, r_pe)

    in_specs = [
        pl.BlockSpec((None, N * T, Fin), lambda b: (b, 0, 0)),           # per-scene feats
        pl.BlockSpec((None, 1, N), lambda b: (b, 0, 0)),                 # per-scene mask
        pl.BlockSpec((RE, D), lambda b: (0, 0)),                         # embed + PE
        pl.BlockSpec((L, off['RW'], off['CW']), lambda b: (0, 0, 0)),    # temporal W
        pl.BlockSpec((L, 1, off['CV']), lambda b: (0, 0, 0)),            # temporal b/LN
        pl.BlockSpec((L, off['RW'], off['CW']), lambda b: (0, 0, 0)),    # social W
        pl.BlockSpec((L, 1, off['CV']), lambda b: (0, 0, 0)),            # social b/LN
        pl.BlockSpec((off['RH'], off['CH']), lambda b: (0, 0)),          # head W
        pl.BlockSpec((1, off['CH']), lambda b: (0, 0)),                  # head b
    ]
    out_spec = pl.BlockSpec((None, 1, out_pad), lambda b: (b, 0, 0))

    # Advisory cost estimate for the XLA scheduler (per whole call).
    M = N * T
    Dh = D // H

    def enc_flops(rows, Bn, S):
        return (2 * rows * D * 3 * D + 2 * rows * D * D
                + 4 * rows * D * FF + 4 * Bn * H * S * S * Dh)

    flops = int(B * (2 * M * Fin * D + L * enc_flops(M, N, T)
                     + L * enc_flops(N, 1, N)
                     + 2 * (D * FF + FF * off['F2'] + off['F2'] * out_pad)))
    transc = int(B * (L * H * (N * T * T + N * N) + FF + off['F2']))
    bytes_acc = int(4 * (feat.size + add_mask.size + embpe.size
                         + params['tW'].size + params['tV'].size
                         + params['sW'].size + params['sV'].size
                         + params['hW'].size + params['hV'].size
                         + B * out_pad))

    out = pl.pallas_call(
        kernel,
        grid=(B,),
        out_shape=jax.ShapeDtypeStruct((B, 1, out_pad), F32),
        in_specs=in_specs,
        out_specs=out_spec,
        compiler_params=pltpu.CompilerParams(
            dimension_semantics=("parallel",),        # v7x: shard scenes across TCs
            vmem_limit_bytes=32 * 1024 * 1024),
        cost_estimate=pl.CostEstimate(flops=flops, transcendentals=transc,
                                      bytes_accessed=bytes_acc),
    )(feat, add_mask, embpe,
      params['tW'], params['tV'], params['sW'], params['sV'],
      params['hW'], params['hV'])

    return out.reshape(B, out_pad)[:, :out_dim].reshape(B, Tf, 2)


if __name__ == "__main__":
    cfg = dict(feature_dim=8, d_model=32, nhead=4, num_layers=4,
               dim_feedforward=64, dropout=0.0, T_past=8, T_future=6)
    B, N = 2, 3

    key = jax.random.PRNGKey(0)
    k_past, k_type, k_params = jax.random.split(key, 3)
    past = jax.random.normal(k_past, (B, N, cfg['T_past'], cfg['feature_dim']),
                             F32)
    types = jax.random.randint(k_type, (B, N, cfg['T_past']), 0, _NUM_TYPES)
    past = past.at[..., -1].set(types.astype(F32))   # last feature = agent type
    agent_mask = jnp.array([[True, True, False],
                            [False, False, False]])  # 2nd scene exercises fallback

    params = init_params(k_params, cfg)
    preds = trajectory_transformer_forward(params, past, agent_mask, cfg)
    preds = jax.block_until_ready(preds)
    assert preds.shape == (B, cfg['T_future'], 2)
    assert bool(jnp.all(jnp.isfinite(preds)))
    print("KERNEL_OK")
</pallas_src>

<mosaic_0001>
module attributes {stable_mosaic.version = 11 : i64} {
  func.func @_fused_kernel(%arg0: i32, %arg1: memref<1x24x18xf32, #tpu.memory_space<vmem>>, %arg2: memref<1x1x3xf32, #tpu.memory_space<vmem>>, %arg3: memref<40x32xf32, #tpu.memory_space<vmem>>, %arg4: memref<2x64x256xf32, #tpu.memory_space<vmem>>, %arg5: memref<2x1x384xf32, #tpu.memory_space<vmem>>, %arg6: memref<2x64x256xf32, #tpu.memory_space<vmem>>, %arg7: memref<2x1x384xf32, #tpu.memory_space<vmem>>, %arg8: memref<64x224xf32, #tpu.memory_space<vmem>>, %arg9: memref<1x224xf32, #tpu.memory_space<vmem>>, %arg10: memref<1x1x128xf32, #tpu.memory_space<vmem>>) attributes {dimension_semantics = [#tpu.dimension_semantics<parallel>], iteration_bounds = array<i64: 2>, scalar_prefetch = 0 : i64, scratch_operands = 0 : i64, tpu.core_type = #tpu.core_type<tc>, window_params = [{transform_indices = @transform_0, window_bounds = array<i64: 1, 24, 18>}, {transform_indices = @transform_1, window_bounds = array<i64: 1, 1, 3>}, {pipeline_mode = #tpu.pipeline_mode<synchronous>, transform_indices = @transform_2, window_bounds = array<i64: 40, 32>}, {pipeline_mode = #tpu.pipeline_mode<synchronous>, transform_indices = @transform_3, window_bounds = array<i64: 2, 64, 256>}, {pipeline_mode = #tpu.pipeline_mode<synchronous>, transform_indices = @transform_4, window_bounds = array<i64: 2, 1, 384>}, {pipeline_mode = #tpu.pipeline_mode<synchronous>, transform_indices = @transform_5, window_bounds = array<i64: 2, 64, 256>}, {pipeline_mode = #tpu.pipeline_mode<synchronous>, transform_indices = @transform_6, window_bounds = array<i64: 2, 1, 384>}, {pipeline_mode = #tpu.pipeline_mode<synchronous>, transform_indices = @transform_7, window_bounds = array<i64: 64, 224>}, {pipeline_mode = #tpu.pipeline_mode<synchronous>, transform_indices = @transform_8, window_bounds = array<i64: 1, 224>}, {transform_indices = @transform_9, window_bounds = array<i64: 1, 1, 128>}]} {
    %c0 = arith.constant 0 : index
    %c0_0 = arith.constant 0 : index
    %c0_1 = arith.constant 0 : index
    %0 = vector.load %arg1[%c0, %c0_0, %c0_1] : memref<1x24x18xf32, #tpu.memory_space<vmem>>, vector<1x24x18xf32>
    %1 = vector.shape_cast %0 : vector<1x24x18xf32> to vector<24x18xf32>
    %c0_2 = arith.constant 0 : index
    %c0_3 = arith.constant 0 : index
    %2 = vector.load %arg3[%c0_2, %c0_3] : memref<40x32xf32, #tpu.memory_space<vmem>>, vector<18x32xf32>
    %c24 = arith.constant 24 : index
    %c0_4 = arith.constant 0 : index
    %3 = vector.load %arg3[%c24, %c0_4] : memref<40x32xf32, #tpu.memory_space<vmem>>, vector<1x32xf32>
    %c32 = arith.constant 32 : index
    %c0_5 = arith.constant 0 : index
    %4 = vector.load %arg3[%c32, %c0_5] : memref<40x32xf32, #tpu.memory_space<vmem>>, vector<8x32xf32>
    %cst = arith.constant dense<0.000000e+00> : vector<24x32xf32>
    %5 = tpu.matmul %1, %2, %cst {dimension_numbers = #tpu.dot_dimension_numbers<[1], [0], [0], [1], [0, 0, 1, 1], [], []>} : vector<24x18xf32>, vector<18x32xf32>, vector<24x32xf32> -> vector<24x32xf32>
    %6 = vector.broadcast %3 : vector<1x32xf32> to vector<24x32xf32>
    %7 = arith.addf %5, %6 : vector<24x32xf32>
    %8 = vector.shape_cast %7 : vector<24x32xf32> to vector<3x8x32xf32>
    %9 = vector.shape_cast %4 : vector<8x32xf32> to vector<1x8x32xf32>
    %10 = vector.broadcast %9 : vector<1x8x32xf32> to vector<3x8x32xf32>
    %11 = arith.addf %8, %10 : vector<3x8x32xf32>
    %12 = vector.shape_cast %11 : vector<3x8x32xf32> to vector<24x32xf32>
    %c0_6 = arith.constant 0 : index
    %c0_7 = arith.constant 0 : index
    %c0_8 = arith.constant 0 : index
    %13 = vector.load %arg4[%c0_6, %c0_7, %c0_8] : memref<2x64x256xf32, #tpu.memory_space<vmem>>, vector<1x32x128xf32>
    %14 = vector.shape_cast %13 : vector<1x32x128xf32> to vector<32x128xf32>
    %c0_9 = arith.constant 0 : index
    %c0_10 = arith.constant 0 : index
    %c0_11 = arith.constant 0 : index
    %15 = vector.load %arg5[%c0_9, %c0_10, %c0_11] : memref<2x1x384xf32, #tpu.memory_space<vmem>>, vector<1x1x128xf32>
    %16 = vector.shape_cast %15 : vector<1x1x128xf32> to vector<1x128xf32>
    %cst_12 = arith.constant dense<0.000000e+00> : vector<24x128xf32>
    %17 = tpu.matmul %12, %14, %cst_12 {dimension_numbers = #tpu.dot_dimension_numbers<[1], [0], [0], [1], [0, 0, 1, 1], [], []>} : vector<24x32xf32>, vector<32x128xf32>, vector<24x128xf32> -> vector<24x128xf32>
    %18 = vector.broadcast %16 : vector<1x128xf32> to vector<24x128xf32>
    %19 = arith.addf %17, %18 : vector<24x128xf32>
    %20 = vector.extract_strided_slice %19 {offsets = [0, 0], sizes = [24, 8], strides = [1, 1]} : vector<24x128xf32> to vector<24x8xf32>
    %21 = vector.shape_cast %20 : vector<24x8xf32> to vector<3x8x8xf32>
    %22 = vector.extract_strided_slice %19 {offsets = [0, 32], sizes = [24, 8], strides = [1, 1]} : vector<24x128xf32> to vector<24x8xf32>
    %23 = vector.shape_cast %22 : vector<24x8xf32> to vector<3x8x8xf32>
    %24 = vector.extract_strided_slice %19 {offsets = [0, 64], sizes = [24, 8], strides = [1, 1]} : vector<24x128xf32> to vector<24x8xf32>
    %25 = vector.shape_cast %24 : vector<24x8xf32> to vector<3x8x8xf32>
    "tpu.trace_start"() <{level = 10 : i32, message = "bqd,bkd->bqk"}> : () -> ()
    %cst_13 = arith.constant dense<0.000000e+00> : vector<3x8x8xf32>
    %26 = tpu.matmul %21, %23, %cst_13 {dimension_numbers = #tpu.dot_dimension_numbers<[2], [2], [1], [1], [0, 0, 0, 1, 1, 1], [0], [0]>} : vector<3x8x8xf32>, vector<3x8x8xf32>, vector<3x8x8xf32> -> vector<3x8x8xf32>
    "tpu.trace_stop"() : () -> ()
    %cst_14 = arith.constant dense<0xFF800000> : vector<3x8xf32>
    %27 = vector.multi_reduction <maximumf>, %26, %cst_14 [2] : vector<3x8x8xf32> to vector<3x8xf32>
    %28 = vector.shape_cast %27 : vector<3x8xf32> to vector<3x8x1xf32>
    %29 = vector.broadcast %28 : vector<3x8x1xf32> to vector<3x8x8xf32>
    %30 = arith.subf %26, %29 : vector<3x8x8xf32>
    %31 = math.exp %30 : vector<3x8x8xf32>
    %cst_15 = arith.constant dense<0.000000e+00> : vector<3x8xf32>
    %32 = vector.multi_reduction <add>, %31, %cst_15 [2] : vector<3x8x8xf32> to vector<3x8xf32>
    %33 = vector.shape_cast %32 : vector<3x8xf32> to vector<3x8x1xf32>
    %34 = tpu.reciprocal %33 {approx = true} : vector<3x8x1xf32> -> vector<3x8x1xf32>
    %35 = vector.broadcast %34 : vector<3x8x1xf32> to vector<3x8x8xf32>
    %36 = arith.mulf %31, %35 : vector<3x8x8xf32>
    "tpu.trace_start"() <{level = 10 : i32, message = "bqk,bkd->bqd"}> : () -> ()
    %cst_16 = arith.constant dense<0.000000e+00> : vector<3x8x8xf32>
    %37 = tpu.matmul %36, %25, %cst_16 {dimension_numbers = #tpu.dot_dimension_numbers<[2], [1], [1], [2], [0, 0, 0, 1, 1, 2], [0], [0]>} : vector<3x8x8xf32>, vector<3x8x8xf32>, vector<3x8x8xf32> -> vector<3x8x8xf32>
    "tpu.trace_stop"() : () -> ()
    %38 = vector.extract_strided_slice %19 {offsets = [0, 8], sizes = [24, 8], strides = [1, 1]} : vector<24x128xf32> to vector<24x8xf32>
    %39 = vector.shape_cast %38 : vector<24x8xf32> to vector<3x8x8xf32>
    %40 = vector.extract_strided_slice %19 {offsets = [0, 40], sizes = [24, 8], strides = [1, 1]} : vector<24x128xf32> to vector<24x8xf32>
    %41 = vector.shape_cast %40 : vector<24x8xf32> to vector<3x8x8xf32>
    %42 = vector.extract_strided_slice %19 {offsets = [0, 72], sizes = [24, 8], strides = [1, 1]} : vector<24x128xf32> to vector<24x8xf32>
    %43 = vector.shape_cast %42 : vector<24x8xf32> to vector<3x8x8xf32>
    "tpu.trace_start"() <{level = 10 : i32, message = "bqd,bkd->bqk"}> : () -> ()
    %cst_17 = arith.constant dense<0.000000e+00> : vector<3x8x8xf32>
    %44 = tpu.matmul %39, %41, %cst_17 {dimension_numbers = #tpu.dot_dimension_numbers<[2], [2], [1], [1], [0, 0, 0, 1, 1, 1], [0], [0]>} : vector<3x8x8xf32>, vector<3x8x8xf32>, vector<3x8x8xf32> -> vector<3x8x8xf32>
    "tpu.trace_stop"() : () -> ()
    %cst_18 = arith.constant dense<0xFF800000> : vector<3x8xf32>
    %45 = vector.multi_reduction <maximumf>, %44, %cst_18 [2] : vector<3x8x8xf32> to vector<3x8xf32>
    %46 = vector.shape_cast %45 : vector<3x8xf32> to vector<3x8x1xf32>
    %47 = vector.broadcast %46 : vector<3x8x1xf32> to vector<3x8x8xf32>
    %48 = arith.subf %44, %47 : vector<3x8x8xf32>
    %49 = math.exp %48 : vector<3x8x8xf32>
    %cst_19 = arith.constant dense<0.000000e+00> : vector<3x8xf32>
    %50 = vector.multi_reduction <add>, %49, %cst_19 [2] : vector<3x8x8xf32> to vector<3x8xf32>
    %51 = vector.shape_cast %50 : vector<3x8xf32> to vector<3x8x1xf32>
    %52 = tpu.reciprocal %51 {approx = true} : vector<3x8x1xf32> -> vector<3x8x1xf32>
    %53 = vector.broadcast %52 : vector<3x8x1xf32> to vector<3x8x8xf32>
    %54 = arith.mulf %49, %53 : vector<3x8x8xf32>
    "tpu.trace_start"() <{level = 10 : i32, message = "bqk,bkd->bqd"}> : () -> ()
    %cst_20 = arith.constant dense<0.000000e+00> : vector<3x8x8xf32>
    %55 = tpu.matmul %54, %43, %cst_20 {dimension_numbers = #tpu.dot_dimension_numbers<[2], [1], [1], [2], [0, 0, 0, 1, 1, 2], [0], [0]>} : vector<3x8x8xf32>, vector<3x8x8xf32>, vector<3x8x8xf32> -> vector<3x8x8xf32>
    "tpu.trace_stop"() : () -> ()
    %56 = vector.extract_strided_slice %19 {offsets = [0, 16], sizes = [24, 8], strides = [1, 1]} : vector<24x128xf32> to vector<24x8xf32>
    %57 = vector.shape_cast %56 : vector<24x8xf32> to vector<3x8x8xf32>
    %58 = vector.extract_strided_slice %19 {offsets = [0, 48], sizes = [24, 8], strides = [1, 1]} : vector<24x128xf32> to vector<24x8xf32>
    %59 = vector.shape_cast %58 : vector<24x8xf32> to vector<3x8x8xf32>
    %60 = vector.extract_strided_slice %19 {offsets = [0, 80], sizes = [24, 8], strides = [1, 1]} : vector<24x128xf32> to vector<24x8xf32>
    %61 = vector.shape_cast %60 : vector<24x8xf32> to vector<3x8x8xf32>
    "tpu.trace_start"() <{level = 10 : i32, message = "bqd,bkd->bqk"}> : () -> ()
    %cst_21 = arith.constant dense<0.000000e+00> : vector<3x8x8xf32>
    %62 = tpu.matmul %57, %59, %cst_21 {dimension_numbers = #tpu.dot_dimension_numbers<[2], [2], [1], [1], [0, 0, 0, 1, 1, 1], [0], [0]>} : vector<3x8x8xf32>, vector<3x8x8xf32>, vector<3x8x8xf32> -> vector<3x8x8xf32>
    "tpu.trace_stop"() : () -> ()
    %cst_22 = arith.constant dense<0xFF800000> : vector<3x8xf32>
    %63 = vector.multi_reduction <maximumf>, %62, %cst_22 [2] : vector<3x8x8xf32> to vector<3x8xf32>
    %64 = vector.shape_cast %63 : vector<3x8xf32> to vector<3x8x1xf32>
    %65 = vector.broadcast %64 : vector<3x8x1xf32> to vector<3x8x8xf32>
    %66 = arith.subf %62, %65 : vector<3x8x8xf32>
    %67 = math.exp %66 : vector<3x8x8xf32>
    %cst_23 = arith.constant dense<0.000000e+00> : vector<3x8xf32>
    %68 = vector.multi_reduction <add>, %67, %cst_23 [2] : vector<3x8x8xf32> to vector<3x8xf32>
    %69 = vector.shape_cast %68 : vector<3x8xf32> to vector<3x8x1xf32>
    %70 = tpu.reciprocal %69 {approx = true} : vector<3x8x1xf32> -> vector<3x8x1xf32>
    %71 = vector.broadcast %70 : vector<3x8x1xf32> to vector<3x8x8xf32>
    %72 = arith.mulf %67, %71 : vector<3x8x8xf32>
    "tpu.trace_start"() <{level = 10 : i32, message = "bqk,bkd->bqd"}> : () -> ()
    %cst_24 = arith.constant dense<0.000000e+00> : vector<3x8x8xf32>
    %73 = tpu.matmul %72, %61, %cst_24 {dimension_numbers = #tpu.dot_dimension_numbers<[2], [1], [1], [2], [0, 0, 0, 1, 1, 2], [0], [0]>} : vector<3x8x8xf32>, vector<3x8x8xf32>, vector<3x8x8xf32> -> vector<3x8x8xf32>
    "tpu.trace_stop"() : () -> ()
    %74 = vector.extract_strided_slice %19 {offsets = [0, 24], sizes = [24, 8], strides = [1, 1]} : vector<24x128xf32> to vector<24x8xf32>
    %75 = vector.shape_cast %74 : vector<24x8xf32> to vector<3x8x8xf32>
    %76 = vector.extract_strided_slice %19 {offsets = [0, 56], sizes = [24, 8], strides = [1, 1]} : vector<24x128xf32> to vector<24x8xf32>
    %77 = vector.shape_cast %76 : vector<24x8xf32> to vector<3x8x8xf32>
    %78 = vector.extract_strided_slice %19 {offsets = [0, 88], sizes = [24, 8], strides = [1, 1]} : vector<24x128xf32> to vector<24x8xf32>
    %79 = vector.shape_cast %78 : vector<24x8xf32> to vector<3x8x8xf32>
    "tpu.trace_start"() <{level = 10 : i32, message = "bqd,bkd->bqk"}> : () -> ()
    %cst_25 = arith.constant dense<0.000000e+00> : vector<3x8x8xf32>
    %80 = tpu.matmul %75, %77, %cst_25 {dimension_numbers = #tpu.dot_dimension_numbers<[2], [2], [1], [1], [0, 0, 0, 1, 1, 1], [0], [0]>} : vector<3x8x8xf32>, vector<3x8x8xf32>, vector<3x8x8xf32> -> vector<3x8x8xf32>
    "tpu.trace_stop"() : () -> ()
    %cst_26 = arith.constant dense<0xFF800000> : vector<3x8xf32>
    %81 = vector.multi_reduction <maximumf>, %80, %cst_26 [2] : vector<3x8x8xf32> to vector<3x8xf32>
    %82 = vector.shape_cast %81 : vector<3x8xf32> to vector<3x8x1xf32>
    %83 = vector.broadcast %82 : vector<3x8x1xf32> to vector<3x8x8xf32>
    %84 = arith.subf %80, %83 : vector<3x8x8xf32>
    %85 = math.exp %84 : vector<3x8x8xf32>
    %cst_27 = arith.constant dense<0.000000e+00> : vector<3x8xf32>
    %86 = vector.multi_reduction <add>, %85, %cst_27 [2] : vector<3x8x8xf32> to vector<3x8xf32>
    %87 = vector.shape_cast %86 : vector<3x8xf32> to vector<3x8x1xf32>
    %88 = tpu.reciprocal %87 {approx = true} : vector<3x8x1xf32> -> vector<3x8x1xf32>
    %89 = vector.broadcast %88 : vector<3x8x1xf32> to vector<3x8x8xf32>
    %90 = arith.mulf %85, %89 : vector<3x8x8xf32>
    "tpu.trace_start"() <{level = 10 : i32, message = "bqk,bkd->bqd"}> : () -> ()
    %cst_28 = arith.constant dense<0.000000e+00> : vector<3x8x8xf32>
    %91 = tpu.matmul %90, %79, %cst_28 {dimension_numbers = #tpu.dot_dimension_numbers<[2], [1], [1], [2], [0, 0, 0, 1, 1, 2], [0], [0]>} : vector<3x8x8xf32>, vector<3x8x8xf32>, vector<3x8x8xf32> -> vector<3x8x8xf32>
    "tpu.trace_stop"() : () -> ()
    %92 = tpu.concatenate %37, %55, %73, %91 in 2 : vector<3x8x8xf32>, vector<3x8x8xf32>, vector<3x8x8xf32>, vector<3x8x8xf32> -> vector<3x8x32xf32>
    %93 = vector.shape_cast %92 : vector<3x8x32xf32> to vector<24x32xf32>
    %c0_29 = arith.constant 0 : index
    %c0_30 = arith.constant 0 : index
    %c128 = arith.constant 128 : index
    %94 = vector.load %arg4[%c0_29, %c0_30, %c128] : memref<2x64x256xf32, #tpu.memory_space<vmem>>, vector<1x32x32xf32>
    %95 = vector.shape_cast %94 : vector<1x32x32xf32> to vector<32x32xf32>
    %c0_31 = arith.constant 0 : index
    %c0_32 = arith.constant 0 : index
    %c128_33 = arith.constant 128 : index
    %96 = vector.load %arg5[%c0_31, %c0_32, %c128_33] : memref<2x1x384xf32, #tpu.memory_space<vmem>>, vector<1x1x32xf32>
    %97 = vector.shape_cast %96 : vector<1x1x32xf32> to vector<1x32xf32>
    %cst_34 = arith.constant dense<0.000000e+00> : vector<24x32xf32>
    %98 = tpu.matmul %93, %95, %cst_34 {dimension_numbers = #tpu.dot_dimension_numbers<[1], [0], [0], [1], [0, 0, 1, 1], [], []>} : vector<24x32xf32>, vector<32x32xf32>, vector<24x32xf32> -> vector<24x32xf32>
    %99 = vector.broadcast %97 : vector<1x32xf32> to vector<24x32xf32>
    %100 = arith.addf %98, %99 : vector<24x32xf32>
    %c0_35 = arith.constant 0 : index
    %c0_36 = arith.constant 0 : index
    %c160 = arith.constant 160 : index
    %101 = vector.load %arg5[%c0_35, %c0_36, %c160] : memref<2x1x384xf32, #tpu.memory_space<vmem>>, vector<1x1x32xf32>
    %102 = vector.shape_cast %101 : vector<1x1x32xf32> to vector<1x32xf32>
    %c0_37 = arith.constant 0 : index
    %c0_38 = arith.constant 0 : index
    %c192 = arith.constant 192 : index
    %103 = vector.load %arg5[%c0_37, %c0_38, %c192] : memref<2x1x384xf32, #tpu.memory_space<vmem>>, vector<1x1x32xf32>
    %104 = vector.shape_cast %103 : vector<1x1x32xf32> to vector<1x32xf32>
    %105 = arith.addf %12, %100 : vector<24x32xf32>
    %cst_39 = arith.constant dense<0.000000e+00> : vector<24xf32>
    %106 = vector.multi_reduction <add>, %105, %cst_39 [1] : vector<24x32xf32> to vector<24xf32>
    %107 = vector.shape_cast %106 : vector<24xf32> to vector<24x1xf32>
    %cst_40 = arith.constant 3.200000e+01 : f32
    %108 = vector.broadcast %cst_40 : f32 to vector<24x1xf32>
    %109 = arith.divf %107, %108 : vector<24x1xf32>
    %110 = vector.broadcast %109 : vector<24x1xf32> to vector<24x32xf32>
    %111 = arith.subf %105, %110 : vector<24x32xf32>
    %112 = arith.mulf %111, %111 : vector<24x32xf32>
    %cst_41 = arith.constant dense<0.000000e+00> : vector<24xf32>
    %113 = vector.multi_reduction <add>, %112, %cst_41 [1] : vector<24x32xf32> to vector<24xf32>
    %114 = vector.shape_cast %113 : vector<24xf32> to vector<24x1xf32>
    %cst_42 = arith.constant 3.200000e+01 : f32
    %115 = vector.broadcast %cst_42 : f32 to vector<24x1xf32>
    %116 = arith.divf %114, %115 : vector<24x1xf32>
    %117 = vector.broadcast %109 : vector<24x1xf32> to vector<24x32xf32>
    %118 = arith.subf %105, %117 : vector<24x32xf32>
    %cst_43 = arith.constant 9.99999974E-6 : f32
    %119 = vector.broadcast %cst_43 : f32 to vector<24x1xf32>
    %120 = arith.addf %116, %119 : vector<24x1xf32>
    %121 = math.rsqrt %120 : vector<24x1xf32>
    %122 = vector.broadcast %121 : vector<24x1xf32> to vector<24x32xf32>
    %123 = arith.mulf %118, %122 : vector<24x32xf32>
    %124 = vector.broadcast %102 : vector<1x32xf32> to vector<24x32xf32>
    %125 = arith.mulf %123, %124 : vector<24x32xf32>
    %126 = vector.broadcast %104 : vector<1x32xf32> to vector<24x32xf32>
    %127 = arith.addf %125, %126 : vector<24x32xf32>
    %c0_44 = arith.constant 0 : index
    %c0_45 = arith.constant 0 : index
    %c160_46 = arith.constant 160 : index
    %128 = vector.load %arg4[%c0_44, %c0_45, %c160_46] : memref<2x64x256xf32, #tpu.memory_space<vmem>>, vector<1x32x64xf32>
    %129 = vector.shape_cast %128 : vector<1x32x64xf32> to vector<32x64xf32>
    %c0_47 = arith.constant 0 : index
    %c0_48 = arith.constant 0 : index
    %c224 = arith.constant 224 : index
    %130 = vector.load %arg5[%c0_47, %c0_48, %c224] : memref<2x1x384xf32, #tpu.memory_space<vmem>>, vector<1x1x64xf32>
    %131 = vector.shape_cast %130 : vector<1x1x64xf32> to vector<1x64xf32>
    %c0_49 = arith.constant 0 : index
    %c0_50 = arith.constant 0 : index
    %c224_51 = arith.constant 224 : index
    %132 = vector.load %arg4[%c0_49, %c0_50, %c224_51] : memref<2x64x256xf32, #tpu.memory_space<vmem>>, vector<1x64x32xf32>
    %133 = vector.shape_cast %132 : vector<1x64x32xf32> to vector<64x32xf32>
    %c0_52 = arith.constant 0 : index
    %c0_53 = arith.constant 0 : index
    %c288 = arith.constant 288 : index
    %134 = vector.load %arg5[%c0_52, %c0_53, %c288] : memref<2x1x384xf32, #tpu.memory_space<vmem>>, vector<1x1x32xf32>
    %135 = vector.shape_cast %134 : vector<1x1x32xf32> to vector<1x32xf32>
    %cst_54 = arith.constant dense<0.000000e+00> : vector<24x64xf32>
    %136 = tpu.matmul %127, %129, %cst_54 {dimension_numbers = #tpu.dot_dimension_numbers<[1], [0], [0], [1], [0, 0, 1, 1], [], []>} : vector<24x32xf32>, vector<32x64xf32>, vector<24x64xf32> -> vector<24x64xf32>
    %137 = vector.broadcast %131 : vector<1x64xf32> to vector<24x64xf32>
    %138 = arith.addf %136, %137 : vector<24x64xf32>
    %cst_55 = arith.constant 0.000000e+00 : f32
    %139 = vector.broadcast %cst_55 : f32 to vector<24x64xf32>
    %140 = arith.maximumf %138, %139 : vector<24x64xf32>
    %cst_56 = arith.constant dense<0.000000e+00> : vector<24x32xf32>
    %141 = tpu.matmul %140, %133, %cst_56 {dimension_numbers = #tpu.dot_dimension_numbers<[1], [0], [0], [1], [0, 0, 1, 1], [], []>} : vector<24x64xf32>, vector<64x32xf32>, vector<24x32xf32> -> vector<24x32xf32>
    %142 = vector.broadcast %135 : vector<1x32xf32> to vector<24x32xf32>
    %143 = arith.addf %141, %142 : vector<24x32xf32>
    %c0_57 = arith.constant 0 : index
    %c0_58 = arith.constant 0 : index
    %c320 = arith.constant 320 : index
    %144 = vector.load %arg5[%c0_57, %c0_58, %c320] : memref<2x1x384xf32, #tpu.memory_space<vmem>>, vector<1x1x32xf32>
    %145 = vector.shape_cast %144 : vector<1x1x32xf32> to vector<1x32xf32>
    %c0_59 = arith.constant 0 : index
    %c0_60 = arith.constant 0 : index
    %c352 = arith.constant 352 : index
    %146 = vector.load %arg5[%c0_59, %c0_60, %c352] : memref<2x1x384xf32, #tpu.memory_space<vmem>>, vector<1x1x32xf32>
    %147 = vector.shape_cast %146 : vector<1x1x32xf32> to vector<1x32xf32>
    %148 = arith.addf %127, %143 : vector<24x32xf32>
    %cst_61 = arith.constant dense<0.000000e+00> : vector<24xf32>
    %149 = vector.multi_reduction <add>, %148, %cst_61 [1] : vector<24x32xf32> to vector<24xf32>
    %150 = vector.shape_cast %149 : vector<24xf32> to vector<24x1xf32>
    %cst_62 = arith.constant 3.200000e+01 : f32
    %151 = vector.broadcast %cst_62 : f32 to vector<24x1xf32>
    %152 = arith.divf %150, %151 : vector<24x1xf32>
    %153 = vector.broadcast %152 : vector<24x1xf32> to vector<24x32xf32>
    %154 = arith.subf %148, %153 : vector<24x32xf32>
    %155 = arith.mulf %154, %154 : vector<24x32xf32>
    %cst_63 = arith.constant dense<0.000000e+00> : vector<24xf32>
    %156 = vector.multi_reduction <add>, %155, %cst_63 [1] : vector<24x32xf32> to vector<24xf32>
    %157 = vector.shape_cast %156 : vector<24xf32> to vector<24x1xf32>
    %cst_64 = arith.constant 3.200000e+01 : f32
    %158 = vector.broadcast %cst_64 : f32 to vector<24x1xf32>
    %159 = arith.divf %157, %158 : vector<24x1xf32>
    %160 = vector.broadcast %152 : vector<24x1xf32> to vector<24x32xf32>
    %161 = arith.subf %148, %160 : vector<24x32xf32>
    %cst_65 = arith.constant 9.99999974E-6 : f32
    %162 = vector.broadcast %cst_65 : f32 to vector<24x1xf32>
    %163 = arith.addf %159, %162 : vector<24x1xf32>
    %164 = math.rsqrt %163 : vector<24x1xf32>
    %165 = vector.broadcast %164 : vector<24x1xf32> to vector<24x32xf32>
    %166 = arith.mulf %161, %165 : vector<24x32xf32>
    %167 = vector.broadcast %145 : vector<1x32xf32> to vector<24x32xf32>
    %168 = arith.mulf %166, %167 : vector<24x32xf32>
    %169 = vector.broadcast %147 : vector<1x32xf32> to vector<24x32xf32>
    %170 = arith.addf %168, %169 : vector<24x32xf32>
    %c1 = arith.constant 1 : index
    %c0_66 = arith.constant 0 : index
    %c0_67 = arith.constant 0 : index
    %171 = vector.load %arg4[%c1, %c0_66, %c0_67] : memref<2x64x256xf32, #tpu.memory_space<vmem>>, vector<1x32x128xf32>
    %172 = vector.shape_cast %171 : vector<1x32x128xf32> to vector<32x128xf32>
    %c1_68 = arith.constant 1 : index
    %c0_69 = arith.constant 0 : index
    %c0_70 = arith.constant 0 : index
    %173 = vector.load %arg5[%c1_68, %c0_69, %c0_70] : memref<2x1x384xf32, #tpu.memory_space<vmem>>, vector<1x1x128xf32>
    %174 = vector.shape_cast %173 : vector<1x1x128xf32> to vector<1x128xf32>
    %cst_71 = arith.constant dense<0.000000e+00> : vector<24x128xf32>
    %175 = tpu.matmul %170, %172, %cst_71 {dimension_numbers = #tpu.dot_dimension_numbers<[1], [0], [0], [1], [0, 0, 1, 1], [], []>} : vector<24x32xf32>, vector<32x128xf32>, vector<24x128xf32> -> vector<24x128xf32>
    %176 = vector.broadcast %174 : vector<1x128xf32> to vector<24x128xf32>
    %177 = arith.addf %175, %176 : vector<24x128xf32>
    %178 = vector.extract_strided_slice %177 {offsets = [0, 0], sizes = [24, 8], strides = [1, 1]} : vector<24x128xf32> to vector<24x8xf32>
    %179 = vector.shape_cast %178 : vector<24x8xf32> to vector<3x8x8xf32>
    %180 = vector.extract_strided_slice %177 {offsets = [0, 32], sizes = [24, 8], strides = [1, 1]} : vector<24x128xf32> to vector<24x8xf32>
    %181 = vector.shape_cast %180 : vector<24x8xf32> to vector<3x8x8xf32>
    %182 = vector.extract_strided_slice %177 {offsets = [0, 64], sizes = [24, 8], strides = [1, 1]} : vector<24x128xf32> to vector<24x8xf32>
    %183 = vector.shape_cast %182 : vector<24x8xf32> to vector<3x8x8xf32>
    "tpu.trace_start"() <{level = 10 : i32, message = "bqd,bkd->bqk"}> : () -> ()
    %cst_72 = arith.constant dense<0.000000e+00> : vector<3x8x8xf32>
    %184 = tpu.matmul %179, %181, %cst_72 {dimension_numbers = #tpu.dot_dimension_numbers<[2], [2], [1], [1], [0, 0, 0, 1, 1, 1], [0], [0]>} : vector<3x8x8xf32>, vector<3x8x8xf32>, vector<3x8x8xf32> -> vector<3x8x8xf32>
    "tpu.trace_stop"() : () -> ()
    %cst_73 = arith.constant dense<0xFF800000> : vector<3x8xf32>
    %185 = vector.multi_reduction <maximumf>, %184, %cst_73 [2] : vector<3x8x8xf32> to vector<3x8xf32>
    %186 = vector.shape_cast %185 : vector<3x8xf32> to vector<3x8x1xf32>
    %187 = vector.broadcast %186 : vector<3x8x1xf32> to vector<3x8x8xf32>
    %188 = arith.subf %184, %187 : vector<3x8x8xf32>
    %189 = math.exp %188 : vector<3x8x8xf32>
    %cst_74 = arith.constant dense<0.000000e+00> : vector<3x8xf32>
    %190 = vector.multi_reduction <add>, %189, %cst_74 [2] : vector<3x8x8xf32> to vector<3x8xf32>
    %191 = vector.shape_cast %190 : vector<3x8xf32> to vector<3x8x1xf32>
    %192 = tpu.reciprocal %191 {approx = true} : vector<3x8x1xf32> -> vector<3x8x1xf32>
    %193 = vector.broadcast %192 : vector<3x8x1xf32> to vector<3x8x8xf32>
    %194 = arith.mulf %189, %193 : vector<3x8x8xf32>
    "tpu.trace_start"() <{level = 10 : i32, message = "bqk,bkd->bqd"}> : () -> ()
    %cst_75 = arith.constant dense<0.000000e+00> : vector<3x8x8xf32>
    %195 = tpu.matmul %194, %183, %cst_75 {dimension_numbers = #tpu.dot_dimension_numbers<[2], [1], [1], [2], [0, 0, 0, 1, 1, 2], [0], [0]>} : vector<3x8x8xf32>, vector<3x8x8xf32>, vector<3x8x8xf32> -> vector<3x8x8xf32>
    "tpu.trace_stop"() : () -> ()
    %196 = vector.extract_strided_slice %177 {offsets = [0, 8], sizes = [24, 8], strides = [1, 1]} : vector<24x128xf32> to vector<24x8xf32>
    %197 = vector.shape_cast %196 : vector<24x8xf32> to vector<3x8x8xf32>
    %198 = vector.extract_strided_slice %177 {offsets = [0, 40], sizes = [24, 8], strides = [1, 1]} : vector<24x128xf32> to vector<24x8xf32>
    %199 = vector.shape_cast %198 : vector<24x8xf32> to vector<3x8x8xf32>
    %200 = vector.extract_strided_slice %177 {offsets = [0, 72], sizes = [24, 8], strides = [1, 1]} : vector<24x128xf32> to vector<24x8xf32>
    %201 = vector.shape_cast %200 : vector<24x8xf32> to vector<3x8x8xf32>
    "tpu.trace_start"() <{level = 10 : i32, message = "bqd,bkd->bqk"}> : () -> ()
    %cst_76 = arith.constant dense<0.000000e+00> : vector<3x8x8xf32>
    %202 = tpu.matmul %197, %199, %cst_76 {dimension_numbers = #tpu.dot_dimension_numbers<[2], [2], [1], [1], [0, 0, 0, 1, 1, 1], [0], [0]>} : vector<3x8x8xf32>, vector<3x8x8xf32>, vector<3x8x8xf32> -> vector<3x8x8xf32>
    "tpu.trace_stop"() : () -> ()
    %cst_77 = arith.constant dense<0xFF800000> : vector<3x8xf32>
    %203 = vector.multi_reduction <maximumf>, %202, %cst_77 [2] : vector<3x8x8xf32> to vector<3x8xf32>
    %204 = vector.shape_cast %203 : vector<3x8xf32> to vector<3x8x1xf32>
    %205 = vector.broadcast %204 : vector<3x8x1xf32> to vector<3x8x8xf32>
    %206 = arith.subf %202, %205 : vector<3x8x8xf32>
    %207 = math.exp %206 : vector<3x8x8xf32>
    %cst_78 = arith.constant dense<0.000000e+00> : vector<3x8xf32>
    %208 = vector.multi_reduction <add>, %207, %cst_78 [2] : vector<3x8x8xf32> to vector<3x8xf32>
    %209 = vector.shape_cast %208 : vector<3x8xf32> to vector<3x8x1xf32>
    %210 = tpu.reciprocal %209 {approx = true} : vector<3x8x1xf32> -> vector<3x8x1xf32>
    %211 = vector.broadcast %210 : vector<3x8x1xf32> to vector<3x8x8xf32>
    %212 = arith.mulf %207, %211 : vector<3x8x8xf32>
    "tpu.trace_start"() <{level = 10 : i32, message = "bqk,bkd->bqd"}> : () -> ()
    %cst_79 = arith.constant dense<0.000000e+00> : vector<3x8x8xf32>
    %213 = tpu.matmul %212, %201, %cst_79 {dimension_numbers = #tpu.dot_dimension_numbers<[2], [1], [1], [2], [0, 0, 0, 1, 1, 2], [0], [0]>} : vector<3x8x8xf32>, vector<3x8x8xf32>, vector<3x8x8xf32> -> vector<3x8x8xf32>
    "tpu.trace_stop"() : () -> ()
    %214 = vector.extract_strided_slice %177 {offsets = [0, 16], sizes = [24, 8], strides = [1, 1]} : vector<24x128xf32> to vector<24x8xf32>
    %215 = vector.shape_cast %214 : vector<24x8xf32> to vector<3x8x8xf32>
    %216 = vector.extract_strided_slice %177 {offsets = [0, 48], sizes = [24, 8], strides = [1, 1]} : vector<24x128xf32> to vector<24x8xf32>
    %217 = vector.shape_cast %216 : vector<24x8xf32> to vector<3x8x8xf32>
    %218 = vector.extract_strided_slice %177 {offsets = [0, 80], sizes = [24, 8], strides = [1, 1]} : vector<24x128xf32> to vector<24x8xf32>
    %219 = vector.shape_cast %218 : vector<24x8xf32> to vector<3x8x8xf32>
    "tpu.trace_start"() <{level = 10 : i32, message = "bqd,bkd->bqk"}> : () -> ()
    %cst_80 = arith.constant dense<0.000000e+00> : vector<3x8x8xf32>
    %220 = tpu.matmul %215, %217, %cst_80 {dimension_numbers = #tpu.dot_dimension_numbers<[2], [2], [1], [1], [0, 0, 0, 1, 1, 1], [0], [0]>} : vector<3x8x8xf32>, vector<3x8x8xf32>, vector<3x8x8xf32> -> vector<3x8x8xf32>
    "tpu.trace_stop"() : () -> ()
    %cst_81 = arith.constant dense<0xFF800000> : vector<3x8xf32>
    %221 = vector.multi_reduction <maximumf>, %220, %cst_81 [2] : vector<3x8x8xf32> to vector<3x8xf32>
    %222 = vector.shape_cast %221 : vector<3x8xf32> to vector<3x8x1xf32>
    %223 = vector.broadcast %222 : vector<3x8x1xf32> to vector<3x8x8xf32>
    %224 = arith.subf %220, %223 : vector<3x8x8xf32>
    %225 = math.exp %224 : vector<3x8x8xf32>
    %cst_82 = arith.constant dense<0.000000e+00> : vector<3x8xf32>
    %226 = vector.multi_reduction <add>, %225, %cst_82 [2] : vector<3x8x8xf32> to vector<3x8xf32>
    %227 = vector.shape_cast %226 : vector<3x8xf32> to vector<3x8x1xf32>
    %228 = tpu.reciprocal %227 {approx = true} : vector<3x8x1xf32> -> vector<3x8x1xf32>
    %229 = vector.broadcast %228 : vector<3x8x1xf32> to vector<3x8x8xf32>
    %230 = arith.mulf %225, %229 : vector<3x8x8xf32>
    "tpu.trace_start"() <{level = 10 : i32, message = "bqk,bkd->bqd"}> : () -> ()
    %cst_83 = arith.constant dense<0.000000e+00> : vector<3x8x8xf32>
    %231 = tpu.matmul %230, %219, %cst_83 {dimension_numbers = #tpu.dot_dimension_numbers<[2], [1], [1], [2], [0, 0, 0, 1, 1, 2], [0], [0]>} : vector<3x8x8xf32>, vector<3x8x8xf32>, vector<3x8x8xf32> -> vector<3x8x8xf32>
    "tpu.trace_stop"() : () -> ()
    %232 = vector.extract_strided_slice %177 {offsets = [0, 24], sizes = [24, 8], strides = [1, 1]} : vector<24x128xf32> to vector<24x8xf32>
    %233 = vector.shape_cast %232 : vector<24x8xf32> to vector<3x8x8xf32>
    %234 = vector.extract_strided_slice %177 {offsets = [0, 56], sizes = [24, 8], strides = [1, 1]} : vector<24x128xf32> to vector<24x8xf32>
    %235 = vector.shape_cast %234 : vector<24x8xf32> to vector<3x8x8xf32>
    %236 = vector.extract_strided_slice %177 {offsets = [0, 88], sizes = [24, 8], strides = [1, 1]} : vector<24x128xf32> to vector<24x8xf32>
    %237 = vector.shape_cast %236 : vector<24x8xf32> to vector<3x8x8xf32>
    "tpu.trace_start"() <{level = 10 : i32, message = "bqd,bkd->bqk"}> : () -> ()
    %cst_84 = arith.constant dense<0.000000e+00> : vector<3x8x8xf32>
    %238 = tpu.matmul %233, %235, %cst_84 {dimension_numbers = #tpu.dot_dimension_numbers<[2], [2], [1], [1], [0, 0, 0, 1, 1, 1], [0], [0]>} : vector<3x8x8xf32>, vector<3x8x8xf32>, vector<3x8x8xf32> -> vector<3x8x8xf32>
    "tpu.trace_stop"() : () -> ()
    %cst_85 = arith.constant dense<0xFF800000> : vector<3x8xf32>
    %239 = vector.multi_reduction <maximumf>, %238, %cst_85 [2] : vector<3x8x8xf32> to vector<3x8xf32>
    %240 = vector.shape_cast %239 : vector<3x8xf32> to vector<3x8x1xf32>
    %241 = vector.broadcast %240 : vector<3x8x1xf32> to vector<3x8x8xf32>
    %242 = arith.subf %238, %241 : vector<3x8x8xf32>
    %243 = math.exp %242 : vector<3x8x8xf32>
    %cst_86 = arith.constant dense<0.000000e+00> : vector<3x8xf32>
    %244 = vector.multi_reduction <add>, %243, %cst_86 [2] : vector<3x8x8xf32> to vector<3x8xf32>
    %245 = vector.shape_cast %244 : vector<3x8xf32> to vector<3x8x1xf32>
    %246 = tpu.reciprocal %245 {approx = true} : vector<3x8x1xf32> -> vector<3x8x1xf32>
    %247 = vector.broadcast %246 : vector<3x8x1xf32> to vector<3x8x8xf32>
    %248 = arith.mulf %243, %247 : vector<3x8x8xf32>
    "tpu.trace_start"() <{level = 10 : i32, message = "bqk,bkd->bqd"}> : () -> ()
    %cst_87 = arith.constant dense<0.000000e+00> : vector<3x8x8xf32>
    %249 = tpu.matmul %248, %237, %cst_87 {dimension_numbers = #tpu.dot_dimension_numbers<[2], [1], [1], [2], [0, 0, 0, 1, 1, 2], [0], [0]>} : vector<3x8x8xf32>, vector<3x8x8xf32>, vector<3x8x8xf32> -> vector<3x8x8xf32>
    "tpu.trace_stop"() : () -> ()
    %250 = tpu.concatenate %195, %213, %231, %249 in 2 : vector<3x8x8xf32>, vector<3x8x8xf32>, vector<3x8x8xf32>, vector<3x8x8xf32> -> vector<3x8x32xf32>
    %251 = vector.shape_cast %250 : vector<3x8x32xf32> to vector<24x32xf32>
    %c1_88 = arith.constant 1 : index
    %c0_89 = arith.constant 0 : index
    %c128_90 = arith.constant 128 : index
    %252 = vector.load %arg4[%c1_88, %c0_89, %c128_90] : memref<2x64x256xf32, #tpu.memory_space<vmem>>, vector<1x32x32xf32>
    %253 = vector.shape_cast %252 : vector<1x32x32xf32> to vector<32x32xf32>
    %c1_91 = arith.constant 1 : index
    %c0_92 = arith.constant 0 : index
    %c128_93 = arith.constant 128 : index
    %254 = vector.load %arg5[%c1_91, %c0_92, %c128_93] : memref<2x1x384xf32, #tpu.memory_space<vmem>>, vector<1x1x32xf32>
    %255 = vector.shape_cast %254 : vector<1x1x32xf32> to vector<1x32xf32>
    %cst_94 = arith.constant dense<0.000000e+00> : vector<24x32xf32>
    %256 = tpu.matmul %251, %253, %cst_94 {dimension_numbers = #tpu.dot_dimension_numbers<[1], [0], [0], [1], [0, 0, 1, 1], [], []>} : vector<24x32xf32>, vector<32x32xf32>, vector<24x32xf32> -> vector<24x32xf32>
    %257 = vector.broadcast %255 : vector<1x32xf32> to vector<24x32xf32>
    %258 = arith.addf %256, %257 : vector<24x32xf32>
    %c1_95 = arith.constant 1 : index
    %c0_96 = arith.constant 0 : index
    %c160_97 = arith.constant 160 : index
    %259 = vector.load %arg5[%c1_95, %c0_96, %c160_97] : memref<2x1x384xf32, #tpu.memory_space<vmem>>, vector<1x1x32xf32>
    %260 = vector.shape_cast %259 : vector<1x1x32xf32> to vector<1x32xf32>
    %c1_98 = arith.constant 1 : index
    %c0_99 = arith.constant 0 : index
    %c192_100 = arith.constant 192 : index
    %261 = vector.load %arg5[%c1_98, %c0_99, %c192_100] : memref<2x1x384xf32, #tpu.memory_space<vmem>>, vector<1x1x32xf32>
    %262 = vector.shape_cast %261 : vector<1x1x32xf32> to vector<1x32xf32>
    %263 = arith.addf %170, %258 : vector<24x32xf32>
    %cst_101 = arith.constant dense<0.000000e+00> : vector<24xf32>
    %264 = vector.multi_reduction <add>, %263, %cst_101 [1] : vector<24x32xf32> to vector<24xf32>
    %265 = vector.shape_cast %264 : vector<24xf32> to vector<24x1xf32>
    %cst_102 = arith.constant 3.200000e+01 : f32
    %266 = vector.broadcast %cst_102 : f32 to vector<24x1xf32>
    %267 = arith.divf %265, %266 : vector<24x1xf32>
    %268 = vector.broadcast %267 : vector<24x1xf32> to vector<24x32xf32>
    %269 = arith.subf %263, %268 : vector<24x32xf32>
    %270 = arith.mulf %269, %269 : vector<24x32xf32>
    %cst_103 = arith.constant dense<0.000000e+00> : vector<24xf32>
    %271 = vector.multi_reduction <add>, %270, %cst_103 [1] : vector<24x32xf32> to vector<24xf32>
    %272 = vector.shape_cast %271 : vector<24xf32> to vector<24x1xf32>
    %cst_104 = arith.constant 3.200000e+01 : f32
    %273 = vector.broadcast %cst_104 : f32 to vector<24x1xf32>
    %274 = arith.divf %272, %273 : vector<24x1xf32>
    %275 = vector.broadcast %267 : vector<24x1xf32> to vector<24x32xf32>
    %276 = arith.subf %263, %275 : vector<24x32xf32>
    %cst_105 = arith.constant 9.99999974E-6 : f32
    %277 = vector.broadcast %cst_105 : f32 to vector<24x1xf32>
    %278 = arith.addf %274, %277 : vector<24x1xf32>
    %279 = math.rsqrt %278 : vector<24x1xf32>
    %280 = vector.broadcast %279 : vector<24x1xf32> to vector<24x32xf32>
    %281 = arith.mulf %276, %280 : vector<24x32xf32>
    %282 = vector.broadcast %260 : vector<1x32xf32> to vector<24x32xf32>
    %283 = arith.mulf %281, %282 : vector<24x32xf32>
    %284 = vector.broadcast %262 : vector<1x32xf32> to vector<24x32xf32>
    %285 = arith.addf %283, %284 : vector<24x32xf32>
    %c1_106 = arith.constant 1 : index
    %c0_107 = arith.constant 0 : index
    %c160_108 = arith.constant 160 : index
    %286 = vector.load %arg4[%c1_106, %c0_107, %c160_108] : memref<2x64x256xf32, #tpu.memory_space<vmem>>, vector<1x32x64xf32>
    %287 = vector.shape_cast %286 : vector<1x32x64xf32> to vector<32x64xf32>
    %c1_109 = arith.constant 1 : index
    %c0_110 = arith.constant 0 : index
    %c224_111 = arith.constant 224 : index
    %288 = vector.load %arg5[%c1_109, %c0_110, %c224_111] : memref<2x1x384xf32, #tpu.memory_space<vmem>>, vector<1x1x64xf32>
    %289 = vector.shape_cast %288 : vector<1x1x64xf32> to vector<1x64xf32>
    %c1_112 = arith.constant 1 : index
    %c0_113 = arith.constant 0 : index
    %c224_114 = arith.constant 224 : index
    %290 = vector.load %arg4[%c1_112, %c0_113, %c224_114] : memref<2x64x256xf32, #tpu.memory_space<vmem>>, vector<1x64x32xf32>
    %291 = vector.shape_cast %290 : vector<1x64x32xf32> to vector<64x32xf32>
    %c1_115 = arith.constant 1 : index
    %c0_116 = arith.constant 0 : index
    %c288_117 = arith.constant 288 : index
    %292 = vector.load %arg5[%c1_115, %c0_116, %c288_117] : memref<2x1x384xf32, #tpu.memory_space<vmem>>, vector<1x1x32xf32>
    %293 = vector.shape_cast %292 : vector<1x1x32xf32> to vector<1x32xf32>
    %cst_118 = arith.constant dense<0.000000e+00> : vector<24x64xf32>
    %294 = tpu.matmul %285, %287, %cst_118 {dimension_numbers = #tpu.dot_dimension_numbers<[1], [0], [0], [1], [0, 0, 1, 1], [], []>} : vector<24x32xf32>, vector<32x64xf32>, vector<24x64xf32> -> vector<24x64xf32>
    %295 = vector.broadcast %289 : vector<1x64xf32> to vector<24x64xf32>
    %296 = arith.addf %294, %295 : vector<24x64xf32>
    %cst_119 = arith.constant 0.000000e+00 : f32
    %297 = vector.broadcast %cst_119 : f32 to vector<24x64xf32>
    %298 = arith.maximumf %296, %297 : vector<24x64xf32>
    %cst_120 = arith.constant dense<0.000000e+00> : vector<24x32xf32>
    %299 = tpu.matmul %298, %291, %cst_120 {dimension_numbers = #tpu.dot_dimension_numbers<[1], [0], [0], [1], [0, 0, 1, 1], [], []>} : vector<24x64xf32>, vector<64x32xf32>, vector<24x32xf32> -> vector<24x32xf32>
    %300 = vector.broadcast %293 : vector<1x32xf32> to vector<24x32xf32>
    %301 = arith.addf %299, %300 : vector<24x32xf32>
    %c1_121 = arith.constant 1 : index
    %c0_122 = arith.constant 0 : index
    %c320_123 = arith.constant 320 : index
    %302 = vector.load %arg5[%c1_121, %c0_122, %c320_123] : memref<2x1x384xf32, #tpu.memory_space<vmem>>, vector<1x1x32xf32>
    %303 = vector.shape_cast %302 : vector<1x1x32xf32> to vector<1x32xf32>
    %c1_124 = arith.constant 1 : index
    %c0_125 = arith.constant 0 : index
    %c352_126 = arith.constant 352 : index
    %304 = vector.load %arg5[%c1_124, %c0_125, %c352_126] : memref<2x1x384xf32, #tpu.memory_space<vmem>>, vector<1x1x32xf32>
    %305 = vector.shape_cast %304 : vector<1x1x32xf32> to vector<1x32xf32>
    %306 = arith.addf %285, %301 : vector<24x32xf32>
    %cst_127 = arith.constant dense<0.000000e+00> : vector<24xf32>
    %307 = vector.multi_reduction <add>, %306, %cst_127 [1] : vector<24x32xf32> to vector<24xf32>
    %308 = vector.shape_cast %307 : vector<24xf32> to vector<24x1xf32>
    %cst_128 = arith.constant 3.200000e+01 : f32
    %309 = vector.broadcast %cst_128 : f32 to vector<24x1xf32>
    %310 = arith.divf %308, %309 : vector<24x1xf32>
    %311 = vector.broadcast %310 : vector<24x1xf32> to vector<24x32xf32>
    %312 = arith.subf %306, %311 : vector<24x32xf32>
    %313 = arith.mulf %312, %312 : vector<24x32xf32>
    %cst_129 = arith.constant dense<0.000000e+00> : vector<24xf32>
    %314 = vector.multi_reduction <add>, %313, %cst_129 [1] : vector<24x32xf32> to vector<24xf32>
    %315 = vector.shape_cast %314 : vector<24xf32> to vector<24x1xf32>
    %cst_130 = arith.constant 3.200000e+01 : f32
    %316 = vector.broadcast %cst_130 : f32 to vector<24x1xf32>
    %317 = arith.divf %315, %316 : vector<24x1xf32>
    %318 = vector.broadcast %310 : vector<24x1xf32> to vector<24x32xf32>
    %319 = arith.subf %306, %318 : vector<24x32xf32>
    %cst_131 = arith.constant 9.99999974E-6 : f32
    %320 = vector.broadcast %cst_131 : f32 to vector<24x1xf32>
    %321 = arith.addf %317, %320 : vector<24x1xf32>
    %322 = math.rsqrt %321 : vector<24x1xf32>
    %323 = vector.broadcast %322 : vector<24x1xf32> to vector<24x32xf32>
    %324 = arith.mulf %319, %323 : vector<24x32xf32>
    %325 = vector.broadcast %303 : vector<1x32xf32> to vector<24x32xf32>
    %326 = arith.mulf %324, %325 : vector<24x32xf32>
    %327 = vector.broadcast %305 : vector<1x32xf32> to vector<24x32xf32>
    %328 = arith.addf %326, %327 : vector<24x32xf32>
    %329 = vector.shape_cast %328 : vector<24x32xf32> to vector<3x8x32xf32>
    %330 = vector.extract_strided_slice %329 {offsets = [0, 7, 0], sizes = [3, 1, 32], strides = [1, 1, 1]} : vector<3x8x32xf32> to vector<3x1x32xf32>
    %331 = vector.shape_cast %330 : vector<3x1x32xf32> to vector<3x32xf32>
    %c0_132 = arith.constant 0 : index
    %c0_133 = arith.constant 0 : index
    %c0_134 = arith.constant 0 : index
    %332 = vector.load %arg2[%c0_132, %c0_133, %c0_134] : memref<1x1x3xf32, #tpu.memory_space<vmem>>, vector<1x1x3xf32>
    %333 = vector.shape_cast %332 : vector<1x1x3xf32> to vector<1x3xf32>
    %334 = vector.shape_cast %333 : vector<1x3xf32> to vector<1x1x3xf32>
    %335 = vector.broadcast %334 : vector<1x1x3xf32> to vector<1x3x3xf32>
    %c0_135 = arith.constant 0 : index
    %c0_136 = arith.constant 0 : index
    %c0_137 = arith.constant 0 : index
    %336 = vector.load %arg6[%c0_135, %c0_136, %c0_137] : memref<2x64x256xf32, #tpu.memory_space<vmem>>, vector<1x32x128xf32>
    %337 = vector.shape_cast %336 : vector<1x32x128xf32> to vector<32x128xf32>
    %c0_138 = arith.constant 0 : index
    %c0_139 = arith.constant 0 : index
    %c0_140 = arith.constant 0 : index
    %338 = vector.load %arg7[%c0_138, %c0_139, %c0_140] : memref<2x1x384xf32, #tpu.memory_space<vmem>>, vector<1x1x128xf32>
    %339 = vector.shape_cast %338 : vector<1x1x128xf32> to vector<1x128xf32>
    %cst_141 = arith.constant dense<0.000000e+00> : vector<3x128xf32>
    %340 = tpu.matmul %331, %337, %cst_141 {dimension_numbers = #tpu.dot_dimension_numbers<[1], [0], [0], [1], [0, 0, 1, 1], [], []>} : vector<3x32xf32>, vector<32x128xf32>, vector<3x128xf32> -> vector<3x128xf32>
    %341 = vector.broadcast %339 : vector<1x128xf32> to vector<3x128xf32>
    %342 = arith.addf %340, %341 : vector<3x128xf32>
    %343 = vector.extract_strided_slice %342 {offsets = [0, 0], sizes = [3, 8], strides = [1, 1]} : vector<3x128xf32> to vector<3x8xf32>
    %344 = vector.shape_cast %343 : vector<3x8xf32> to vector<1x3x8xf32>
    %345 = vector.extract_strided_slice %342 {offsets = [0, 32], sizes = [3, 8], strides = [1, 1]} : vector<3x128xf32> to vector<3x8xf32>
    %346 = vector.shape_cast %345 : vector<3x8xf32> to vector<1x3x8xf32>
    %347 = vector.extract_strided_slice %342 {offsets = [0, 64], sizes = [3, 8], strides = [1, 1]} : vector<3x128xf32> to vector<3x8xf32>
    %348 = vector.shape_cast %347 : vector<3x8xf32> to vector<1x3x8xf32>
    "tpu.trace_start"() <{level = 10 : i32, message = "bqd,bkd->bqk"}> : () -> ()
    %cst_142 = arith.constant dense<0.000000e+00> : vector<1x3x3xf32>
    %349 = tpu.matmul %344, %346, %cst_142 {dimension_numbers = #tpu.dot_dimension_numbers<[2], [2], [1], [1], [0, 0, 0, 1, 1, 1], [0], [0]>} : vector<1x3x8xf32>, vector<1x3x8xf32>, vector<1x3x3xf32> -> vector<1x3x3xf32>
    "tpu.trace_stop"() : () -> ()
    %350 = arith.addf %349, %335 : vector<1x3x3xf32>
    %cst_143 = arith.constant dense<0xFF800000> : vector<1x3xf32>
    %351 = vector.multi_reduction <maximumf>, %350, %cst_143 [2] : vector<1x3x3xf32> to vector<1x3xf32>
    %352 = vector.shape_cast %351 : vector<1x3xf32> to vector<1x3x1xf32>
    %353 = vector.broadcast %352 : vector<1x3x1xf32> to vector<1x3x3xf32>
    %354 = arith.subf %350, %353 : vector<1x3x3xf32>
    %355 = math.exp %354 : vector<1x3x3xf32>
    %cst_144 = arith.constant dense<0.000000e+00> : vector<1x3xf32>
    %356 = vector.multi_reduction <add>, %355, %cst_144 [2] : vector<1x3x3xf32> to vector<1x3xf32>
    %357 = vector.shape_cast %356 : vector<1x3xf32> to vector<1x3x1xf32>
    %358 = tpu.reciprocal %357 {approx = true} : vector<1x3x1xf32> -> vector<1x3x1xf32>
    %359 = vector.broadcast %358 : vector<1x3x1xf32> to vector<1x3x3xf32>
    %360 = arith.mulf %355, %359 : vector<1x3x3xf32>
    "tpu.trace_start"() <{level = 10 : i32, message = "bqk,bkd->bqd"}> : () -> ()
    %cst_145 = arith.constant dense<0.000000e+00> : vector<1x3x8xf32>
    %361 = tpu.matmul %360, %348, %cst_145 {dimension_numbers = #tpu.dot_dimension_numbers<[2], [1], [1], [2], [0, 0, 0, 1, 1, 2], [0], [0]>} : vector<1x3x3xf32>, vector<1x3x8xf32>, vector<1x3x8xf32> -> vector<1x3x8xf32>
    "tpu.trace_stop"() : () -> ()
    %362 = vector.extract_strided_slice %342 {offsets = [0, 8], sizes = [3, 8], strides = [1, 1]} : vector<3x128xf32> to vector<3x8xf32>
    %363 = vector.shape_cast %362 : vector<3x8xf32> to vector<1x3x8xf32>
    %364 = vector.extract_strided_slice %342 {offsets = [0, 40], sizes = [3, 8], strides = [1, 1]} : vector<3x128xf32> to vector<3x8xf32>
    %365 = vector.shape_cast %364 : vector<3x8xf32> to vector<1x3x8xf32>
    %366 = vector.extract_strided_slice %342 {offsets = [0, 72], sizes = [3, 8], strides = [1, 1]} : vector<3x128xf32> to vector<3x8xf32>
    %367 = vector.shape_cast %366 : vector<3x8xf32> to vector<1x3x8xf32>
    "tpu.trace_start"() <{level = 10 : i32, message = "bqd,bkd->bqk"}> : () -> ()
    %cst_146 = arith.constant dense<0.000000e+00> : vector<1x3x3xf32>
    %368 = tpu.matmul %363, %365, %cst_146 {dimension_numbers = #tpu.dot_dimension_numbers<[2], [2], [1], [1], [0, 0, 0, 1, 1, 1], [0], [0]>} : vector<1x3x8xf32>, vector<1x3x8xf32>, vector<1x3x3xf32> -> vector<1x3x3xf32>
    "tpu.trace_stop"() : () -> ()
    %369 = arith.addf %368, %335 : vector<1x3x3xf32>
    %cst_147 = arith.constant dense<0xFF800000> : vector<1x3xf32>
    %370 = vector.multi_reduction <maximumf>, %369, %cst_147 [2] : vector<1x3x3xf32> to vector<1x3xf32>
    %371 = vector.shape_cast %370 : vector<1x3xf32> to vector<1x3x1xf32>
    %372 = vector.broadcast %371 : vector<1x3x1xf32> to vector<1x3x3xf32>
    %373 = arith.subf %369, %372 : vector<1x3x3xf32>
    %374 = math.exp %373 : vector<1x3x3xf32>
    %cst_148 = arith.constant dense<0.000000e+00> : vector<1x3xf32>
    %375 = vector.multi_reduction <add>, %374, %cst_148 [2] : vector<1x3x3xf32> to vector<1x3xf32>
    %376 = vector.shape_cast %375 : vector<1x3xf32> to vector<1x3x1xf32>
    %377 = tpu.reciprocal %376 {approx = true} : vector<1x3x1xf32> -> vector<1x3x1xf32>
    %378 = vector.broadcast %377 : vector<1x3x1xf32> to vector<1x3x3xf32>
    %379 = arith.mulf %374, %378 : vector<1x3x3xf32>
    "tpu.trace_start"() <{level = 10 : i32, message = "bqk,bkd->bqd"}> : () -> ()
    %cst_149 = arith.constant dense<0.000000e+00> : vector<1x3x8xf32>
    %380 = tpu.matmul %379, %367, %cst_149 {dimension_numbers = #tpu.dot_dimension_numbers<[2], [1], [1], [2], [0, 0, 0, 1, 1, 2], [0], [0]>} : vector<1x3x3xf32>, vector<1x3x8xf32>, vector<1x3x8xf32> -> vector<1x3x8xf32>
    "tpu.trace_stop"() : () -> ()
    %381 = vector.extract_strided_slice %342 {offsets = [0, 16], sizes = [3, 8], strides = [1, 1]} : vector<3x128xf32> to vector<3x8xf32>
    %382 = vector.shape_cast %381 : vector<3x8xf32> to vector<1x3x8xf32>
    %383 = vector.extract_strided_slice %342 {offsets = [0, 48], sizes = [3, 8], strides = [1, 1]} : vector<3x128xf32> to vector<3x8xf32>
    %384 = vector.shape_cast %383 : vector<3x8xf32> to vector<1x3x8xf32>
    %385 = vector.extract_strided_slice %342 {offsets = [0, 80], sizes = [3, 8], strides = [1, 1]} : vector<3x128xf32> to vector<3x8xf32>
    %386 = vector.shape_cast %385 : vector<3x8xf32> to vector<1x3x8xf32>
    "tpu.trace_start"() <{level = 10 : i32, message = "bqd,bkd->bqk"}> : () -> ()
    %cst_150 = arith.constant dense<0.000000e+00> : vector<1x3x3xf32>
    %387 = tpu.matmul %382, %384, %cst_150 {dimension_numbers = #tpu.dot_dimension_numbers<[2], [2], [1], [1], [0, 0, 0, 1, 1, 1], [0], [0]>} : vector<1x3x8xf32>, vector<1x3x8xf32>, vector<1x3x3xf32> -> vector<1x3x3xf32>
    "tpu.trace_stop"() : () -> ()
    %388 = arith.addf %387, %335 : vector<1x3x3xf32>
    %cst_151 = arith.constant dense<0xFF800000> : vector<1x3xf32>
    %389 = vector.multi_reduction <maximumf>, %388, %cst_151 [2] : vector<1x3x3xf32> to vector<1x3xf32>
    %390 = vector.shape_cast %389 : vector<1x3xf32> to vector<1x3x1xf32>
    %391 = vector.broadcast %390 : vector<1x3x1xf32> to vector<1x3x3xf32>
    %392 = arith.subf %388, %391 : vector<1x3x3xf32>
    %393 = math.exp %392 : vector<1x3x3xf32>
    %cst_152 = arith.constant dense<0.000000e+00> : vector<1x3xf32>
    %394 = vector.multi_reduction <add>, %393, %cst_152 [2] : vector<1x3x3xf32> to vector<1x3xf32>
    %395 = vector.shape_cast %394 : vector<1x3xf32> to vector<1x3x1xf32>
    %396 = tpu.reciprocal %395 {approx = true} : vector<1x3x1xf32> -> vector<1x3x1xf32>
    %397 = vector.broadcast %396 : vector<1x3x1xf32> to vector<1x3x3xf32>
    %398 = arith.mulf %393, %397 : vector<1x3x3xf32>
    "tpu.trace_start"() <{level = 10 : i32, message = "bqk,bkd->bqd"}> : () -> ()
    %cst_153 = arith.constant dense<0.000000e+00> : vector<1x3x8xf32>
    %399 = tpu.matmul %398, %386, %cst_153 {dimension_numbers = #tpu.dot_dimension_numbers<[2], [1], [1], [2], [0, 0, 0, 1, 1, 2], [0], [0]>} : vector<1x3x3xf32>, vector<1x3x8xf32>, vector<1x3x8xf32> -> vector<1x3x8xf32>
    "tpu.trace_stop"() : () -> ()
    %400 = vector.extract_strided_slice %342 {offsets = [0, 24], sizes = [3, 8], strides = [1, 1]} : vector<3x128xf32> to vector<3x8xf32>
    %401 = vector.shape_cast %400 : vector<3x8xf32> to vector<1x3x8xf32>
    %402 = vector.extract_strided_slice %342 {offsets = [0, 56], sizes = [3, 8], strides = [1, 1]} : vector<3x128xf32> to vector<3x8xf32>
    %403 = vector.shape_cast %402 : vector<3x8xf32> to vector<1x3x8xf32>
    %404 = vector.extract_strided_slice %342 {offsets = [0, 88], sizes = [3, 8], strides = [1, 1]} : vector<3x128xf32> to vector<3x8xf32>
    %405 = vector.shape_cast %404 : vector<3x8xf32> to vector<1x3x8xf32>
    "tpu.trace_start"() <{level = 10 : i32, message = "bqd,bkd->bqk"}> : () -> ()
    %cst_154 = arith.constant dense<0.000000e+00> : vector<1x3x3xf32>
    %406 = tpu.matmul %401, %403, %cst_154 {dimension_numbers = #tpu.dot_dimension_numbers<[2], [2], [1], [1], [0, 0, 0, 1, 1, 1], [0], [0]>} : vector<1x3x8xf32>, vector<1x3x8xf32>, vector<1x3x3xf32> -> vector<1x3x3xf32>
    "tpu.trace_stop"() : () -> ()
    %407 = arith.addf %406, %335 : vector<1x3x3xf32>
    %cst_155 = arith.constant dense<0xFF800000> : vector<1x3xf32>
    %408 = vector.multi_reduction <maximumf>, %407, %cst_155 [2] : vector<1x3x3xf32> to vector<1x3xf32>
    %409 = vector.shape_cast %408 : vector<1x3xf32> to vector<1x3x1xf32>
    %410 = vector.broadcast %409 : vector<1x3x1xf32> to vector<1x3x3xf32>
    %411 = arith.subf %407, %410 : vector<1x3x3xf32>
    %412 = math.exp %411 : vector<1x3x3xf32>
    %cst_156 = arith.constant dense<0.000000e+00> : vector<1x3xf32>
    %413 = vector.multi_reduction <add>, %412, %cst_156 [2] : vector<1x3x3xf32> to vector<1x3xf32>
    %414 = vector.shape_cast %413 : vector<1x3xf32> to vector<1x3x1xf32>
    %415 = tpu.reciprocal %414 {approx = true} : vector<1x3x1xf32> -> vector<1x3x1xf32>
    %416 = vector.broadcast %415 : vector<1x3x1xf32> to vector<1x3x3xf32>
    %417 = arith.mulf %412, %416 : vector<1x3x3xf32>
    "tpu.trace_start"() <{level = 10 : i32, message = "bqk,bkd->bqd"}> : () -> ()
    %cst_157 = arith.constant dense<0.000000e+00> : vector<1x3x8xf32>
    %418 = tpu.matmul %417, %405, %cst_157 {dimension_numbers = #tpu.dot_dimension_numbers<[2], [1], [1], [2], [0, 0, 0, 1, 1, 2], [0], [0]>} : vector<1x3x3xf32>, vector<1x3x8xf32>, vector<1x3x8xf32> -> vector<1x3x8xf32>
    "tpu.trace_stop"() : () -> ()
    %419 = tpu.concatenate %361, %380, %399, %418 in 2 : vector<1x3x8xf32>, vector<1x3x8xf32>, vector<1x3x8xf32>, vector<1x3x8xf32> -> vector<1x3x32xf32>
    %420 = vector.shape_cast %419 : vector<1x3x32xf32> to vector<3x32xf32>
    %c0_158 = arith.constant 0 : index
    %c0_159 = arith.constant 0 : index
    %c128_160 = arith.constant 128 : index
    %421 = vector.load %arg6[%c0_158, %c0_159, %c128_160] : memref<2x64x256xf32, #tpu.memory_space<vmem>>, vector<1x32x32xf32>
    %422 = vector.shape_cast %421 : vector<1x32x32xf32> to vector<32x32xf32>
    %c0_161 = arith.constant 0 : index
    %c0_162 = arith.constant 0 : index
    %c128_163 = arith.constant 128 : index
    %423 = vector.load %arg7[%c0_161, %c0_162, %c128_163] : memref<2x1x384xf32, #tpu.memory_space<vmem>>, vector<1x1x32xf32>
    %424 = vector.shape_cast %423 : vector<1x1x32xf32> to vector<1x32xf32>
    %cst_164 = arith.constant dense<0.000000e+00> : vector<3x32xf32>
    %425 = tpu.matmul %420, %422, %cst_164 {dimension_numbers = #tpu.dot_dimension_numbers<[1], [0], [0], [1], [0, 0, 1, 1], [], []>} : vector<3x32xf32>, vector<32x32xf32>, vector<3x32xf32> -> vector<3x32xf32>
    %426 = vector.broadcast %424 : vector<1x32xf32> to vector<3x32xf32>
    %427 = arith.addf %425, %426 : vector<3x32xf32>
    %c0_165 = arith.constant 0 : index
    %c0_166 = arith.constant 0 : index
    %c160_167 = arith.constant 160 : index
    %428 = vector.load %arg7[%c0_165, %c0_166, %c160_167] : memref<2x1x384xf32, #tpu.memory_space<vmem>>, vector<1x1x32xf32>
    %429 = vector.shape_cast %428 : vector<1x1x32xf32> to vector<1x32xf32>
    %c0_168 = arith.constant 0 : index
    %c0_169 = arith.constant 0 : index
    %c192_170 = arith.constant 192 : index
    %430 = vector.load %arg7[%c0_168, %c0_169, %c192_170] : memref<2x1x384xf32, #tpu.memory_space<vmem>>, vector<1x1x32xf32>
    %431 = vector.shape_cast %430 : vector<1x1x32xf32> to vector<1x32xf32>
    %432 = arith.addf %331, %427 : vector<3x32xf32>
    %cst_171 = arith.constant dense<0.000000e+00> : vector<3xf32>
    %433 = vector.multi_reduction <add>, %432, %cst_171 [1] : vector<3x32xf32> to vector<3xf32>
    %434 = vector.shape_cast %433 : vector<3xf32> to vector<3x1xf32>
    %cst_172 = arith.constant 3.200000e+01 : f32
    %435 = vector.broadcast %cst_172 : f32 to vector<3x1xf32>
    %436 = arith.divf %434, %435 : vector<3x1xf32>
    %437 = vector.broadcast %436 : vector<3x1xf32> to vector<3x32xf32>
    %438 = arith.subf %432, %437 : vector<3x32xf32>
    %439 = arith.mulf %438, %438 : vector<3x32xf32>
    %cst_173 = arith.constant dense<0.000000e+00> : vector<3xf32>
    %440 = vector.multi_reduction <add>, %439, %cst_173 [1] : vector<3x32xf32> to vector<3xf32>
    %441 = vector.shape_cast %440 : vector<3xf32> to vector<3x1xf32>
    %cst_174 = arith.constant 3.200000e+01 : f32
    %442 = vector.broadcast %cst_174 : f32 to vector<3x1xf32>
    %443 = arith.divf %441, %442 : vector<3x1xf32>
    %444 = vector.broadcast %436 : vector<3x1xf32> to vector<3x32xf32>
    %445 = arith.subf %432, %444 : vector<3x32xf32>
    %cst_175 = arith.constant 9.99999974E-6 : f32
    %446 = vector.broadcast %cst_175 : f32 to vector<3x1xf32>
    %447 = arith.addf %443, %446 : vector<3x1xf32>
    %448 = math.rsqrt %447 : vector<3x1xf32>
    %449 = vector.broadcast %448 : vector<3x1xf32> to vector<3x32xf32>
    %450 = arith.mulf %445, %449 : vector<3x32xf32>
    %451 = vector.broadcast %429 : vector<1x32xf32> to vector<3x32xf32>
    %452 = arith.mulf %450, %451 : vector<3x32xf32>
    %453 = vector.broadcast %431 : vector<1x32xf32> to vector<3x32xf32>
    %454 = arith.addf %452, %453 : vector<3x32xf32>
    %c0_176 = arith.constant 0 : index
    %c0_177 = arith.constant 0 : index
    %c160_178 = arith.constant 160 : index
    %455 = vector.load %arg6[%c0_176, %c0_177, %c160_178] : memref<2x64x256xf32, #tpu.memory_space<vmem>>, vector<1x32x64xf32>
    %456 = vector.shape_cast %455 : vector<1x32x64xf32> to vector<32x64xf32>
    %c0_179 = arith.constant 0 : index
    %c0_180 = arith.constant 0 : index
    %c224_181 = arith.constant 224 : index
    %457 = vector.load %arg7[%c0_179, %c0_180, %c224_181] : memref<2x1x384xf32, #tpu.memory_space<vmem>>, vector<1x1x64xf32>
    %458 = vector.shape_cast %457 : vector<1x1x64xf32> to vector<1x64xf32>
    %c0_182 = arith.constant 0 : index
    %c0_183 = arith.constant 0 : index
    %c224_184 = arith.constant 224 : index
    %459 = vector.load %arg6[%c0_182, %c0_183, %c224_184] : memref<2x64x256xf32, #tpu.memory_space<vmem>>, vector<1x64x32xf32>
    %460 = vector.shape_cast %459 : vector<1x64x32xf32> to vector<64x32xf32>
    %c0_185 = arith.constant 0 : index
    %c0_186 = arith.constant 0 : index
    %c288_187 = arith.constant 288 : index
    %461 = vector.load %arg7[%c0_185, %c0_186, %c288_187] : memref<2x1x384xf32, #tpu.memory_space<vmem>>, vector<1x1x32xf32>
    %462 = vector.shape_cast %461 : vector<1x1x32xf32> to vector<1x32xf32>
    %cst_188 = arith.constant dense<0.000000e+00> : vector<3x64xf32>
    %463 = tpu.matmul %454, %456, %cst_188 {dimension_numbers = #tpu.dot_dimension_numbers<[1], [0], [0], [1], [0, 0, 1, 1], [], []>} : vector<3x32xf32>, vector<32x64xf32>, vector<3x64xf32> -> vector<3x64xf32>
    %464 = vector.broadcast %458 : vector<1x64xf32> to vector<3x64xf32>
    %465 = arith.addf %463, %464 : vector<3x64xf32>
    %cst_189 = arith.constant 0.000000e+00 : f32
    %466 = vector.broadcast %cst_189 : f32 to vector<3x64xf32>
    %467 = arith.maximumf %465, %466 : vector<3x64xf32>
    %cst_190 = arith.constant dense<0.000000e+00> : vector<3x32xf32>
    %468 = tpu.matmul %467, %460, %cst_190 {dimension_numbers = #tpu.dot_dimension_numbers<[1], [0], [0], [1], [0, 0, 1, 1], [], []>} : vector<3x64xf32>, vector<64x32xf32>, vector<3x32xf32> -> vector<3x32xf32>
    %469 = vector.broadcast %462 : vector<1x32xf32> to vector<3x32xf32>
    %470 = arith.addf %468, %469 : vector<3x32xf32>
    %c0_191 = arith.constant 0 : index
    %c0_192 = arith.constant 0 : index
    %c320_193 = arith.constant 320 : index
    %471 = vector.load %arg7[%c0_191, %c0_192, %c320_193] : memref<2x1x384xf32, #tpu.memory_space<vmem>>, vector<1x1x32xf32>
    %472 = vector.shape_cast %471 : vector<1x1x32xf32> to vector<1x32xf32>
    %c0_194 = arith.constant 0 : index
    %c0_195 = arith.constant 0 : index
    %c352_196 = arith.constant 352 : index
    %473 = vector.load %arg7[%c0_194, %c0_195, %c352_196] : memref<2x1x384xf32, #tpu.memory_space<vmem>>, vector<1x1x32xf32>
    %474 = vector.shape_cast %473 : vector<1x1x32xf32> to vector<1x32xf32>
    %475 = arith.addf %454, %470 : vector<3x32xf32>
    %cst_197 = arith.constant dense<0.000000e+00> : vector<3xf32>
    %476 = vector.multi_reduction <add>, %475, %cst_197 [1] : vector<3x32xf32> to vector<3xf32>
    %477 = vector.shape_cast %476 : vector<3xf32> to vector<3x1xf32>
    %cst_198 = arith.constant 3.200000e+01 : f32
    %478 = vector.broadcast %cst_198 : f32 to vector<3x1xf32>
    %479 = arith.divf %477, %478 : vector<3x1xf32>
    %480 = vector.broadcast %479 : vector<3x1xf32> to vector<3x32xf32>
    %481 = arith.subf %475, %480 : vector<3x32xf32>
    %482 = arith.mulf %481, %481 : vector<3x32xf32>
    %cst_199 = arith.constant dense<0.000000e+00> : vector<3xf32>
    %483 = vector.multi_reduction <add>, %482, %cst_199 [1] : vector<3x32xf32> to vector<3xf32>
    %484 = vector.shape_cast %483 : vector<3xf32> to vector<3x1xf32>
    %cst_200 = arith.constant 3.200000e+01 : f32
    %485 = vector.broadcast %cst_200 : f32 to vector<3x1xf32>
    %486 = arith.divf %484, %485 : vector<3x1xf32>
    %487 = vector.broadcast %479 : vector<3x1xf32> to vector<3x32xf32>
    %488 = arith.subf %475, %487 : vector<3x32xf32>
    %cst_201 = arith.constant 9.99999974E-6 : f32
    %489 = vector.broadcast %cst_201 : f32 to vector<3x1xf32>
    %490 = arith.addf %486, %489 : vector<3x1xf32>
    %491 = math.rsqrt %490 : vector<3x1xf32>
    %492 = vector.broadcast %491 : vector<3x1xf32> to vector<3x32xf32>
    %493 = arith.mulf %488, %492 : vector<3x32xf32>
    %494 = vector.broadcast %472 : vector<1x32xf32> to vector<3x32xf32>
    %495 = arith.mulf %493, %494 : vector<3x32xf32>
    %496 = vector.broadcast %474 : vector<1x32xf32> to vector<3x32xf32>
    %497 = arith.addf %495, %496 : vector<3x32xf32>
    %c1_202 = arith.constant 1 : index
    %c0_203 = arith.constant 0 : index
    %c0_204 = arith.constant 0 : index
    %498 = vector.load %arg6[%c1_202, %c0_203, %c0_204] : memref<2x64x256xf32, #tpu.memory_space<vmem>>, vector<1x32x128xf32>
    %499 = vector.shape_cast %498 : vector<1x32x128xf32> to vector<32x128xf32>
    %c1_205 = arith.constant 1 : index
    %c0_206 = arith.constant 0 : index
    %c0_207 = arith.constant 0 : index
    %500 = vector.load %arg7[%c1_205, %c0_206, %c0_207] : memref<2x1x384xf32, #tpu.memory_space<vmem>>, vector<1x1x128xf32>
    %501 = vector.shape_cast %500 : vector<1x1x128xf32> to vector<1x128xf32>
    %cst_208 = arith.constant dense<0.000000e+00> : vector<3x128xf32>
    %502 = tpu.matmul %497, %499, %cst_208 {dimension_numbers = #tpu.dot_dimension_numbers<[1], [0], [0], [1], [0, 0, 1, 1], [], []>} : vector<3x32xf32>, vector<32x128xf32>, vector<3x128xf32> -> vector<3x128xf32>
    %503 = vector.broadcast %501 : vector<1x128xf32> to vector<3x128xf32>
    %504 = arith.addf %502, %503 : vector<3x128xf32>
    %505 = vector.extract_strided_slice %504 {offsets = [0, 0], sizes = [3, 8], strides = [1, 1]} : vector<3x128xf32> to vector<3x8xf32>
    %506 = vector.shape_cast %505 : vector<3x8xf32> to vector<1x3x8xf32>
    %507 = vector.extract_strided_slice %504 {offsets = [0, 32], sizes = [3, 8], strides = [1, 1]} : vector<3x128xf32> to vector<3x8xf32>
    %508 = vector.shape_cast %507 : vector<3x8xf32> to vector<1x3x8xf32>
    %509 = vector.extract_strided_slice %504 {offsets = [0, 64], sizes = [3, 8], strides = [1, 1]} : vector<3x128xf32> to vector<3x8xf32>
    %510 = vector.shape_cast %509 : vector<3x8xf32> to vector<1x3x8xf32>
    "tpu.trace_start"() <{level = 10 : i32, message = "bqd,bkd->bqk"}> : () -> ()
    %cst_209 = arith.constant dense<0.000000e+00> : vector<1x3x3xf32>
    %511 = tpu.matmul %506, %508, %cst_209 {dimension_numbers = #tpu.dot_dimension_numbers<[2], [2], [1], [1], [0, 0, 0, 1, 1, 1], [0], [0]>} : vector<1x3x8xf32>, vector<1x3x8xf32>, vector<1x3x3xf32> -> vector<1x3x3xf32>
    "tpu.trace_stop"() : () -> ()
    %512 = arith.addf %511, %335 : vector<1x3x3xf32>
    %cst_210 = arith.constant dense<0xFF800000> : vector<1x3xf32>
    %513 = vector.multi_reduction <maximumf>, %512, %cst_210 [2] : vector<1x3x3xf32> to vector<1x3xf32>
    %514 = vector.shape_cast %513 : vector<1x3xf32> to vector<1x3x1xf32>
    %515 = vector.broadcast %514 : vector<1x3x1xf32> to vector<1x3x3xf32>
    %516 = arith.subf %512, %515 : vector<1x3x3xf32>
    %517 = math.exp %516 : vector<1x3x3xf32>
    %cst_211 = arith.constant dense<0.000000e+00> : vector<1x3xf32>
    %518 = vector.multi_reduction <add>, %517, %cst_211 [2] : vector<1x3x3xf32> to vector<1x3xf32>
    %519 = vector.shape_cast %518 : vector<1x3xf32> to vector<1x3x1xf32>
    %520 = tpu.reciprocal %519 {approx = true} : vector<1x3x1xf32> -> vector<1x3x1xf32>
    %521 = vector.broadcast %520 : vector<1x3x1xf32> to vector<1x3x3xf32>
    %522 = arith.mulf %517, %521 : vector<1x3x3xf32>
    "tpu.trace_start"() <{level = 10 : i32, message = "bqk,bkd->bqd"}> : () -> ()
    %cst_212 = arith.constant dense<0.000000e+00> : vector<1x3x8xf32>
    %523 = tpu.matmul %522, %510, %cst_212 {dimension_numbers = #tpu.dot_dimension_numbers<[2], [1], [1], [2], [0, 0, 0, 1, 1, 2], [0], [0]>} : vector<1x3x3xf32>, vector<1x3x8xf32>, vector<1x3x8xf32> -> vector<1x3x8xf32>
    "tpu.trace_stop"() : () -> ()
    %524 = vector.extract_strided_slice %504 {offsets = [0, 8], sizes = [3, 8], strides = [1, 1]} : vector<3x128xf32> to vector<3x8xf32>
    %525 = vector.shape_cast %524 : vector<3x8xf32> to vector<1x3x8xf32>
    %526 = vector.extract_strided_slice %504 {offsets = [0, 40], sizes = [3, 8], strides = [1, 1]} : vector<3x128xf32> to vector<3x8xf32>
    %527 = vector.shape_cast %526 : vector<3x8xf32> to vector<1x3x8xf32>
    %528 = vector.extract_strided_slice %504 {offsets = [0, 72], sizes = [3, 8], strides = [1, 1]} : vector<3x128xf32> to vector<3x8xf32>
    %529 = vector.shape_cast %528 : vector<3x8xf32> to vector<1x3x8xf32>
    "tpu.trace_start"() <{level = 10 : i32, message = "bqd,bkd->bqk"}> : () -> ()
    %cst_213 = arith.constant dense<0.000000e+00> : vector<1x3x3xf32>
    %530 = tpu.matmul %525, %527, %cst_213 {dimension_numbers = #tpu.dot_dimension_numbers<[2], [2], [1], [1], [0, 0, 0, 1, 1, 1], [0], [0]>} : vector<1x3x8xf32>, vector<1x3x8xf32>, vector<1x3x3xf32> -> vector<1x3x3xf32>
    "tpu.trace_stop"() : () -> ()
    %531 = arith.addf %530, %335 : vector<1x3x3xf32>
    %cst_214 = arith.constant dense<0xFF800000> : vector<1x3xf32>
    %532 = vector.multi_reduction <maximumf>, %531, %cst_214 [2] : vector<1x3x3xf32> to vector<1x3xf32>
    %533 = vector.shape_cast %532 : vector<1x3xf32> to vector<1x3x1xf32>
    %534 = vector.broadcast %533 : vector<1x3x1xf32> to vector<1x3x3xf32>
    %535 = arith.subf %531, %534 : vector<1x3x3xf32>
    %536 = math.exp %535 : vector<1x3x3xf32>
    %cst_215 = arith.constant dense<0.000000e+00> : vector<1x3xf32>
    %537 = vector.multi_reduction <add>, %536, %cst_215 [2] : vector<1x3x3xf32> to vector<1x3xf32>
    %538 = vector.shape_cast %537 : vector<1x3xf32> to vector<1x3x1xf32>
    %539 = tpu.reciprocal %538 {approx = true} : vector<1x3x1xf32> -> vector<1x3x1xf32>
    %540 = vector.broadcast %539 : vector<1x3x1xf32> to vector<1x3x3xf32>
    %541 = arith.mulf %536, %540 : vector<1x3x3xf32>
    "tpu.trace_start"() <{level = 10 : i32, message = "bqk,bkd->bqd"}> : () -> ()
    %cst_216 = arith.constant dense<0.000000e+00> : vector<1x3x8xf32>
    %542 = tpu.matmul %541, %529, %cst_216 {dimension_numbers = #tpu.dot_dimension_numbers<[2], [1], [1], [2], [0, 0, 0, 1, 1, 2], [0], [0]>} : vector<1x3x3xf32>, vector<1x3x8xf32>, vector<1x3x8xf32> -> vector<1x3x8xf32>
    "tpu.trace_stop"() : () -> ()
    %543 = vector.extract_strided_slice %504 {offsets = [0, 16], sizes = [3, 8], strides = [1, 1]} : vector<3x128xf32> to vector<3x8xf32>
    %544 = vector.shape_cast %543 : vector<3x8xf32> to vector<1x3x8xf32>
    %545 = vector.extract_strided_slice %504 {offsets = [0, 48], sizes = [3, 8], strides = [1, 1]} : vector<3x128xf32> to vector<3x8xf32>
    %546 = vector.shape_cast %545 : vector<3x8xf32> to vector<1x3x8xf32>
    %547 = vector.extract_strided_slice %504 {offsets = [0, 80], sizes = [3, 8], strides = [1, 1]} : vector<3x128xf32> to vector<3x8xf32>
    %548 = vector.shape_cast %547 : vector<3x8xf32> to vector<1x3x8xf32>
    "tpu.trace_start"() <{level = 10 : i32, message = "bqd,bkd->bqk"}> : () -> ()
    %cst_217 = arith.constant dense<0.000000e+00> : vector<1x3x3xf32>
    %549 = tpu.matmul %544, %546, %cst_217 {dimension_numbers = #tpu.dot_dimension_numbers<[2], [2], [1], [1], [0, 0, 0, 1, 1, 1], [0], [0]>} : vector<1x3x8xf32>, vector<1x3x8xf32>, vector<1x3x3xf32> -> vector<1x3x3xf32>
    "tpu.trace_stop"() : () -> ()
    %550 = arith.addf %549, %335 : vector<1x3x3xf32>
    %cst_218 = arith.constant dense<0xFF800000> : vector<1x3xf32>
    %551 = vector.multi_reduction <maximumf>, %550, %cst_218 [2] : vector<1x3x3xf32> to vector<1x3xf32>
    %552 = vector.shape_cast %551 : vector<1x3xf32> to vector<1x3x1xf32>
    %553 = vector.broadcast %552 : vector<1x3x1xf32> to vector<1x3x3xf32>
    %554 = arith.subf %550, %553 : vector<1x3x3xf32>
    %555 = math.exp %554 : vector<1x3x3xf32>
    %cst_219 = arith.constant dense<0.000000e+00> : vector<1x3xf32>
    %556 = vector.multi_reduction <add>, %555, %cst_219 [2] : vector<1x3x3xf32> to vector<1x3xf32>
    %557 = vector.shape_cast %556 : vector<1x3xf32> to vector<1x3x1xf32>
    %558 = tpu.reciprocal %557 {approx = true} : vector<1x3x1xf32> -> vector<1x3x1xf32>
    %559 = vector.broadcast %558 : vector<1x3x1xf32> to vector<1x3x3xf32>
    %560 = arith.mulf %555, %559 : vector<1x3x3xf32>
    "tpu.trace_start"() <{level = 10 : i32, message = "bqk,bkd->bqd"}> : () -> ()
    %cst_220 = arith.constant dense<0.000000e+00> : vector<1x3x8xf32>
    %561 = tpu.matmul %560, %548, %cst_220 {dimension_numbers = #tpu.dot_dimension_numbers<[2], [1], [1], [2], [0, 0, 0, 1, 1, 2], [0], [0]>} : vector<1x3x3xf32>, vector<1x3x8xf32>, vector<1x3x8xf32> -> vector<1x3x8xf32>
    "tpu.trace_stop"() : () -> ()
    %562 = vector.extract_strided_slice %504 {offsets = [0, 24], sizes = [3, 8], strides = [1, 1]} : vector<3x128xf32> to vector<3x8xf32>
    %563 = vector.shape_cast %562 : vector<3x8xf32> to vector<1x3x8xf32>
    %564 = vector.extract_strided_slice %504 {offsets = [0, 56], sizes = [3, 8], strides = [1, 1]} : vector<3x128xf32> to vector<3x8xf32>
    %565 = vector.shape_cast %564 : vector<3x8xf32> to vector<1x3x8xf32>
    %566 = vector.extract_strided_slice %504 {offsets = [0, 88], sizes = [3, 8], strides = [1, 1]} : vector<3x128xf32> to vector<3x8xf32>
    %567 = vector.shape_cast %566 : vector<3x8xf32> to vector<1x3x8xf32>
    "tpu.trace_start"() <{level = 10 : i32, message = "bqd,bkd->bqk"}> : () -> ()
    %cst_221 = arith.constant dense<0.000000e+00> : vector<1x3x3xf32>
    %568 = tpu.matmul %563, %565, %cst_221 {dimension_numbers = #tpu.dot_dimension_numbers<[2], [2], [1], [1], [0, 0, 0, 1, 1, 1], [0], [0]>} : vector<1x3x8xf32>, vector<1x3x8xf32>, vector<1x3x3xf32> -> vector<1x3x3xf32>
    "tpu.trace_stop"() : () -> ()
    %569 = arith.addf %568, %335 : vector<1x3x3xf32>
    %cst_222 = arith.constant dense<0xFF800000> : vector<1x3xf32>
    %570 = vector.multi_reduction <maximumf>, %569, %cst_222 [2] : vector<1x3x3xf32> to vector<1x3xf32>
    %571 = vector.shape_cast %570 : vector<1x3xf32> to vector<1x3x1xf32>
    %572 = vector.broadcast %571 : vector<1x3x1xf32> to vector<1x3x3xf32>
    %573 = arith.subf %569, %572 : vector<1x3x3xf32>
    %574 = math.exp %573 : vector<1x3x3xf32>
    %cst_223 = arith.constant dense<0.000000e+00> : vector<1x3xf32>
    %575 = vector.multi_reduction <add>, %574, %cst_223 [2] : vector<1x3x3xf32> to vector<1x3xf32>
    %576 = vector.shape_cast %575 : vector<1x3xf32> to vector<1x3x1xf32>
    %577 = tpu.reciprocal %576 {approx = true} : vector<1x3x1xf32> -> vector<1x3x1xf32>
    %578 = vector.broadcast %577 : vector<1x3x1xf32> to vector<1x3x3xf32>
    %579 = arith.mulf %574, %578 : vector<1x3x3xf32>
    "tpu.trace_start"() <{level = 10 : i32, message = "bqk,bkd->bqd"}> : () -> ()
    %cst_224 = arith.constant dense<0.000000e+00> : vector<1x3x8xf32>
    %580 = tpu.matmul %579, %567, %cst_224 {dimension_numbers = #tpu.dot_dimension_numbers<[2], [1], [1], [2], [0, 0, 0, 1, 1, 2], [0], [0]>} : vector<1x3x3xf32>, vector<1x3x8xf32>, vector<1x3x8xf32> -> vector<1x3x8xf32>
    "tpu.trace_stop"() : () -> ()
    %581 = tpu.concatenate %523, %542, %561, %580 in 2 : vector<1x3x8xf32>, vector<1x3x8xf32>, vector<1x3x8xf32>, vector<1x3x8xf32> -> vector<1x3x32xf32>
    %582 = vector.shape_cast %581 : vector<1x3x32xf32> to vector<3x32xf32>
    %c1_225 = arith.constant 1 : index
    %c0_226 = arith.constant 0 : index
    %c128_227 = arith.constant 128 : index
    %583 = vector.load %arg6[%c1_225, %c0_226, %c128_227] : memref<2x64x256xf32, #tpu.memory_space<vmem>>, vector<1x32x32xf32>
    %584 = vector.shape_cast %583 : vector<1x32x32xf32> to vector<32x32xf32>
    %c1_228 = arith.constant 1 : index
    %c0_229 = arith.constant 0 : index
    %c128_230 = arith.constant 128 : index
    %585 = vector.load %arg7[%c1_228, %c0_229, %c128_230] : memref<2x1x384xf32, #tpu.memory_space<vmem>>, vector<1x1x32xf32>
    %586 = vector.shape_cast %585 : vector<1x1x32xf32> to vector<1x32xf32>
    %cst_231 = arith.constant dense<0.000000e+00> : vector<3x32xf32>
    %587 = tpu.matmul %582, %584, %cst_231 {dimension_numbers = #tpu.dot_dimension_numbers<[1], [0], [0], [1], [0, 0, 1, 1], [], []>} : vector<3x32xf32>, vector<32x32xf32>, vector<3x32xf32> -> vector<3x32xf32>
    %588 = vector.broadcast %586 : vector<1x32xf32> to vector<3x32xf32>
    %589 = arith.addf %587, %588 : vector<3x32xf32>
    %c1_232 = arith.constant 1 : index
    %c0_233 = arith.constant 0 : index
    %c160_234 = arith.constant 160 : index
    %590 = vector.load %arg7[%c1_232, %c0_233, %c160_234] : memref<2x1x384xf32, #tpu.memory_space<vmem>>, vector<1x1x32xf32>
    %591 = vector.shape_cast %590 : vector<1x1x32xf32> to vector<1x32xf32>
    %c1_235 = arith.constant 1 : index
    %c0_236 = arith.constant 0 : index
    %c192_237 = arith.constant 192 : index
    %592 = vector.load %arg7[%c1_235, %c0_236, %c192_237] : memref<2x1x384xf32, #tpu.memory_space<vmem>>, vector<1x1x32xf32>
    %593 = vector.shape_cast %592 : vector<1x1x32xf32> to vector<1x32xf32>
    %594 = arith.addf %497, %589 : vector<3x32xf32>
    %cst_238 = arith.constant dense<0.000000e+00> : vector<3xf32>
    %595 = vector.multi_reduction <add>, %594, %cst_238 [1] : vector<3x32xf32> to vector<3xf32>
    %596 = vector.shape_cast %595 : vector<3xf32> to vector<3x1xf32>
    %cst_239 = arith.constant 3.200000e+01 : f32
    %597 = vector.broadcast %cst_239 : f32 to vector<3x1xf32>
    %598 = arith.divf %596, %597 : vector<3x1xf32>
    %599 = vector.broadcast %598 : vector<3x1xf32> to vector<3x32xf32>
    %600 = arith.subf %594, %599 : vector<3x32xf32>
    %601 = arith.mulf %600, %600 : vector<3x32xf32>
    %cst_240 = arith.constant dense<0.000000e+00> : vector<3xf32>
    %602 = vector.multi_reduction <add>, %601, %cst_240 [1] : vector<3x32xf32> to vector<3xf32>
    %603 = vector.shape_cast %602 : vector<3xf32> to vector<3x1xf32>
    %cst_241 = arith.constant 3.200000e+01 : f32
    %604 = vector.broadcast %cst_241 : f32 to vector<3x1xf32>
    %605 = arith.divf %603, %604 : vector<3x1xf32>
    %606 = vector.broadcast %598 : vector<3x1xf32> to vector<3x32xf32>
    %607 = arith.subf %594, %606 : vector<3x32xf32>
    %cst_242 = arith.constant 9.99999974E-6 : f32
    %608 = vector.broadcast %cst_242 : f32 to vector<3x1xf32>
    %609 = arith.addf %605, %608 : vector<3x1xf32>
    %610 = math.rsqrt %609 : vector<3x1xf32>
    %611 = vector.broadcast %610 : vector<3x1xf32> to vector<3x32xf32>
    %612 = arith.mulf %607, %611 : vector<3x32xf32>
    %613 = vector.broadcast %591 : vector<1x32xf32> to vector<3x32xf32>
    %614 = arith.mulf %612, %613 : vector<3x32xf32>
    %615 = vector.broadcast %593 : vector<1x32xf32> to vector<3x32xf32>
    %616 = arith.addf %614, %615 : vector<3x32xf32>
    %c1_243 = arith.constant 1 : index
    %c0_244 = arith.constant 0 : index
    %c160_245 = arith.constant 160 : index
    %617 = vector.load %arg6[%c1_243, %c0_244, %c160_245] : memref<2x64x256xf32, #tpu.memory_space<vmem>>, vector<1x32x64xf32>
    %618 = vector.shape_cast %617 : vector<1x32x64xf32> to vector<32x64xf32>
    %c1_246 = arith.constant 1 : index
    %c0_247 = arith.constant 0 : index
    %c224_248 = arith.constant 224 : index
    %619 = vector.load %arg7[%c1_246, %c0_247, %c224_248] : memref<2x1x384xf32, #tpu.memory_space<vmem>>, vector<1x1x64xf32>
    %620 = vector.shape_cast %619 : vector<1x1x64xf32> to vector<1x64xf32>
    %c1_249 = arith.constant 1 : index
    %c0_250 = arith.constant 0 : index
    %c224_251 = arith.constant 224 : index
    %621 = vector.load %arg6[%c1_249, %c0_250, %c224_251] : memref<2x64x256xf32, #tpu.memory_space<vmem>>, vector<1x64x32xf32>
    %622 = vector.shape_cast %621 : vector<1x64x32xf32> to vector<64x32xf32>
    %c1_252 = arith.constant 1 : index
    %c0_253 = arith.constant 0 : index
    %c288_254 = arith.constant 288 : index
    %623 = vector.load %arg7[%c1_252, %c0_253, %c288_254] : memref<2x1x384xf32, #tpu.memory_space<vmem>>, vector<1x1x32xf32>
    %624 = vector.shape_cast %623 : vector<1x1x32xf32> to vector<1x32xf32>
    %cst_255 = arith.constant dense<0.000000e+00> : vector<3x64xf32>
    %625 = tpu.matmul %616, %618, %cst_255 {dimension_numbers = #tpu.dot_dimension_numbers<[1], [0], [0], [1], [0, 0, 1, 1], [], []>} : vector<3x32xf32>, vector<32x64xf32>, vector<3x64xf32> -> vector<3x64xf32>
    %626 = vector.broadcast %620 : vector<1x64xf32> to vector<3x64xf32>
    %627 = arith.addf %625, %626 : vector<3x64xf32>
    %cst_256 = arith.constant 0.000000e+00 : f32
    %628 = vector.broadcast %cst_256 : f32 to vector<3x64xf32>
    %629 = arith.maximumf %627, %628 : vector<3x64xf32>
    %cst_257 = arith.constant dense<0.000000e+00> : vector<3x32xf32>
    %630 = tpu.matmul %629, %622, %cst_257 {dimension_numbers = #tpu.dot_dimension_numbers<[1], [0], [0], [1], [0, 0, 1, 1], [], []>} : vector<3x64xf32>, vector<64x32xf32>, vector<3x32xf32> -> vector<3x32xf32>
    %631 = vector.broadcast %624 : vector<1x32xf32> to vector<3x32xf32>
    %632 = arith.addf %630, %631 : vector<3x32xf32>
    %c1_258 = arith.constant 1 : index
    %c0_259 = arith.constant 0 : index
    %c320_260 = arith.constant 320 : index
    %633 = vector.load %arg7[%c1_258, %c0_259, %c320_260] : memref<2x1x384xf32, #tpu.memory_space<vmem>>, vector<1x1x32xf32>
    %634 = vector.shape_cast %633 : vector<1x1x32xf32> to vector<1x32xf32>
    %c1_261 = arith.constant 1 : index
    %c0_262 = arith.constant 0 : index
    %c352_263 = arith.constant 352 : index
    %635 = vector.load %arg7[%c1_261, %c0_262, %c352_263] : memref<2x1x384xf32, #tpu.memory_space<vmem>>, vector<1x1x32xf32>
    %636 = vector.shape_cast %635 : vector<1x1x32xf32> to vector<1x32xf32>
    %637 = arith.addf %616, %632 : vector<3x32xf32>
    %cst_264 = arith.constant dense<0.000000e+00> : vector<3xf32>
    %638 = vector.multi_reduction <add>, %637, %cst_264 [1] : vector<3x32xf32> to vector<3xf32>
    %639 = vector.shape_cast %638 : vector<3xf32> to vector<3x1xf32>
    %cst_265 = arith.constant 3.200000e+01 : f32
    %640 = vector.broadcast %cst_265 : f32 to vector<3x1xf32>
    %641 = arith.divf %639, %640 : vector<3x1xf32>
    %642 = vector.broadcast %641 : vector<3x1xf32> to vector<3x32xf32>
    %643 = arith.subf %637, %642 : vector<3x32xf32>
    %644 = arith.mulf %643, %643 : vector<3x32xf32>
    %cst_266 = arith.constant dense<0.000000e+00> : vector<3xf32>
    %645 = vector.multi_reduction <add>, %644, %cst_266 [1] : vector<3x32xf32> to vector<3xf32>
    %646 = vector.shape_cast %645 : vector<3xf32> to vector<3x1xf32>
    %cst_267 = arith.constant 3.200000e+01 : f32
    %647 = vector.broadcast %cst_267 : f32 to vector<3x1xf32>
    %648 = arith.divf %646, %647 : vector<3x1xf32>
    %649 = vector.broadcast %641 : vector<3x1xf32> to vector<3x32xf32>
    %650 = arith.subf %637, %649 : vector<3x32xf32>
    %cst_268 = arith.constant 9.99999974E-6 : f32
    %651 = vector.broadcast %cst_268 : f32 to vector<3x1xf32>
    %652 = arith.addf %648, %651 : vector<3x1xf32>
    %653 = math.rsqrt %652 : vector<3x1xf32>
    %654 = vector.broadcast %653 : vector<3x1xf32> to vector<3x32xf32>
    %655 = arith.mulf %650, %654 : vector<3x32xf32>
    %656 = vector.broadcast %634 : vector<1x32xf32> to vector<3x32xf32>
    %657 = arith.mulf %655, %656 : vector<3x32xf32>
    %658 = vector.broadcast %636 : vector<1x32xf32> to vector<3x32xf32>
    %659 = arith.addf %657, %658 : vector<3x32xf32>
    %660 = vector.extract_strided_slice %659 {offsets = [0, 0], sizes = [1, 32], strides = [1, 1]} : vector<3x32xf32> to vector<1x32xf32>
    %c0_269 = arith.constant 0 : index
    %c0_270 = arith.constant 0 : index
    %661 = vector.load %arg8[%c0_269, %c0_270] : memref<64x224xf32, #tpu.memory_space<vmem>>, vector<32x64xf32>
    %c0_271 = arith.constant 0 : index
    %c0_272 = arith.constant 0 : index
    %662 = vector.load %arg9[%c0_271, %c0_272] : memref<1x224xf32, #tpu.memory_space<vmem>>, vector<1x64xf32>
    %c0_273 = arith.constant 0 : index
    %c64 = arith.constant 64 : index
    %663 = vector.load %arg8[%c0_273, %c64] : memref<64x224xf32, #tpu.memory_space<vmem>>, vector<64x32xf32>
    %c0_274 = arith.constant 0 : index
    %c64_275 = arith.constant 64 : index
    %664 = vector.load %arg9[%c0_274, %c64_275] : memref<1x224xf32, #tpu.memory_space<vmem>>, vector<1x32xf32>
    %c0_276 = arith.constant 0 : index
    %c96 = arith.constant 96 : index
    %665 = vector.load %arg8[%c0_276, %c96] : memref<64x224xf32, #tpu.memory_space<vmem>>, vector<32x128xf32>
    %c0_277 = arith.constant 0 : index
    %c96_278 = arith.constant 96 : index
    %666 = vector.load %arg9[%c0_277, %c96_278] : memref<1x224xf32, #tpu.memory_space<vmem>>, vector<1x128xf32>
    %cst_279 = arith.constant dense<0.000000e+00> : vector<1x64xf32>
    %667 = tpu.matmul %660, %661, %cst_279 {dimension_numbers = #tpu.dot_dimension_numbers<[1], [0], [0], [1], [0, 0, 1, 1], [], []>} : vector<1x32xf32>, vector<32x64xf32>, vector<1x64xf32> -> vector<1x64xf32>
    %668 = arith.addf %667, %662 : vector<1x64xf32>
    %cst_280 = arith.constant 5.000000e-01 : f32
    %669 = vector.broadcast %cst_280 : f32 to vector<1x64xf32>
    %670 = arith.mulf %669, %668 : vector<1x64xf32>
    %cst_281 = arith.constant 4.471500e-02 : f32
    %671 = vector.broadcast %cst_281 : f32 to vector<1x64xf32>
    %672 = arith.mulf %671, %668 : vector<1x64xf32>
    %673 = arith.mulf %672, %668 : vector<1x64xf32>
    %674 = arith.mulf %673, %668 : vector<1x64xf32>
    %675 = arith.addf %668, %674 : vector<1x64xf32>
    %cst_282 = arith.constant 0.797884583 : f32
    %676 = vector.broadcast %cst_282 : f32 to vector<1x64xf32>
    %677 = arith.mulf %676, %675 : vector<1x64xf32>
    %678 = math.tanh %677 : vector<1x64xf32>
    %cst_283 = arith.constant 1.000000e+00 : f32
    %679 = vector.broadcast %cst_283 : f32 to vector<1x64xf32>
    %680 = arith.addf %679, %678 : vector<1x64xf32>
    %681 = arith.mulf %670, %680 : vector<1x64xf32>
    %cst_284 = arith.constant dense<0.000000e+00> : vector<1x32xf32>
    %682 = tpu.matmul %681, %663, %cst_284 {dimension_numbers = #tpu.dot_dimension_numbers<[1], [0], [0], [1], [0, 0, 1, 1], [], []>} : vector<1x64xf32>, vector<64x32xf32>, vector<1x32xf32> -> vector<1x32xf32>
    %683 = arith.addf %682, %664 : vector<1x32xf32>
    %cst_285 = arith.constant 5.000000e-01 : f32
    %684 = vector.broadcast %cst_285 : f32 to vector<1x32xf32>
    %685 = arith.mulf %684, %683 : vector<1x32xf32>
    %cst_286 = arith.constant 4.471500e-02 : f32
    %686 = vector.broadcast %cst_286 : f32 to vector<1x32xf32>
    %687 = arith.mulf %686, %683 : vector<1x32xf32>
    %688 = arith.mulf %687, %683 : vector<1x32xf32>
    %689 = arith.mulf %688, %683 : vector<1x32xf32>
    %690 = arith.addf %683, %689 : vector<1x32xf32>
    %cst_287 = arith.constant 0.797884583 : f32
    %691 = vector.broadcast %cst_287 : f32 to vector<1x32xf32>
    %692 = arith.mulf %691, %690 : vector<1x32xf32>
    %693 = math.tanh %692 : vector<1x32xf32>
    %cst_288 = arith.constant 1.000000e+00 : f32
    %694 = vector.broadcast %cst_288 : f32 to vector<1x32xf32>
    %695 = arith.addf %694, %693 : vector<1x32xf32>
    %696 = arith.mulf %685, %695 : vector<1x32xf32>
    %cst_289 = arith.constant dense<0.000000e+00> : vector<1x128xf32>
    %697 = tpu.matmul %696, %665, %cst_289 {dimension_numbers = #tpu.dot_dimension_numbers<[1], [0], [0], [1], [0, 0, 1, 1], [], []>} : vector<1x32xf32>, vector<32x128xf32>, vector<1x128xf32> -> vector<1x128xf32>
    %698 = arith.addf %697, %666 : vector<1x128xf32>
    %c0_290 = arith.constant 0 : index
    %c0_291 = arith.constant 0 : index
    %c0_292 = arith.constant 0 : index
    %699 = vector.load %arg10[%c0_290, %c0_291, %c0_292] : memref<1x1x128xf32, #tpu.memory_space<vmem>>, vector<1x1x128xf32>
    %700 = vector.shape_cast %699 : vector<1x1x128xf32> to vector<1x128xf32>
    %701 = vector.shape_cast %698 : vector<1x128xf32> to vector<1x1x128xf32>
    tpu.vector_store %arg10[%c0_290, %c0_291, %c0_292], %701 {strides = array<i32>} : memref<1x1x128xf32, #tpu.memory_space<vmem>>, vector<1x1x128xf32>,
    return
  }
  func.func @transform_0(%arg0: i32) -> (i32, i32, i32) {
    %c0_i32 = arith.constant 0 : i32
    %c0_i32_0 = arith.constant 0 : i32
    %c0_i32_1 = arith.constant 0 : i32
    return %arg0, %c0_i32, %c0_i32_0 : i32, i32, i32
  }
  func.func @transform_1(%arg0: i32) -> (i32, i32, i32) {
    %c0_i32 = arith.constant 0 : i32
    %c0_i32_0 = arith.constant 0 : i32
    %c0_i32_1 = arith.constant 0 : i32
    return %arg0, %c0_i32, %c0_i32_0 : i32, i32, i32
  }
  func.func @transform_2(%arg0: i32) -> (i32, i32) {
    %c0_i32 = arith.constant 0 : i32
    %c0_i32_0 = arith.constant 0 : i32
    %c0_i32_1 = arith.constant 0 : i32
    return %c0_i32, %c0_i32_0 : i32, i32
  }
  func.func @transform_3(%arg0: i32) -> (i32, i32, i32) {
    %c0_i32 = arith.constant 0 : i32
    %c0_i32_0 = arith.constant 0 : i32
    %c0_i32_1 = arith.constant 0 : i32
    %c0_i32_2 = arith.constant 0 : i32
    return %c0_i32, %c0_i32_0, %c0_i32_1 : i32, i32, i32
  }
  func.func @transform_4(%arg0: i32) -> (i32, i32, i32) {
    %c0_i32 = arith.constant 0 : i32
    %c0_i32_0 = arith.constant 0 : i32
    %c0_i32_1 = arith.constant 0 : i32
    %c0_i32_2 = arith.constant 0 : i32
    return %c0_i32, %c0_i32_0, %c0_i32_1 : i32, i32, i32
  }
  func.func @transform_5(%arg0: i32) -> (i32, i32, i32) {
    %c0_i32 = arith.constant 0 : i32
    %c0_i32_0 = arith.constant 0 : i32
    %c0_i32_1 = arith.constant 0 : i32
    %c0_i32_2 = arith.constant 0 : i32
    return %c0_i32, %c0_i32_0, %c0_i32_1 : i32, i32, i32
  }
  func.func @transform_6(%arg0: i32) -> (i32, i32, i32) {
    %c0_i32 = arith.constant 0 : i32
    %c0_i32_0 = arith.constant 0 : i32
    %c0_i32_1 = arith.constant 0 : i32
    %c0_i32_2 = arith.constant 0 : i32
    return %c0_i32, %c0_i32_0, %c0_i32_1 : i32, i32, i32
  }
  func.func @transform_7(%arg0: i32) -> (i32, i32) {
    %c0_i32 = arith.constant 0 : i32
    %c0_i32_0 = arith.constant 0 : i32
    %c0_i32_1 = arith.constant 0 : i32
    return %c0_i32, %c0_i32_0 : i32, i32
  }
  func.func @transform_8(%arg0: i32) -> (i32, i32) {
    %c0_i32 = arith.constant 0 : i32
    %c0_i32_0 = arith.constant 0 : i32
    %c0_i32_1 = arith.constant 0 : i32
    return %c0_i32, %c0_i32_0 : i32, i32
  }
  func.func @transform_9(%arg0: i32) -> (i32, i32, i32) {
    %c0_i32 = arith.constant 0 : i32
    %c0_i32_0 = arith.constant 0 : i32
    %c0_i32_1 = arith.constant 0 : i32
    return %arg0, %c0_i32, %c0_i32_0 : i32, i32, i32
  }
}

</mosaic_0001>

<llo_original>
// kernel: tpu_custom_call.1
$region0: #{tpu_custom_call.1}
  #allocation0 [shape = 'u32[]', space=smem, size = 0x4, offset = 0x4, fixed_abs, tag = 'smem constant byte address 0x4 - core index']
  #allocation1 [shape = 'u32[72,128]{1,0:T(1,128)}', space=vmem, size = 0x9000, scoped, tag = 'internal scratch']
  %s0 = inlined_call_operand.vmem [shape: f32[2,24,18], index: 0, kind: input, shape index: {}]
  %s1 = inlined_call_operand.vmem [shape: f32[2,1,3], index: 1, kind: input, shape index: {}]
  %s2 = inlined_call_operand.vmem [shape: f32[40,32], index: 2, kind: input, shape index: {}]
  %s3 = inlined_call_operand.hbm [shape: f32[2,64,256], index: 3, kind: input, shape index: {}]
  %s4 = inlined_call_operand.vmem [shape: f32[2,1,384], index: 4, kind: input, shape index: {}]
  %s5 = inlined_call_operand.hbm [shape: f32[2,64,256], index: 5, kind: input, shape index: {}]
  %s6 = inlined_call_operand.vmem [shape: f32[2,1,384], index: 6, kind: input, shape index: {}]
  %s7 = inlined_call_operand.vmem [shape: f32[64,224], index: 7, kind: input, shape index: {}]
  %s8 = inlined_call_operand.vmem [shape: f32[1,224], index: 8, kind: input, shape index: {}]
  %s9 = inlined_call_operand.hbm [shape: f32[2,1,128], index: 9, kind: output, shape index: {}]
  %s10 = sld [smem:[#allocation0]]
  $region77: #{tpu_custom_call.1} parent=0
    _
  %s12 = ssub.s32 1, %s10
  %s13 = scalar_select 0, %s12, %s10
  $region1: #{tpu_custom_call.1} parent=0
    #allocation2 [shape = 'u8[131072]{0}', space=vmem, size = 0x20000, scoped, tag = 'input window, operand 3, single buffered']
    #allocation3 [shape = 's32[2]{0}', space=sflag, size = 0x8, scoped, tag = 'scoped memory for tpu_custom_call.1']
    #allocation4 [shape = 's32[2]{0}', space=sflag, size = 0x8, scoped, tag = 'scoped memory for tpu_custom_call.1']
    #allocation5 [shape = 'u8[131072]{0}', space=vmem, size = 0x20000, scoped, tag = 'input window, operand 5, single buffered']
    #allocation6 [shape = 's32[1]{0}', space=sflag, size = 0x4, scoped, tag = 'scoped memory for tpu_custom_call.1']
    #allocation7 [shape = 'u8[1024]{0}', space=vmem, size = 0x400, scoped, tag = 'output window, operand 0']
    %14 = vsyncpa [#allocation3], 0
    %15 = vsyncpa [#allocation6], 0
    %16 = vsyncpa [#allocation4], 0
    %s17 = scalar_lea.sflag [#allocation4], 1
    %18 = vsyncpa %s17, 0
    loop: start=0, step=1, limit=4
    $region2: #{tpu_custom_call.1} parent=1 // loop_pre_header
      _
    $region3: #{tpu_custom_call.1} parent=1 // loop_header
      %s20 = sphi 0, %s24
      %p21 = scmp.ge.s32.totalorder %s20, 4
      %s30 = sphi 0, %s32
      %s33 = sphi 0, %s30
      %s34 = sphi 0, %s33
      %s50 = sphi 0, %s34
      %s56 = sphi 0, %s58
      %s59 = sphi 0, %s56
      %s60 = sphi 0, %s59
      %s76 = sphi 0, %s60
      %s80 = sphi 0, %s80
      %s82 = sphi 0, %s80
      %s83 = sphi 0, %s82
      %s97 = sphi 0, %s83
      %s101 = sphi 0, %s101
      %s103 = sphi 0, %s101
      %s104 = sphi 0, %s103
      %s118 = sphi 0, %s104
      %s122 = sphi 0, %s122
      %s124 = sphi 0, %s122
      %s125 = sphi 0, %s124
      %s139 = sphi 0, %s125
      %s143 = sphi 0, %s143
      %s145 = sphi 0, %s143
      %s146 = sphi 0, %s145
      %s160 = sphi 0, %s146
      %s164 = sphi 0, %s164
      %s166 = sphi 0, %s164
      %s167 = sphi 0, %s166
      %s181 = sphi 0, %s167
      %s185 = sphi 0, %s185
      %s187 = sphi 0, %s185
      %s188 = sphi 0, %s187
      %s202 = sphi 0, %s188
      %s206 = sphi 0, %s206
      %s208 = sphi 0, %s206
      %s209 = sphi 0, %s208
      %s223 = sphi 0, %s209
      %s229 = sphi 0, %s231
      %s232 = sphi 0, %s229
      %s233 = sphi 0, %s232
      %s249 = sphi 0, %s233
    $region4: #{tpu_custom_call.1} parent=1 // loop_header_branch
      %23 = sbr.rel (%p21) target = $region8
    $region5: #{tpu_custom_call.1} parent=1 // loop_body
      %s25 = ssub.s32 %s20, 1
      %s26 = ssub.s32 %s20, 2
      %s27 = sadd.s32 %s20, 1
      %s28 = ssub.s32 %s20, %s27
      %p29 = scmp.eq.s32.totalorder %s28, 0
      %s31 = sadd.s32 %s30, 1
      %s32 = scalar_select %p29, %s30, %s31
      %p35 = pneg %p29
      %p36 = scmp.eq.s32.totalorder %s20, 1
      %p37 = por %p35, %p36
      %p38 = scmp.ne.s32.totalorder %s30, %s33
      %p39 = scmp.eq.s32.totalorder %s20, 0
      %p40 = por %p38, %p39
      %p41 = scmp.ne.s32.totalorder %s30, %s33
      %p42 = scmp.eq.s32.totalorder %s25, 1
      %p43 = por %p41, %p42
      %p44 = scmp.ne.s32.totalorder %s33, %s34
      %p45 = scmp.eq.s32.totalorder %s25, 0
      %p46 = por %p44, %p45
      %p47 = scmp.ne.s32.totalorder %s33, %s34
      %p48 = scmp.eq.s32.totalorder %s26, 1
      %p49 = por %p47, %p48
      %p51 = scmp.ne.s32.totalorder %s34, %s50
      %p52 = scmp.eq.s32.totalorder %s26, 0
      %p53 = por %p51, %p52
      %s54 = ssub.s32 %s20, %s27
      %p55 = scmp.eq.s32.totalorder %s54, 0
      %s57 = sadd.s32 %s56, 1
      %s58 = scalar_select %p55, %s56, %s57
      %p61 = pneg %p55
      %p62 = scmp.eq.s32.totalorder %s20, 1
      %p63 = por %p61, %p62
      %p64 = scmp.ne.s32.totalorder %s56, %s59
      %p65 = scmp.eq.s32.totalorder %s20, 0
      %p66 = por %p64, %p65
      %p67 = scmp.ne.s32.totalorder %s56, %s59
      %p68 = scmp.eq.s32.totalorder %s25, 1
      %p69 = por %p67, %p68
      %p70 = scmp.ne.s32.totalorder %s59, %s60
      %p71 = scmp.eq.s32.totalorder %s25, 0
      %p72 = por %p70, %p71
      %p73 = scmp.ne.s32.totalorder %s59, %s60
      %p74 = scmp.eq.s32.totalorder %s26, 1
      %p75 = por %p73, %p74
      %p77 = scmp.ne.s32.totalorder %s60, %s76
      %p78 = scmp.eq.s32.totalorder %s26, 0
      %p79 = por %p77, %p78
      %s81 = sadd.s32 %s80, 1
      %p84 = scmp.eq.s32.totalorder %s20, 1
      %p85 = scmp.ne.s32.totalorder %s80, %s82
      %p86 = scmp.eq.s32.totalorder %s20, 0
      %p87 = por %p85, %p86
      %p88 = scmp.ne.s32.totalorder %s80, %s82
      %p89 = scmp.eq.s32.totalorder %s25, 1
      %p90 = por %p88, %p89
      %p91 = scmp.ne.s32.totalorder %s82, %s83
      %p92 = scmp.eq.s32.totalorder %s25, 0
      %p93 = por %p91, %p92
      %p94 = scmp.ne.s32.totalorder %s82, %s83
      %p95 = scmp.eq.s32.totalorder %s26, 1
      %p96 = por %p94, %p95
      %p98 = scmp.ne.s32.totalorder %s83, %s97
      %p99 = scmp.eq.s32.totalorder %s26, 0
      %p100 = por %p98, %p99
      %s102 = sadd.s32 %s101, 1
      %p105 = scmp.eq.s32.totalorder %s20, 1
      %p106 = scmp.ne.s32.totalorder %s101, %s103
      %p107 = scmp.eq.s32.totalorder %s20, 0
      %p108 = por %p106, %p107
      %p109 = scmp.ne.s32.totalorder %s101, %s103
      %p110 = scmp.eq.s32.totalorder %s25, 1
      %p111 = por %p109, %p110
      %p112 = scmp.ne.s32.totalorder %s103, %s104
      %p113 = scmp.eq.s32.totalorder %s25, 0
      %p114 = por %p112, %p113
      %p115 = scmp.ne.s32.totalorder %s103, %s104
      %p116 = scmp.eq.s32.totalorder %s26, 1
      %p117 = por %p115, %p116
      %p119 = scmp.ne.s32.totalorder %s104, %s118
      %p120 = scmp.eq.s32.totalorder %s26, 0
      %p121 = por %p119, %p120
      %s123 = sadd.s32 %s122, 1
      %p126 = scmp.eq.s32.totalorder %s20, 1
      %p127 = scmp.ne.s32.totalorder %s122, %s124
      %p128 = scmp.eq.s32.totalorder %s20, 0
      %p129 = por %p127, %p128
      %p130 = scmp.ne.s32.totalorder %s122, %s124
      %p131 = scmp.eq.s32.totalorder %s25, 1
      %p132 = por %p130, %p131
      %p133 = scmp.ne.s32.totalorder %s124, %s125
      %p134 = scmp.eq.s32.totalorder %s25, 0
      %p135 = por %p133, %p134
      %p136 = scmp.ne.s32.totalorder %s124, %s125
      %p137 = scmp.eq.s32.totalorder %s26, 1
      %p138 = por %p136, %p137
      %p140 = scmp.ne.s32.totalorder %s125, %s139
      %p141 = scmp.eq.s32.totalorder %s26, 0
      %p142 = por %p140, %p141
      %s144 = sadd.s32 %s143, 1
      %p147 = scmp.eq.s32.totalorder %s20, 1
      %p148 = scmp.ne.s32.totalorder %s143, %s145
      %p149 = scmp.eq.s32.totalorder %s20, 0
      %p150 = por %p148, %p149
      %p151 = scmp.ne.s32.totalorder %s143, %s145
      %p152 = scmp.eq.s32.totalorder %s25, 1
      %p153 = por %p151, %p152
      %p154 = scmp.ne.s32.totalorder %s145, %s146
      %p155 = scmp.eq.s32.totalorder %s25, 0
      %p156 = por %p154, %p155
      %p157 = scmp.ne.s32.totalorder %s145, %s146
      %p158 = scmp.eq.s32.totalorder %s26, 1
      %p159 = por %p157, %p158
      %p161 = scmp.ne.s32.totalorder %s146, %s160
      %p162 = scmp.eq.s32.totalorder %s26, 0
      %p163 = por %p161, %p162
      %s165 = sadd.s32 %s164, 1
      %p168 = scmp.eq.s32.totalorder %s20, 1
      %p169 = scmp.ne.s32.totalorder %s164, %s166
      %p170 = scmp.eq.s32.totalorder %s20, 0
      %p171 = por %p169, %p170
      %p172 = scmp.ne.s32.totalorder %s164, %s166
      %p173 = scmp.eq.s32.totalorder %s25, 1
      %p174 = por %p172, %p173
      %p175 = scmp.ne.s32.totalorder %s166, %s167
      %p176 = scmp.eq.s32.totalorder %s25, 0
      %p177 = por %p175, %p176
      %p178 = scmp.ne.s32.totalorder %s166, %s167
      %p179 = scmp.eq.s32.totalorder %s26, 1
      %p180 = por %p178, %p179
      %p182 = scmp.ne.s32.totalorder %s167, %s181
      %p183 = scmp.eq.s32.totalorder %s26, 0
      %p184 = por %p182, %p183
      %s186 = sadd.s32 %s185, 1
      %p189 = scmp.eq.s32.totalorder %s20, 1
      %p190 = scmp.ne.s32.totalorder %s185, %s187
      %p191 = scmp.eq.s32.totalorder %s20, 0
      %p192 = por %p190, %p191
      %p193 = scmp.ne.s32.totalorder %s185, %s187
      %p194 = scmp.eq.s32.totalorder %s25, 1
      %p195 = por %p193, %p194
      %p196 = scmp.ne.s32.totalorder %s187, %s188
      %p197 = scmp.eq.s32.totalorder %s25, 0
      %p198 = por %p196, %p197
      %p199 = scmp.ne.s32.totalorder %s187, %s188
      %p200 = scmp.eq.s32.totalorder %s26, 1
      %p201 = por %p199, %p200
      %p203 = scmp.ne.s32.totalorder %s188, %s202
      %p204 = scmp.eq.s32.totalorder %s26, 0
      %p205 = por %p203, %p204
      %s207 = sadd.s32 %s206, 1
      %p210 = scmp.eq.s32.totalorder %s20, 1
      %p211 = scmp.ne.s32.totalorder %s206, %s208
      %p212 = scmp.eq.s32.totalorder %s20, 0
      %p213 = por %p211, %p212
      %p214 = scmp.ne.s32.totalorder %s206, %s208
      %p215 = scmp.eq.s32.totalorder %s25, 1
      %p216 = por %p214, %p215
      %p217 = scmp.ne.s32.totalorder %s208, %s209
      %p218 = scmp.eq.s32.totalorder %s25, 0
      %p219 = por %p217, %p218
      %p220 = scmp.ne.s32.totalorder %s208, %s209
      %p221 = scmp.eq.s32.totalorder %s26, 1
      %p222 = por %p220, %p221
      %p224 = scmp.ne.s32.totalorder %s209, %s223
      %p225 = scmp.eq.s32.totalorder %s26, 0
      %p226 = por %p224, %p225
      %s227 = ssub.s32 %s20, %s27
      %p228 = scmp.eq.s32.totalorder %s227, 0
      %s230 = sadd.s32 %s229, 1
      %s231 = scalar_select %p228, %s229, %s230
      %p234 = pneg %p228
      %p235 = scmp.eq.s32.totalorder %s20, 1
      %p236 = por %p234, %p235
      %p237 = scmp.ne.s32.totalorder %s229, %s232
      %p238 = scmp.eq.s32.totalorder %s20, 0
      %p239 = por %p237, %p238
      %p240 = scmp.ne.s32.totalorder %s229, %s232
      %p241 = scmp.eq.s32.totalorder %s25, 1
      %p242 = por %p240, %p241
      %p243 = scmp.ne.s32.totalorder %s232, %s233
      %p244 = scmp.eq.s32.totalorder %s25, 0
      %p245 = por %p243, %p244
      %p246 = scmp.ne.s32.totalorder %s232, %s233
      %p247 = scmp.eq.s32.totalorder %s26, 1
      %p248 = por %p246, %p247
      %p250 = scmp.ne.s32.totalorder %s233, %s249
      %p251 = scmp.eq.s32.totalorder %s26, 0
      %p252 = por %p250, %p251
      %p253 = scmp.le.s32.totalorder 1, %s20
      %p254 = scmp.lt.s32.totalorder %s20, 3
      %p255 = pnand %p253, %p254
      %p256 = pneg %p255
      // Predicated region
      $region9: #{tpu_custom_call.1} parent=5 // pred_check
        _
      $region10: #{tpu_custom_call.1} parent=5 // pred_check_branch
        %258 = sbr.rel (%p255) target = $region12
      $region11: #{tpu_custom_call.1} parent=5 // pred_region
        %s259 = ssub.s32 %s20, 1
        // Predicated region
        $region13: #{tpu_custom_call.1} parent=11 // pred_check
          %p260 = pneg %p93
        $region14: #{tpu_custom_call.1} parent=11 // pred_check_branch
          %262 = sbr.rel (%p260) target = $region16
        $region15: #{tpu_custom_call.1} parent=11 // pred_region
          _
        $region16: #{tpu_custom_call.1} parent=11 // pred_fallthru
          _
        // Predicated region
        $region17: #{tpu_custom_call.1} parent=11 // pred_check
          %p263 = pneg %p114
        $region18: #{tpu_custom_call.1} parent=11 // pred_check_branch
          %265 = sbr.rel (%p263) target = $region20
        $region19: #{tpu_custom_call.1} parent=11 // pred_region
          %267 = vsyncadd [#allocation3], 0
          %s268 = sshll.u32 %s3, 4
          %s269 = int_to_ptr.hbm [resolvable:$true] %s268
          %s270 = sshll.u32 [#allocation2], 4
          %s271 = int_to_ptr.vmem [resolvable:$true] %s270
          %276 = dma.hbm_to_vmem [thread:$0]  %s269, 4096, %s271, [#allocation3], 256, 256, 16
        $region20: #{tpu_custom_call.1} parent=11 // pred_fallthru
          _
        // Predicated region
        $region21: #{tpu_custom_call.1} parent=11 // pred_check
          %p277 = pneg %p135
        $region22: #{tpu_custom_call.1} parent=11 // pred_check_branch
          %279 = sbr.rel (%p277) target = $region24
        $region23: #{tpu_custom_call.1} parent=11 // pred_region
          _
        $region24: #{tpu_custom_call.1} parent=11 // pred_fallthru
          _
        // Predicated region
        $region25: #{tpu_custom_call.1} parent=11 // pred_check
          %p280 = pneg %p156
        $region26: #{tpu_custom_call.1} parent=11 // pred_check_branch
          %282 = sbr.rel (%p280) target = $region28
        $region27: #{tpu_custom_call.1} parent=11 // pred_region
          %284 = vsyncadd [#allocation6], 0
          %s285 = sshll.u32 %s5, 4
          %s286 = int_to_ptr.hbm [resolvable:$true] %s285
          %s287 = sshll.u32 [#allocation5], 4
          %s288 = int_to_ptr.vmem [resolvable:$true] %s287
          %293 = dma.hbm_to_vmem [thread:$0]  %s286, 4096, %s288, [#allocation6], 256, 256, 16
        $region28: #{tpu_custom_call.1} parent=11 // pred_fallthru
          _
        // Predicated region
        $region29: #{tpu_custom_call.1} parent=11 // pred_check
          %p294 = pneg %p177
        $region30: #{tpu_custom_call.1} parent=11 // pred_check_branch
          %296 = sbr.rel (%p294) target = $region32
        $region31: #{tpu_custom_call.1} parent=11 // pred_region
          _
        $region32: #{tpu_custom_call.1} parent=11 // pred_fallthru
          _
        // Predicated region
        $region33: #{tpu_custom_call.1} parent=11 // pred_check
          %p297 = pneg %p198
        $region34: #{tpu_custom_call.1} parent=11 // pred_check_branch
          %299 = sbr.rel (%p297) target = $region36
        $region35: #{tpu_custom_call.1} parent=11 // pred_region
          _
        $region36: #{tpu_custom_call.1} parent=11 // pred_fallthru
          _
        // Predicated region
        $region37: #{tpu_custom_call.1} parent=11 // pred_check
          %p300 = pneg %p219
        $region38: #{tpu_custom_call.1} parent=11 // pred_check_branch
          %302 = sbr.rel (%p300) target = $region40
        $region39: #{tpu_custom_call.1} parent=11 // pred_region
          _
        $region40: #{tpu_custom_call.1} parent=11 // pred_fallthru
          _
      $region12: #{tpu_custom_call.1} parent=5 // pred_fallthru
        _
      %p303 = scmp.lt.s32.totalorder %s20, 2
      // Predicated region
      $region41: #{tpu_custom_call.1} parent=5 // pred_check
        %p304 = pneg %p303
      $region42: #{tpu_custom_call.1} parent=5 // pred_check_branch
        %306 = sbr.rel (%p304) target = $region44
      $region43: #{tpu_custom_call.1} parent=5 // pred_region
        // Predicated region
        $region45: #{tpu_custom_call.1} parent=43 // pred_check
          %p307 = pneg %p40
        $region46: #{tpu_custom_call.1} parent=43 // pred_check_branch
          %309 = sbr.rel (%p307) target = $region48
        $region47: #{tpu_custom_call.1} parent=43 // pred_region
          %p310 = scmp.lt.s32.totalorder %s20, 1
          %s311 = scalar_select %p310, %s20, 1
          %s312 = smul.addr %s311, 3
          %s313 = smul.addr %s312, 8
          %s314 = scalar_lea.vmem %s0, %s313
        $region48: #{tpu_custom_call.1} parent=43 // pred_fallthru
          _
        // Predicated region
        $region49: #{tpu_custom_call.1} parent=43 // pred_check
          %p315 = pneg %p66
        $region50: #{tpu_custom_call.1} parent=43 // pred_check_branch
          %317 = sbr.rel (%p315) target = $region52
        $region51: #{tpu_custom_call.1} parent=43 // pred_region
          %p318 = scmp.lt.s32.totalorder %s20, 1
          %s319 = scalar_select %p318, %s20, 1
          %s320 = scalar_lea.vmem %s1, %s319
        $region52: #{tpu_custom_call.1} parent=43 // pred_fallthru
          _
      $region44: #{tpu_custom_call.1} parent=5 // pred_fallthru
        _
      %p321 = scmp.le.s32.totalorder 1, %s20
      %p322 = scmp.lt.s32.totalorder %s20, 3
      %p323 = pnand %p321, %p322
      %p324 = pneg %p323
      // Predicated region
      $region53: #{tpu_custom_call.1} parent=5 // pred_check
        _
      $region54: #{tpu_custom_call.1} parent=5 // pred_check_branch
        %326 = sbr.rel (%p323) target = $region56
      $region55: #{tpu_custom_call.1} parent=5 // pred_region
        %s327 = ssub.s32 %s20, 1
        // Predicated region
        $region57: #{tpu_custom_call.1} parent=55 // pred_check
          %p328 = pneg %p114
        $region58: #{tpu_custom_call.1} parent=55 // pred_check_branch
          %330 = sbr.rel (%p328) target = $region60
        $region59: #{tpu_custom_call.1} parent=55 // pred_region
          %332 = dma.done [#allocation3], 4096
        $region60: #{tpu_custom_call.1} parent=55 // pred_fallthru
          _
        // Predicated region
        $region61: #{tpu_custom_call.1} parent=55 // pred_check
          %p333 = pneg %p156
        $region62: #{tpu_custom_call.1} parent=55 // pred_check_branch
          %335 = sbr.rel (%p333) target = $region64
        $region63: #{tpu_custom_call.1} parent=55 // pred_region
          %337 = dma.done [#allocation6], 4096
        $region64: #{tpu_custom_call.1} parent=55 // pred_fallthru
          _
        %p338 = scmp.lt.s32.totalorder %s25, 1
        %s339 = scalar_select %p338, %s25, 1
        %s340 = smul.addr %s339, 3
        %s341 = smul.addr %s340, 8
        %s342 = scalar_lea.vmem %s0, %s341
        %p343 = pneg %p46
        %p344 = pneg %p43
        %p345 = scmp.lt.s32.totalorder %s25, 1
        %s346 = scalar_select %p345, %s25, 1
        %s347 = scalar_lea.vmem %s1, %s346
        %p348 = pneg %p72
        %p349 = pneg %p69
        %p350 = pneg %p93
        %p351 = pneg %p90
        %p352 = pneg %p114
        %p353 = pneg %p111
        %p354 = pneg %p135
        %p355 = pneg %p132
        %p356 = pneg %p156
        %p357 = pneg %p153
        %p358 = pneg %p177
        %p359 = pneg %p174
        %p360 = pneg %p198
        %p361 = pneg %p195
        %p362 = pneg %p219
        %p363 = pneg %p216
        %p364 = pneg %p245
        %p365 = pneg %p242
        %s366 = sand.u32 %s232, 1
        %s367 = scalar_lea.sflag [#allocation4], %s366
        %s368 = sand.u32 %s232, 1
        %s369 = scalar_lea.vmem [#allocation7], %s368
        %p370 = scmp.lt.s32.totalorder %s25, 1
        %s371 = scalar_select %p370, %s25, 1
        %s372 = smul.addr %s371, 3
        %s373 = smul.addr %s372, 8
        %s374 = scalar_lea.vmem %s0, %s373
        %p375 = scmp.lt.s32.totalorder %s25, 1
        %s376 = scalar_select %p375, %s25, 1
        %s377 = scalar_lea.vmem %s1, %s376
        %v378 = vld [vmem:[%s374] sm:$0xff]
        %v379 = vld [vmem:[%s374 + $0x8] sm:$0xff]
        %v380 = vld [vmem:[%s374 + $0x10] sm:$0xff]
        %v381 = vld [vmem:[%s2] sm:$0xff]
        %v382 = vld [vmem:[%s2 + $0x8] sm:$0xff]
        %v383 = vld [vmem:[%s2 + $0x10] sm:$0x3]
        %v384 = vld [vmem:[%s2 + $0x18] sm:$0x1]
        %v385 = vld [vmem:[%s2 + $0x20] sm:$0xff]
        %v386 = vperm.slane %v384, 0
        %vm387 = vcmask 146432
        %v389 = vsel %vm387, %v378, 0
        %v392 = vsel %vm387, %v379, 0
        %v395 = vsel %vm387, %v380, 0
        %vm397 = vcmask 1041408
        %v399 = vsel %vm397, %v383, 0
        %401 = vmatpush.msra.mxu0 0.0
        %402 = vmatpush.msra.mxu0 0.0
        %403 = vmatpush.msra.mxu0 0.0
        %404 = vmatpush.msra.mxu0 0.0
        %405 = vmatpush.msra.mxu0 0.0
        %406 = vmatpush.msra.mxu0 0.0
        %407 = vmatpush.msra.mxu0 0.0
        %408 = vmatpush.msra.mxu0 0.0
        %409 = vmatpush.msra.mxu0 0.0
        %410 = vmatpush.msra.mxu0 0.0
        %411 = vmatpush.msra.mxu0 0.0
        %412 = vmatpush.msra.mxu0 0.0
        %413 = vmatpush.msra.mxu0 0.0
        %414 = vmatpush.msra.mxu0 %v399
        %415 = vmatpush.msra.mxu0 %v382
        %416 = vmatpush.msra.mxu0 %v381
        %417 = vmatmul.f32.gmra.mxu0 %v389
        %v418 = vpop.f32.mrf.mxu0
        %v419 = vadd.f32 %v386, %v418
        %420 = vmatmul.f32.gmra.mxu0 %v392
        %v421 = vpop.f32.mrf.mxu0
        %v422 = vadd.f32 %v386, %v421
        %423 = vmatmul.f32.gmra.mxu0 %v395
        %v424 = vpop.f32.mrf.mxu0
        %v425 = vadd.f32 %v386, %v424
        %426 = vdwg.mxu0
        %v427 = vadd.f32 %v419, %v385
        %v428 = vadd.f32 %v422, %v385
        %v429 = vadd.f32 %v425, %v385
        %v430 = vld [vmem:[#allocation2] sm:$0xff]
        %v431 = vld [vmem:[#allocation2 + $0x10] sm:$0xff]
        %v432 = vld [vmem:[#allocation2 + $0x20] sm:$0xff]
        %v433 = vld [vmem:[#allocation2 + $0x30] sm:$0xff]
        %v434 = vld [vmem:[%s4] sm:$0x1]
        %v436 = vperm.slane %v434, 0
        %vm438 = vcmask 261120
        %v440 = vsel %vm438, %v427, 0
        %v443 = vsel %vm438, %v428, 0
        %v446 = vsel %vm438, %v429, 0
        %448 = vmatpush.msra.mxu0 0.0
        %449 = vmatpush.msra.mxu0 0.0
        %450 = vmatpush.msra.mxu0 0.0
        %451 = vmatpush.msra.mxu0 0.0
        %452 = vmatpush.msra.mxu0 0.0
        %453 = vmatpush.msra.mxu0 0.0
        %454 = vmatpush.msra.mxu0 0.0
        %455 = vmatpush.msra.mxu0 0.0
        %456 = vmatpush.msra.mxu0 0.0
        %457 = vmatpush.msra.mxu0 0.0
        %458 = vmatpush.msra.mxu0 0.0
        %459 = vmatpush.msra.mxu0 0.0
        %460 = vmatpush.msra.mxu0 %v433
        %461 = vmatpush.msra.mxu0 %v432
        %462 = vmatpush.msra.mxu0 %v431
        %463 = vmatpush.msra.mxu0 %v430
        %464 = vmatmul.f32.gmra.mxu0 %v440
        %v465 = vpop.f32.mrf.mxu0
        %v466 = vadd.f32 %v436, %v465
        %467 = vmatmul.f32.gmra.mxu0 %v443
        %v468 = vpop.f32.mrf.mxu0
        %v469 = vadd.f32 %v436, %v468
        %470 = vmatmul.f32.gmra.mxu0 %v446
        %v471 = vpop.f32.mrf.mxu0
        %v472 = vadd.f32 %v436, %v471
        %473 = vdwg.mxu0
        %475 = vrot.lane.b32.xlu0 %v466, 96
        %v476 = vpop.permute.xlu0 %475
        %vm477 = vcmask 64512
        %v478 = vsel %vm477, %v466, 0
        %v480 = vsel %vm477, %v476, 0
        %482 = vmatpush.xpose.msra.mxu0 0.0
        %483 = vmatpush.xpose.msra.mxu0 0.0
        %484 = vmatpush.xpose.msra.mxu0 0.0
        %485 = vmatpush.xpose.msra.mxu0 0.0
        %486 = vmatpush.xpose.msra.mxu0 0.0
        %487 = vmatpush.xpose.msra.mxu0 0.0
        %488 = vmatpush.xpose.msra.mxu0 0.0
        %489 = vmatpush.xpose.msra.mxu0 0.0
        %490 = vmatpush.xpose.msra.mxu0 0.0
        %491 = vmatpush.xpose.msra.mxu0 0.0
        %492 = vmatpush.xpose.msra.mxu0 0.0
        %493 = vmatpush.xpose.msra.mxu0 0.0
        %494 = vmatpush.xpose.msra.mxu0 0.0
        %495 = vmatpush.xpose.msra.mxu0 0.0
        %496 = vmatpush.xpose.msra.mxu0 0.0
        %497 = vmatpush.xpose.msra.mxu0 %v480
        %498 = vmatmul.f32.gmra.mxu0 %v478
        %v499 = vpop.f32.mrf.mxu0
        %v500 = vadd.f32 0.0, %v499
        %501 = vdwg.mxu0
        %503 = vrot.lane.b32.xlu0 %v469, 96
        %v504 = vpop.permute.xlu0 %503
        %v505 = vsel %vm477, %v469, 0
        %v507 = vsel %vm477, %v504, 0
        %509 = vmatpush.xpose.msra.mxu0 0.0
        %510 = vmatpush.xpose.msra.mxu0 0.0
        %511 = vmatpush.xpose.msra.mxu0 0.0
        %512 = vmatpush.xpose.msra.mxu0 0.0
        %513 = vmatpush.xpose.msra.mxu0 0.0
        %514 = vmatpush.xpose.msra.mxu0 0.0
        %515 = vmatpush.xpose.msra.mxu0 0.0
        %516 = vmatpush.xpose.msra.mxu0 0.0
        %517 = vmatpush.xpose.msra.mxu0 0.0
        %518 = vmatpush.xpose.msra.mxu0 0.0
        %519 = vmatpush.xpose.msra.mxu0 0.0
        %520 = vmatpush.xpose.msra.mxu0 0.0
        %521 = vmatpush.xpose.msra.mxu0 0.0
        %522 = vmatpush.xpose.msra.mxu0 0.0
        %523 = vmatpush.xpose.msra.mxu0 0.0
        %524 = vmatpush.xpose.msra.mxu0 %v507
        %525 = vmatmul.f32.gmra.mxu0 %v505
        %v526 = vpop.f32.mrf.mxu0
        %v527 = vadd.f32 0.0, %v526
        %528 = vdwg.mxu0
        %530 = vrot.lane.b32.xlu0 %v472, 96
        %v531 = vpop.permute.xlu0 %530
        %v532 = vsel %vm477, %v472, 0
        %v534 = vsel %vm477, %v531, 0
        %536 = vmatpush.xpose.msra.mxu0 0.0
        %537 = vmatpush.xpose.msra.mxu0 0.0
        %538 = vmatpush.xpose.msra.mxu0 0.0
        %539 = vmatpush.xpose.msra.mxu0 0.0
        %540 = vmatpush.xpose.msra.mxu0 0.0
        %541 = vmatpush.xpose.msra.mxu0 0.0
        %542 = vmatpush.xpose.msra.mxu0 0.0
        %543 = vmatpush.xpose.msra.mxu0 0.0
        %544 = vmatpush.xpose.msra.mxu0 0.0
        %545 = vmatpush.xpose.msra.mxu0 0.0
        %546 = vmatpush.xpose.msra.mxu0 0.0
        %547 = vmatpush.xpose.msra.mxu0 0.0
        %548 = vmatpush.xpose.msra.mxu0 0.0
        %549 = vmatpush.xpose.msra.mxu0 0.0
        %550 = vmatpush.xpose.msra.mxu0 0.0
        %551 = vmatpush.xpose.msra.mxu0 %v534
        %552 = vmatmul.f32.gmra.mxu0 %v532
        %v553 = vpop.f32.mrf.mxu0
        %v554 = vadd.f32 0.0, %v553
        %555 = vdwg.mxu0
        %v556 = vsel %vm477, %v500, -inf
        %557 = vmax.xlane.f32.xlu0 %v556
        %v558 = vpop.xlane.xlu0 %557
        %v559 = vsel %vm477, %v527, -inf
        %560 = vmax.xlane.f32.xlu0 %v559
        %v561 = vpop.xlane.xlu0 %560
        %v562 = vsel %vm477, %v554, -inf
        %563 = vmax.xlane.f32.xlu0 %v562
        %v564 = vpop.xlane.xlu0 %563
        %v565 = vsub.f32 %v500, %v558
        %v566 = vsub.f32 %v527, %v561
        %v567 = vsub.f32 %v554, %v564
        %v568 = vmul.f32 %v565, 1.442695
        %v569 = vpow.pop %v568
        %v570 = vmul.f32 %v566, 1.442695
        %v571 = vpow.pop %v570
        %v572 = vmul.f32 %v567, 1.442695
        %v573 = vpow.pop %v572
        %v574 = vsel %vm477, %v569, 0.0
        %575 = vadd.xlane.f32.xlu0 %v574
        %v576 = vpop.xlane.xlu0 %575
        %v577 = vsel %vm477, %v571, 0.0
        %578 = vadd.xlane.f32.xlu0 %v577
        %v579 = vpop.xlane.xlu0 %578
        %v580 = vsel %vm477, %v573, 0.0
        %581 = vadd.xlane.f32.xlu0 %v580
        %v582 = vpop.xlane.xlu0 %581
        %v583 = vrcp.pop %v576
        %v584 = vrcp.pop %v579
        %v585 = vrcp.pop %v582
        %v586 = vmul.f32 %v569, %v583
        %v587 = vmul.f32 %v571, %v584
        %v588 = vmul.f32 %v573, %v585
        %589 = vrot.lane.b32.xlu0 %v466, 64
        %v590 = vpop.permute.xlu0 %589
        %v593 = vsel %vm477, %v586, 0
        %595 = vmatpush.msra.mxu0 0.0
        %596 = vmatpush.msra.mxu0 0.0
        %597 = vmatpush.msra.mxu0 0.0
        %598 = vmatpush.msra.mxu0 0.0
        %599 = vmatpush.msra.mxu0 0.0
        %600 = vmatpush.msra.mxu0 0.0
        %601 = vmatpush.msra.mxu0 0.0
        %602 = vmatpush.msra.mxu0 0.0
        %603 = vmatpush.msra.mxu0 0.0
        %604 = vmatpush.msra.mxu0 0.0
        %605 = vmatpush.msra.mxu0 0.0
        %606 = vmatpush.msra.mxu0 0.0
        %607 = vmatpush.msra.mxu0 0.0
        %608 = vmatpush.msra.mxu0 0.0
        %609 = vmatpush.msra.mxu0 0.0
        %610 = vmatpush.msra.mxu0 %v590
        %611 = vmatmul.f32.gmra.mxu0 %v593
        %v612 = vpop.f32.mrf.mxu0
        %v613 = vadd.f32 0.0, %v612
        %614 = vdwg.mxu0
        %615 = vrot.lane.b32.xlu0 %v469, 64
        %v616 = vpop.permute.xlu0 %615
        %v619 = vsel %vm477, %v587, 0
        %621 = vmatpush.msra.mxu0 0.0
        %622 = vmatpush.msra.mxu0 0.0
        %623 = vmatpush.msra.mxu0 0.0
        %624 = vmatpush.msra.mxu0 0.0
        %625 = vmatpush.msra.mxu0 0.0
        %626 = vmatpush.msra.mxu0 0.0
        %627 = vmatpush.msra.mxu0 0.0
        %628 = vmatpush.msra.mxu0 0.0
        %629 = vmatpush.msra.mxu0 0.0
        %630 = vmatpush.msra.mxu0 0.0
        %631 = vmatpush.msra.mxu0 0.0
        %632 = vmatpush.msra.mxu0 0.0
        %633 = vmatpush.msra.mxu0 0.0
        %634 = vmatpush.msra.mxu0 0.0
        %635 = vmatpush.msra.mxu0 0.0
        %636 = vmatpush.msra.mxu0 %v616
        %637 = vmatmul.f32.gmra.mxu0 %v619
        %v638 = vpop.f32.mrf.mxu0
        %v639 = vadd.f32 0.0, %v638
        %640 = vdwg.mxu0
        %641 = vrot.lane.b32.xlu0 %v472, 64
        %v642 = vpop.permute.xlu0 %641
        %v645 = vsel %vm477, %v588, 0
        %647 = vmatpush.msra.mxu0 0.0
        %648 = vmatpush.msra.mxu0 0.0
        %649 = vmatpush.msra.mxu0 0.0
        %650 = vmatpush.msra.mxu0 0.0
        %651 = vmatpush.msra.mxu0 0.0
        %652 = vmatpush.msra.mxu0 0.0
        %653 = vmatpush.msra.mxu0 0.0
        %654 = vmatpush.msra.mxu0 0.0
        %655 = vmatpush.msra.mxu0 0.0
        %656 = vmatpush.msra.mxu0 0.0
        %657 = vmatpush.msra.mxu0 0.0
        %658 = vmatpush.msra.mxu0 0.0
        %659 = vmatpush.msra.mxu0 0.0
        %660 = vmatpush.msra.mxu0 0.0
        %661 = vmatpush.msra.mxu0 0.0
        %662 = vmatpush.msra.mxu0 %v642
        %663 = vmatmul.f32.gmra.mxu0 %v645
        %v664 = vpop.f32.mrf.mxu0
        %v665 = vadd.f32 0.0, %v664
        %666 = vdwg.mxu0
        %667 = vrot.lane.b32.xlu0 %v466, 120
        %v668 = vpop.permute.xlu0 %667
        %669 = vrot.lane.b32.xlu0 %v466, 88
        %v670 = vpop.permute.xlu0 %669
        %v671 = vsel %vm477, %v668, 0
        %v673 = vsel %vm477, %v670, 0
        %675 = vmatpush.xpose.msra.mxu0 0.0
        %676 = vmatpush.xpose.msra.mxu0 0.0
        %677 = vmatpush.xpose.msra.mxu0 0.0
        %678 = vmatpush.xpose.msra.mxu0 0.0
        %679 = vmatpush.xpose.msra.mxu0 0.0
        %680 = vmatpush.xpose.msra.mxu0 0.0
        %681 = vmatpush.xpose.msra.mxu0 0.0
        %682 = vmatpush.xpose.msra.mxu0 0.0
        %683 = vmatpush.xpose.msra.mxu0 0.0
        %684 = vmatpush.xpose.msra.mxu0 0.0
        %685 = vmatpush.xpose.msra.mxu0 0.0
        %686 = vmatpush.xpose.msra.mxu0 0.0
        %687 = vmatpush.xpose.msra.mxu0 0.0
        %688 = vmatpush.xpose.msra.mxu0 0.0
        %689 = vmatpush.xpose.msra.mxu0 0.0
        %690 = vmatpush.xpose.msra.mxu0 %v673
        %691 = vmatmul.f32.gmra.mxu0 %v671
        %v692 = vpop.f32.mrf.mxu0
        %v693 = vadd.f32 0.0, %v692
        %694 = vdwg.mxu0
        %695 = vrot.lane.b32.xlu0 %v469, 120
        %v696 = vpop.permute.xlu0 %695
        %697 = vrot.lane.b32.xlu0 %v469, 88
        %v698 = vpop.permute.xlu0 %697
        %v699 = vsel %vm477, %v696, 0
        %v701 = vsel %vm477, %v698, 0
        %703 = vmatpush.xpose.msra.mxu0 0.0
        %704 = vmatpush.xpose.msra.mxu0 0.0
        %705 = vmatpush.xpose.msra.mxu0 0.0
        %706 = vmatpush.xpose.msra.mxu0 0.0
        %707 = vmatpush.xpose.msra.mxu0 0.0
        %708 = vmatpush.xpose.msra.mxu0 0.0
        %709 = vmatpush.xpose.msra.mxu0 0.0
        %710 = vmatpush.xpose.msra.mxu0 0.0
        %711 = vmatpush.xpose.msra.mxu0 0.0
        %712 = vmatpush.xpose.msra.mxu0 0.0
        %713 = vmatpush.xpose.msra.mxu0 0.0
        %714 = vmatpush.xpose.msra.mxu0 0.0
        %715 = vmatpush.xpose.msra.mxu0 0.0
        %716 = vmatpush.xpose.msra.mxu0 0.0
        %717 = vmatpush.xpose.msra.mxu0 0.0
        %718 = vmatpush.xpose.msra.mxu0 %v701
        %719 = vmatmul.f32.gmra.mxu0 %v699
        %v720 = vpop.f32.mrf.mxu0
        %v721 = vadd.f32 0.0, %v720
        %722 = vdwg.mxu0
        %723 = vrot.lane.b32.xlu0 %v472, 120
        %v724 = vpop.permute.xlu0 %723
        %725 = vrot.lane.b32.xlu0 %v472, 88
        %v726 = vpop.permute.xlu0 %725
        %v727 = vsel %vm477, %v724, 0
        %v729 = vsel %vm477, %v726, 0
        %731 = vmatpush.xpose.msra.mxu0 0.0
        %732 = vmatpush.xpose.msra.mxu0 0.0
        %733 = vmatpush.xpose.msra.mxu0 0.0
        %734 = vmatpush.xpose.msra.mxu0 0.0
        %735 = vmatpush.xpose.msra.mxu0 0.0
        %736 = vmatpush.xpose.msra.mxu0 0.0
        %737 = vmatpush.xpose.msra.mxu0 0.0
        %738 = vmatpush.xpose.msra.mxu0 0.0
        %739 = vmatpush.xpose.msra.mxu0 0.0
        %740 = vmatpush.xpose.msra.mxu0 0.0
        %741 = vmatpush.xpose.msra.mxu0 0.0
        %742 = vmatpush.xpose.msra.mxu0 0.0
        %743 = vmatpush.xpose.msra.mxu0 0.0
        %744 = vmatpush.xpose.msra.mxu0 0.0
        %745 = vmatpush.xpose.msra.mxu0 0.0
        %746 = vmatpush.xpose.msra.mxu0 %v729
        %747 = vmatmul.f32.gmra.mxu0 %v727
        %v748 = vpop.f32.mrf.mxu0
        %v749 = vadd.f32 0.0, %v748
        %750 = vdwg.mxu0
        %v751 = vsel %vm477, %v693, -inf
        %752 = vmax.xlane.f32.xlu0 %v751
        %v753 = vpop.xlane.xlu0 %752
        %v754 = vsel %vm477, %v721, -inf
        %755 = vmax.xlane.f32.xlu0 %v754
        %v756 = vpop.xlane.xlu0 %755
        %v757 = vsel %vm477, %v749, -inf
        %758 = vmax.xlane.f32.xlu0 %v757
        %v759 = vpop.xlane.xlu0 %758
        %v760 = vsub.f32 %v693, %v753
        %v761 = vsub.f32 %v721, %v756
        %v762 = vsub.f32 %v749, %v759
        %v763 = vmul.f32 %v760, 1.442695
        %v764 = vpow.pop %v763
        %v765 = vmul.f32 %v761, 1.442695
        %v766 = vpow.pop %v765
        %v767 = vmul.f32 %v762, 1.442695
        %v768 = vpow.pop %v767
        %v769 = vsel %vm477, %v764, 0.0
        %770 = vadd.xlane.f32.xlu0 %v769
        %v771 = vpop.xlane.xlu0 %770
        %v772 = vsel %vm477, %v766, 0.0
        %773 = vadd.xlane.f32.xlu0 %v772
        %v774 = vpop.xlane.xlu0 %773
        %v775 = vsel %vm477, %v768, 0.0
        %776 = vadd.xlane.f32.xlu0 %v775
        %v777 = vpop.xlane.xlu0 %776
        %v778 = vrcp.pop %v771
        %v779 = vrcp.pop %v774
        %v780 = vrcp.pop %v777
        %v781 = vmul.f32 %v764, %v778
        %v782 = vmul.f32 %v766, %v779
        %v783 = vmul.f32 %v768, %v780
        %784 = vrot.lane.b32.xlu0 %v466, 56
        %v785 = vpop.permute.xlu0 %784
        %v788 = vsel %vm477, %v781, 0
        %790 = vmatpush.msra.mxu0 0.0
        %791 = vmatpush.msra.mxu0 0.0
        %792 = vmatpush.msra.mxu0 0.0
        %793 = vmatpush.msra.mxu0 0.0
        %794 = vmatpush.msra.mxu0 0.0
        %795 = vmatpush.msra.mxu0 0.0
        %796 = vmatpush.msra.mxu0 0.0
        %797 = vmatpush.msra.mxu0 0.0
        %798 = vmatpush.msra.mxu0 0.0
        %799 = vmatpush.msra.mxu0 0.0
        %800 = vmatpush.msra.mxu0 0.0
        %801 = vmatpush.msra.mxu0 0.0
        %802 = vmatpush.msra.mxu0 0.0
        %803 = vmatpush.msra.mxu0 0.0
        %804 = vmatpush.msra.mxu0 0.0
        %805 = vmatpush.msra.mxu0 %v785
        %806 = vmatmul.f32.gmra.mxu0 %v788
        %v807 = vpop.f32.mrf.mxu0
        %v808 = vadd.f32 0.0, %v807
        %809 = vdwg.mxu0
        %810 = vrot.lane.b32.xlu0 %v469, 56
        %v811 = vpop.permute.xlu0 %810
        %v814 = vsel %vm477, %v782, 0
        %816 = vmatpush.msra.mxu0 0.0
        %817 = vmatpush.msra.mxu0 0.0
        %818 = vmatpush.msra.mxu0 0.0
        %819 = vmatpush.msra.mxu0 0.0
        %820 = vmatpush.msra.mxu0 0.0
        %821 = vmatpush.msra.mxu0 0.0
        %822 = vmatpush.msra.mxu0 0.0
        %823 = vmatpush.msra.mxu0 0.0
        %824 = vmatpush.msra.mxu0 0.0
        %825 = vmatpush.msra.mxu0 0.0
        %826 = vmatpush.msra.mxu0 0.0
        %827 = vmatpush.msra.mxu0 0.0
        %828 = vmatpush.msra.mxu0 0.0
        %829 = vmatpush.msra.mxu0 0.0
        %830 = vmatpush.msra.mxu0 0.0
        %831 = vmatpush.msra.mxu0 %v811
        %832 = vmatmul.f32.gmra.mxu0 %v814
        %v833 = vpop.f32.mrf.mxu0
        %v834 = vadd.f32 0.0, %v833
        %835 = vdwg.mxu0
        %836 = vrot.lane.b32.xlu0 %v472, 56
        %v837 = vpop.permute.xlu0 %836
        %v840 = vsel %vm477, %v783, 0
        %842 = vmatpush.msra.mxu0 0.0
        %843 = vmatpush.msra.mxu0 0.0
        %844 = vmatpush.msra.mxu0 0.0
        %845 = vmatpush.msra.mxu0 0.0
        %846 = vmatpush.msra.mxu0 0.0
        %847 = vmatpush.msra.mxu0 0.0
        %848 = vmatpush.msra.mxu0 0.0
        %849 = vmatpush.msra.mxu0 0.0
        %850 = vmatpush.msra.mxu0 0.0
        %851 = vmatpush.msra.mxu0 0.0
        %852 = vmatpush.msra.mxu0 0.0
        %853 = vmatpush.msra.mxu0 0.0
        %854 = vmatpush.msra.mxu0 0.0
        %855 = vmatpush.msra.mxu0 0.0
        %856 = vmatpush.msra.mxu0 0.0
        %857 = vmatpush.msra.mxu0 %v837
        %858 = vmatmul.f32.gmra.mxu0 %v840
        %v859 = vpop.f32.mrf.mxu0
        %v860 = vadd.f32 0.0, %v859
        %861 = vdwg.mxu0
        %862 = vrot.lane.b32.xlu0 %v466, 112
        %v863 = vpop.permute.xlu0 %862
        %864 = vrot.lane.b32.xlu0 %v466, 80
        %v865 = vpop.permute.xlu0 %864
        %v866 = vsel %vm477, %v863, 0
        %v868 = vsel %vm477, %v865, 0
        %870 = vmatpush.xpose.msra.mxu0 0.0
        %871 = vmatpush.xpose.msra.mxu0 0.0
        %872 = vmatpush.xpose.msra.mxu0 0.0
        %873 = vmatpush.xpose.msra.mxu0 0.0
        %874 = vmatpush.xpose.msra.mxu0 0.0
        %875 = vmatpush.xpose.msra.mxu0 0.0
        %876 = vmatpush.xpose.msra.mxu0 0.0
        %877 = vmatpush.xpose.msra.mxu0 0.0
        %878 = vmatpush.xpose.msra.mxu0 0.0
        %879 = vmatpush.xpose.msra.mxu0 0.0
        %880 = vmatpush.xpose.msra.mxu0 0.0
        %881 = vmatpush.xpose.msra.mxu0 0.0
        %882 = vmatpush.xpose.msra.mxu0 0.0
        %883 = vmatpush.xpose.msra.mxu0 0.0
        %884 = vmatpush.xpose.msra.mxu0 0.0
        %885 = vmatpush.xpose.msra.mxu0 %v868
        %886 = vmatmul.f32.gmra.mxu0 %v866
        %v887 = vpop.f32.mrf.mxu0
        %v888 = vadd.f32 0.0, %v887
        %889 = vdwg.mxu0
        %890 = vrot.lane.b32.xlu0 %v469, 112
        %v891 = vpop.permute.xlu0 %890
        %892 = vrot.lane.b32.xlu0 %v469, 80
        %v893 = vpop.permute.xlu0 %892
        %v894 = vsel %vm477, %v891, 0
        %v896 = vsel %vm477, %v893, 0
        %898 = vmatpush.xpose.msra.mxu0 0.0
        %899 = vmatpush.xpose.msra.mxu0 0.0
        %900 = vmatpush.xpose.msra.mxu0 0.0
        %901 = vmatpush.xpose.msra.mxu0 0.0
        %902 = vmatpush.xpose.msra.mxu0 0.0
        %903 = vmatpush.xpose.msra.mxu0 0.0
        %904 = vmatpush.xpose.msra.mxu0 0.0
        %905 = vmatpush.xpose.msra.mxu0 0.0
        %906 = vmatpush.xpose.msra.mxu0 0.0
        %907 = vmatpush.xpose.msra.mxu0 0.0
        %908 = vmatpush.xpose.msra.mxu0 0.0
        %909 = vmatpush.xpose.msra.mxu0 0.0
        %910 = vmatpush.xpose.msra.mxu0 0.0
        %911 = vmatpush.xpose.msra.mxu0 0.0
        %912 = vmatpush.xpose.msra.mxu0 0.0
        %913 = vmatpush.xpose.msra.mxu0 %v896
        %914 = vmatmul.f32.gmra.mxu0 %v894
        %v915 = vpop.f32.mrf.mxu0
        %v916 = vadd.f32 0.0, %v915
        %917 = vdwg.mxu0
        %918 = vrot.lane.b32.xlu0 %v472, 112
        %v919 = vpop.permute.xlu0 %918
        %920 = vrot.lane.b32.xlu0 %v472, 80
        %v921 = vpop.permute.xlu0 %920
        %v922 = vsel %vm477, %v919, 0
        %v924 = vsel %vm477, %v921, 0
        %926 = vmatpush.xpose.msra.mxu0 0.0
        %927 = vmatpush.xpose.msra.mxu0 0.0
        %928 = vmatpush.xpose.msra.mxu0 0.0
        %929 = vmatpush.xpose.msra.mxu0 0.0
        %930 = vmatpush.xpose.msra.mxu0 0.0
        %931 = vmatpush.xpose.msra.mxu0 0.0
        %932 = vmatpush.xpose.msra.mxu0 0.0
        %933 = vmatpush.xpose.msra.mxu0 0.0
        %934 = vmatpush.xpose.msra.mxu0 0.0
        %935 = vmatpush.xpose.msra.mxu0 0.0
        %936 = vmatpush.xpose.msra.mxu0 0.0
        %937 = vmatpush.xpose.msra.mxu0 0.0
        %938 = vmatpush.xpose.msra.mxu0 0.0
        %939 = vmatpush.xpose.msra.mxu0 0.0
        %940 = vmatpush.xpose.msra.mxu0 0.0
        %941 = vmatpush.xpose.msra.mxu0 %v924
        %942 = vmatmul.f32.gmra.mxu0 %v922
        %v943 = vpop.f32.mrf.mxu0
        %v944 = vadd.f32 0.0, %v943
        %945 = vdwg.mxu0
        %v946 = vsel %vm477, %v888, -inf
        %947 = vmax.xlane.f32.xlu0 %v946
        %v948 = vpop.xlane.xlu0 %947
        %v949 = vsel %vm477, %v916, -inf
        %950 = vmax.xlane.f32.xlu0 %v949
        %v951 = vpop.xlane.xlu0 %950
        %v952 = vsel %vm477, %v944, -inf
        %953 = vmax.xlane.f32.xlu0 %v952
        %v954 = vpop.xlane.xlu0 %953
        %v955 = vsub.f32 %v888, %v948
        %v956 = vsub.f32 %v916, %v951
        %v957 = vsub.f32 %v944, %v954
        %v958 = vmul.f32 %v955, 1.442695
        %v959 = vpow.pop %v958
        %v960 = vmul.f32 %v956, 1.442695
        %v961 = vpow.pop %v960
        %v962 = vmul.f32 %v957, 1.442695
        %v963 = vpow.pop %v962
        %v964 = vsel %vm477, %v959, 0.0
        %965 = vadd.xlane.f32.xlu0 %v964
        %v966 = vpop.xlane.xlu0 %965
        %v967 = vsel %vm477, %v961, 0.0
        %968 = vadd.xlane.f32.xlu0 %v967
        %v969 = vpop.xlane.xlu0 %968
        %v970 = vsel %vm477, %v963, 0.0
        %971 = vadd.xlane.f32.xlu0 %v970
        %v972 = vpop.xlane.xlu0 %971
        %v973 = vrcp.pop %v966
        %v974 = vrcp.pop %v969
        %v975 = vrcp.pop %v972
        %v976 = vmul.f32 %v959, %v973
        %v977 = vmul.f32 %v961, %v974
        %v978 = vmul.f32 %v963, %v975
        %979 = vrot.lane.b32.xlu0 %v466, 48
        %v980 = vpop.permute.xlu0 %979
        %v983 = vsel %vm477, %v976, 0
        %985 = vmatpush.msra.mxu0 0.0
        %986 = vmatpush.msra.mxu0 0.0
        %987 = vmatpush.msra.mxu0 0.0
        %988 = vmatpush.msra.mxu0 0.0
        %989 = vmatpush.msra.mxu0 0.0
        %990 = vmatpush.msra.mxu0 0.0
        %991 = vmatpush.msra.mxu0 0.0
        %992 = vmatpush.msra.mxu0 0.0
        %993 = vmatpush.msra.mxu0 0.0
        %994 = vmatpush.msra.mxu0 0.0
        %995 = vmatpush.msra.mxu0 0.0
        %996 = vmatpush.msra.mxu0 0.0
        %997 = vmatpush.msra.mxu0 0.0
        %998 = vmatpush.msra.mxu0 0.0
        %999 = vmatpush.msra.mxu0 0.0
        %1000 = vmatpush.msra.mxu0 %v980
        %1001 = vmatmul.f32.gmra.mxu0 %v983
        %v1002 = vpop.f32.mrf.mxu0
        %v1003 = vadd.f32 0.0, %v1002
        %1004 = vdwg.mxu0
        %1005 = vrot.lane.b32.xlu0 %v469, 48
        %v1006 = vpop.permute.xlu0 %1005
        %v1009 = vsel %vm477, %v977, 0
        %1011 = vmatpush.msra.mxu0 0.0
        %1012 = vmatpush.msra.mxu0 0.0
        %1013 = vmatpush.msra.mxu0 0.0
        %1014 = vmatpush.msra.mxu0 0.0
        %1015 = vmatpush.msra.mxu0 0.0
        %1016 = vmatpush.msra.mxu0 0.0
        %1017 = vmatpush.msra.mxu0 0.0
        %1018 = vmatpush.msra.mxu0 0.0
        %1019 = vmatpush.msra.mxu0 0.0
        %1020 = vmatpush.msra.mxu0 0.0
        %1021 = vmatpush.msra.mxu0 0.0
        %1022 = vmatpush.msra.mxu0 0.0
        %1023 = vmatpush.msra.mxu0 0.0
        %1024 = vmatpush.msra.mxu0 0.0
        %1025 = vmatpush.msra.mxu0 0.0
        %1026 = vmatpush.msra.mxu0 %v1006
        %1027 = vmatmul.f32.gmra.mxu0 %v1009
        %v1028 = vpop.f32.mrf.mxu0
        %v1029 = vadd.f32 0.0, %v1028
        %1030 = vdwg.mxu0
        %1031 = vrot.lane.b32.xlu0 %v472, 48
        %v1032 = vpop.permute.xlu0 %1031
        %v1035 = vsel %vm477, %v978, 0
        %1037 = vmatpush.msra.mxu0 0.0
        %1038 = vmatpush.msra.mxu0 0.0
        %1039 = vmatpush.msra.mxu0 0.0
        %1040 = vmatpush.msra.mxu0 0.0
        %1041 = vmatpush.msra.mxu0 0.0
        %1042 = vmatpush.msra.mxu0 0.0
        %1043 = vmatpush.msra.mxu0 0.0
        %1044 = vmatpush.msra.mxu0 0.0
        %1045 = vmatpush.msra.mxu0 0.0
        %1046 = vmatpush.msra.mxu0 0.0
        %1047 = vmatpush.msra.mxu0 0.0
        %1048 = vmatpush.msra.mxu0 0.0
        %1049 = vmatpush.msra.mxu0 0.0
        %1050 = vmatpush.msra.mxu0 0.0
        %1051 = vmatpush.msra.mxu0 0.0
        %1052 = vmatpush.msra.mxu0 %v1032
        %1053 = vmatmul.f32.gmra.mxu0 %v1035
        %v1054 = vpop.f32.mrf.mxu0
        %v1055 = vadd.f32 0.0, %v1054
        %1056 = vdwg.mxu0
        %1057 = vrot.lane.b32.xlu0 %v466, 104
        %v1058 = vpop.permute.xlu0 %1057
        %1059 = vrot.lane.b32.xlu0 %v466, 72
        %v1060 = vpop.permute.xlu0 %1059
        %v1061 = vsel %vm477, %v1058, 0
        %v1063 = vsel %vm477, %v1060, 0
        %1065 = vmatpush.xpose.msra.mxu0 0.0
        %1066 = vmatpush.xpose.msra.mxu0 0.0
        %1067 = vmatpush.xpose.msra.mxu0 0.0
        %1068 = vmatpush.xpose.msra.mxu0 0.0
        %1069 = vmatpush.xpose.msra.mxu0 0.0
        %1070 = vmatpush.xpose.msra.mxu0 0.0
        %1071 = vmatpush.xpose.msra.mxu0 0.0
        %1072 = vmatpush.xpose.msra.mxu0 0.0
        %1073 = vmatpush.xpose.msra.mxu0 0.0
        %1074 = vmatpush.xpose.msra.mxu0 0.0
        %1075 = vmatpush.xpose.msra.mxu0 0.0
        %1076 = vmatpush.xpose.msra.mxu0 0.0
        %1077 = vmatpush.xpose.msra.mxu0 0.0
        %1078 = vmatpush.xpose.msra.mxu0 0.0
        %1079 = vmatpush.xpose.msra.mxu0 0.0
        %1080 = vmatpush.xpose.msra.mxu0 %v1063
        %1081 = vmatmul.f32.gmra.mxu0 %v1061
        %v1082 = vpop.f32.mrf.mxu0
        %v1083 = vadd.f32 0.0, %v1082
        %1084 = vdwg.mxu0
        %1085 = vrot.lane.b32.xlu0 %v469, 104
        %v1086 = vpop.permute.xlu0 %1085
        %1087 = vrot.lane.b32.xlu0 %v469, 72
        %v1088 = vpop.permute.xlu0 %1087
        %v1089 = vsel %vm477, %v1086, 0
        %v1091 = vsel %vm477, %v1088, 0
        %1093 = vmatpush.xpose.msra.mxu0 0.0
        %1094 = vmatpush.xpose.msra.mxu0 0.0
        %1095 = vmatpush.xpose.msra.mxu0 0.0
        %1096 = vmatpush.xpose.msra.mxu0 0.0
        %1097 = vmatpush.xpose.msra.mxu0 0.0
        %1098 = vmatpush.xpose.msra.mxu0 0.0
        %1099 = vmatpush.xpose.msra.mxu0 0.0
        %1100 = vmatpush.xpose.msra.mxu0 0.0
        %1101 = vmatpush.xpose.msra.mxu0 0.0
        %1102 = vmatpush.xpose.msra.mxu0 0.0
        %1103 = vmatpush.xpose.msra.mxu0 0.0
        %1104 = vmatpush.xpose.msra.mxu0 0.0
        %1105 = vmatpush.xpose.msra.mxu0 0.0
        %1106 = vmatpush.xpose.msra.mxu0 0.0
        %1107 = vmatpush.xpose.msra.mxu0 0.0
        %1108 = vmatpush.xpose.msra.mxu0 %v1091
        %1109 = vmatmul.f32.gmra.mxu0 %v1089
        %v1110 = vpop.f32.mrf.mxu0
        %v1111 = vadd.f32 0.0, %v1110
        %1112 = vdwg.mxu0
        %1113 = vrot.lane.b32.xlu0 %v472, 104
        %v1114 = vpop.permute.xlu0 %1113
        %1115 = vrot.lane.b32.xlu0 %v472, 72
        %v1116 = vpop.permute.xlu0 %1115
        %v1117 = vsel %vm477, %v1114, 0
        %v1119 = vsel %vm477, %v1116, 0
        %1121 = vmatpush.xpose.msra.mxu0 0.0
        %1122 = vmatpush.xpose.msra.mxu0 0.0
        %1123 = vmatpush.xpose.msra.mxu0 0.0
        %1124 = vmatpush.xpose.msra.mxu0 0.0
        %1125 = vmatpush.xpose.msra.mxu0 0.0
        %1126 = vmatpush.xpose.msra.mxu0 0.0
        %1127 = vmatpush.xpose.msra.mxu0 0.0
        %1128 = vmatpush.xpose.msra.mxu0 0.0
        %1129 = vmatpush.xpose.msra.mxu0 0.0
        %1130 = vmatpush.xpose.msra.mxu0 0.0
        %1131 = vmatpush.xpose.msra.mxu0 0.0
        %1132 = vmatpush.xpose.msra.mxu0 0.0
        %1133 = vmatpush.xpose.msra.mxu0 0.0
        %1134 = vmatpush.xpose.msra.mxu0 0.0
        %1135 = vmatpush.xpose.msra.mxu0 0.0
        %1136 = vmatpush.xpose.msra.mxu0 %v1119
        %1137 = vmatmul.f32.gmra.mxu0 %v1117
        %v1138 = vpop.f32.mrf.mxu0
        %v1139 = vadd.f32 0.0, %v1138
        %1140 = vdwg.mxu0
        %v1141 = vsel %vm477, %v1083, -inf
        %1142 = vmax.xlane.f32.xlu0 %v1141
        %v1143 = vpop.xlane.xlu0 %1142
        %v1144 = vsel %vm477, %v1111, -inf
        %1145 = vmax.xlane.f32.xlu0 %v1144
        %v1146 = vpop.xlane.xlu0 %1145
        %v1147 = vsel %vm477, %v1139, -inf
        %1148 = vmax.xlane.f32.xlu0 %v1147
        %v1149 = vpop.xlane.xlu0 %1148
        %v1150 = vsub.f32 %v1083, %v1143
        %v1151 = vsub.f32 %v1111, %v1146
        %v1152 = vsub.f32 %v1139, %v1149
        %v1153 = vmul.f32 %v1150, 1.442695
        %v1154 = vpow.pop %v1153
        %v1155 = vmul.f32 %v1151, 1.442695
        %v1156 = vpow.pop %v1155
        %v1157 = vmul.f32 %v1152, 1.442695
        %v1158 = vpow.pop %v1157
        %v1159 = vsel %vm477, %v1154, 0.0
        %1160 = vadd.xlane.f32.xlu0 %v1159
        %v1161 = vpop.xlane.xlu0 %1160
        %v1162 = vsel %vm477, %v1156, 0.0
        %1163 = vadd.xlane.f32.xlu0 %v1162
        %v1164 = vpop.xlane.xlu0 %1163
        %v1165 = vsel %vm477, %v1158, 0.0
        %1166 = vadd.xlane.f32.xlu0 %v1165
        %v1167 = vpop.xlane.xlu0 %1166
        %v1168 = vrcp.pop %v1161
        %v1169 = vrcp.pop %v1164
        %v1170 = vrcp.pop %v1167
        %v1171 = vmul.f32 %v1154, %v1168
        %v1172 = vmul.f32 %v1156, %v1169
        %v1173 = vmul.f32 %v1158, %v1170
        %1174 = vrot.lane.b32.xlu0 %v466, 40
        %v1175 = vpop.permute.xlu0 %1174
        %v1178 = vsel %vm477, %v1171, 0
        %1180 = vmatpush.msra.mxu0 0.0
        %1181 = vmatpush.msra.mxu0 0.0
        %1182 = vmatpush.msra.mxu0 0.0
        %1183 = vmatpush.msra.mxu0 0.0
        %1184 = vmatpush.msra.mxu0 0.0
        %1185 = vmatpush.msra.mxu0 0.0
        %1186 = vmatpush.msra.mxu0 0.0
        %1187 = vmatpush.msra.mxu0 0.0
        %1188 = vmatpush.msra.mxu0 0.0
        %1189 = vmatpush.msra.mxu0 0.0
        %1190 = vmatpush.msra.mxu0 0.0
        %1191 = vmatpush.msra.mxu0 0.0
        %1192 = vmatpush.msra.mxu0 0.0
        %1193 = vmatpush.msra.mxu0 0.0
        %1194 = vmatpush.msra.mxu0 0.0
        %1195 = vmatpush.msra.mxu0 %v1175
        %1196 = vmatmul.f32.gmra.mxu0 %v1178
        %v1197 = vpop.f32.mrf.mxu0
        %v1198 = vadd.f32 0.0, %v1197
        %1199 = vdwg.mxu0
        %1200 = vrot.lane.b32.xlu0 %v469, 40
        %v1201 = vpop.permute.xlu0 %1200
        %v1204 = vsel %vm477, %v1172, 0
        %1206 = vmatpush.msra.mxu0 0.0
        %1207 = vmatpush.msra.mxu0 0.0
        %1208 = vmatpush.msra.mxu0 0.0
        %1209 = vmatpush.msra.mxu0 0.0
        %1210 = vmatpush.msra.mxu0 0.0
        %1211 = vmatpush.msra.mxu0 0.0
        %1212 = vmatpush.msra.mxu0 0.0
        %1213 = vmatpush.msra.mxu0 0.0
        %1214 = vmatpush.msra.mxu0 0.0
        %1215 = vmatpush.msra.mxu0 0.0
        %1216 = vmatpush.msra.mxu0 0.0
        %1217 = vmatpush.msra.mxu0 0.0
        %1218 = vmatpush.msra.mxu0 0.0
        %1219 = vmatpush.msra.mxu0 0.0
        %1220 = vmatpush.msra.mxu0 0.0
        %1221 = vmatpush.msra.mxu0 %v1201
        %1222 = vmatmul.f32.gmra.mxu0 %v1204
        %v1223 = vpop.f32.mrf.mxu0
        %v1224 = vadd.f32 0.0, %v1223
        %1225 = vdwg.mxu0
        %1226 = vrot.lane.b32.xlu0 %v472, 40
        %v1227 = vpop.permute.xlu0 %1226
        %v1230 = vsel %vm477, %v1173, 0
        %1232 = vmatpush.msra.mxu0 0.0
        %1233 = vmatpush.msra.mxu0 0.0
        %1234 = vmatpush.msra.mxu0 0.0
        %1235 = vmatpush.msra.mxu0 0.0
        %1236 = vmatpush.msra.mxu0 0.0
        %1237 = vmatpush.msra.mxu0 0.0
        %1238 = vmatpush.msra.mxu0 0.0
        %1239 = vmatpush.msra.mxu0 0.0
        %1240 = vmatpush.msra.mxu0 0.0
        %1241 = vmatpush.msra.mxu0 0.0
        %1242 = vmatpush.msra.mxu0 0.0
        %1243 = vmatpush.msra.mxu0 0.0
        %1244 = vmatpush.msra.mxu0 0.0
        %1245 = vmatpush.msra.mxu0 0.0
        %1246 = vmatpush.msra.mxu0 0.0
        %1247 = vmatpush.msra.mxu0 %v1227
        %1248 = vmatmul.f32.gmra.mxu0 %v1230
        %v1249 = vpop.f32.mrf.mxu0
        %v1250 = vadd.f32 0.0, %v1249
        %1251 = vdwg.mxu0
        %1255 = vrot.lane.b32.xlu0 %v808, 8
        %v1256 = vpop.permute.xlu0 %1255
        %1257 = vrot.lane.b32.xlu0 %v834, 8
        %v1258 = vpop.permute.xlu0 %1257
        %1259 = vrot.lane.b32.xlu0 %v860, 8
        %v1260 = vpop.permute.xlu0 %1259
        %1267 = vrot.lane.b32.xlu0 %v1003, 16
        %v1268 = vpop.permute.xlu0 %1267
        %1269 = vrot.lane.b32.xlu0 %v1029, 16
        %v1270 = vpop.permute.xlu0 %1269
        %1271 = vrot.lane.b32.xlu0 %v1055, 16
        %v1272 = vpop.permute.xlu0 %1271
        %1279 = vrot.lane.b32.xlu0 %v1198, 24
        %v1280 = vpop.permute.xlu0 %1279
        %1281 = vrot.lane.b32.xlu0 %v1224, 24
        %v1282 = vpop.permute.xlu0 %1281
        %1283 = vrot.lane.b32.xlu0 %v1250, 24
        %v1284 = vpop.permute.xlu0 %1283
        %v1288 = vsel %vm477, %v613, %v1256
        %v1289 = vsel %vm477, %v639, %v1258
        %v1290 = vsel %vm477, %v665, %v1260
        %vm1291 = vcmask 130048
        %v1292 = vsel %vm1291, %v1288, %v1268
        %v1293 = vsel %vm1291, %v1289, %v1270
        %v1294 = vsel %vm1291, %v1290, %v1272
        %vm1295 = vcmask 195584
        %v1296 = vsel %vm1295, %v1292, %v1280
        %v1297 = vsel %vm1295, %v1293, %v1282
        %v1298 = vsel %vm1295, %v1294, %v1284
        %v1299 = vld [vmem:[#allocation2 + $0x8] sm:$0xff]
        %v1300 = vld [vmem:[#allocation2 + $0x18] sm:$0xff]
        %v1301 = vld [vmem:[#allocation2 + $0x28] sm:$0xff]
        %v1302 = vld [vmem:[#allocation2 + $0x38] sm:$0xff]
        %v1303 = vld [vmem:[%s4 + $0x1] sm:$0x1]
        %v1305 = vperm.slane %v1303, 0
        %v1308 = vsel %vm438, %v1296, 0
        %v1311 = vsel %vm438, %v1297, 0
        %v1314 = vsel %vm438, %v1298, 0
        %1316 = vmatpush.msra.mxu0 0.0
        %1317 = vmatpush.msra.mxu0 0.0
        %1318 = vmatpush.msra.mxu0 0.0
        %1319 = vmatpush.msra.mxu0 0.0
        %1320 = vmatpush.msra.mxu0 0.0
        %1321 = vmatpush.msra.mxu0 0.0
        %1322 = vmatpush.msra.mxu0 0.0
        %1323 = vmatpush.msra.mxu0 0.0
        %1324 = vmatpush.msra.mxu0 0.0
        %1325 = vmatpush.msra.mxu0 0.0
        %1326 = vmatpush.msra.mxu0 0.0
        %1327 = vmatpush.msra.mxu0 0.0
        %1328 = vmatpush.msra.mxu0 %v1302
        %1329 = vmatpush.msra.mxu0 %v1301
        %1330 = vmatpush.msra.mxu0 %v1300
        %1331 = vmatpush.msra.mxu0 %v1299
        %1332 = vmatmul.f32.gmra.mxu0 %v1308
        %v1333 = vpop.f32.mrf.mxu0
        %v1334 = vadd.f32 %v1305, %v1333
        %1335 = vmatmul.f32.gmra.mxu0 %v1311
        %v1336 = vpop.f32.mrf.mxu0
        %v1337 = vadd.f32 %v1305, %v1336
        %1338 = vmatmul.f32.gmra.mxu0 %v1314
        %v1339 = vpop.f32.mrf.mxu0
        %v1340 = vadd.f32 %v1305, %v1339
        %1341 = vdwg.mxu0
        %v1342 = vadd.f32 %v427, %v1334
        %v1343 = vadd.f32 %v428, %v1337
        %v1344 = vadd.f32 %v429, %v1340
        %v1345 = vsel %vm438, %v1342, 0.0
        %1346 = vadd.xlane.f32.xlu0 %v1345
        %v1347 = vpop.xlane.xlu0 %1346
        %v1348 = vsel %vm438, %v1343, 0.0
        %1349 = vadd.xlane.f32.xlu0 %v1348
        %v1350 = vpop.xlane.xlu0 %1349
        %v1351 = vsel %vm438, %v1344, 0.0
        %1352 = vadd.xlane.f32.xlu0 %v1351
        %v1353 = vpop.xlane.xlu0 %1352
        %v1354 = vrcp.pop 32.0
        %v1355 = vmul.f32 32.0, %v1354
        %v1356 = vsub.f32 1.0, %v1355
        %v1357 = vmul.f32 %v1354, %v1356
        %v1358 = vadd.f32 %v1354, %v1357
        %vm1359 = vweird.f32 %v1354
        %v1360 = vsel %vm1359, %v1354, %v1358
        %v1361 = vmul.f32 %v1347, %v1360
        %v1362 = vmul.f32 %v1350, %v1360
        %v1363 = vmul.f32 %v1353, %v1360
        %v1364 = vsub.f32 %v1342, %v1361
        %v1365 = vsub.f32 %v1343, %v1362
        %v1366 = vsub.f32 %v1344, %v1363
        %v1367 = vmul.f32 %v1364, %v1364
        %v1368 = vmul.f32 %v1365, %v1365
        %v1369 = vmul.f32 %v1366, %v1366
        %v1370 = vsel %vm438, %v1367, 0.0
        %1371 = vadd.xlane.f32.xlu0 %v1370
        %v1372 = vpop.xlane.xlu0 %1371
        %v1373 = vsel %vm438, %v1368, 0.0
        %1374 = vadd.xlane.f32.xlu0 %v1373
        %v1375 = vpop.xlane.xlu0 %1374
        %v1376 = vsel %vm438, %v1369, 0.0
        %1377 = vadd.xlane.f32.xlu0 %v1376
        %v1378 = vpop.xlane.xlu0 %1377
        %v1379 = vmul.f32 %v1372, %v1360
        %v1380 = vmul.f32 %v1375, %v1360
        %v1381 = vmul.f32 %v1378, %v1360
        %v1382 = vadd.f32 %v1379, 1e-05
        %v1383 = vadd.f32 %v1380, 1e-05
        %v1384 = vadd.f32 %v1381, 1e-05
        %v1385 = vrsqrt.pop %v1382
        %v1386 = vmul.f32 %v1385, %v1382
        %v1387 = vmul.f32 %v1386, %v1385
        %v1388 = vmul.f32 0.5, %v1387
        %v1389 = vsub.f32 1.5, %v1388
        %v1390 = vmul.f32 %v1385, %v1389
        %vm1391 = vweird.f32 %v1382
        %vm1392 = vweird.f32 %v1385
        %vm1393 = vmor %vm1391, %vm1392
        %v1394 = vsel %vm1393, %v1385, %v1390
        %v1395 = vrsqrt.pop %v1383
        %v1396 = vmul.f32 %v1395, %v1383
        %v1397 = vmul.f32 %v1396, %v1395
        %v1398 = vmul.f32 0.5, %v1397
        %v1399 = vsub.f32 1.5, %v1398
        %v1400 = vmul.f32 %v1395, %v1399
        %vm1401 = vweird.f32 %v1383
        %vm1402 = vweird.f32 %v1395
        %vm1403 = vmor %vm1401, %vm1402
        %v1404 = vsel %vm1403, %v1395, %v1400
        %v1405 = vrsqrt.pop %v1384
        %v1406 = vmul.f32 %v1405, %v1384
        %v1407 = vmul.f32 %v1406, %v1405
        %v1408 = vmul.f32 0.5, %v1407
        %v1409 = vsub.f32 1.5, %v1408
        %v1410 = vmul.f32 %v1405, %v1409
        %vm1411 = vweird.f32 %v1384
        %vm1412 = vweird.f32 %v1405
        %vm1413 = vmor %vm1411, %vm1412
        %v1414 = vsel %vm1413, %v1405, %v1410
        %v1415 = vmul.f32 %v1364, %v1394
        %v1416 = vmul.f32 %v1365, %v1404
        %v1417 = vmul.f32 %v1366, %v1414
        %1418 = vrot.lane.b32.xlu0 %v1305, 96
        %v1419 = vpop.permute.xlu0 %1418
        %v1421 = vmul.f32 %v1415, %v1419
        %v1422 = vmul.f32 %v1416, %v1419
        %v1423 = vmul.f32 %v1417, %v1419
        %1424 = vrot.lane.b32.xlu0 %v1305, 64
        %v1425 = vpop.permute.xlu0 %1424
        %v1427 = vadd.f32 %v1421, %v1425
        %v1428 = vadd.f32 %v1422, %v1425
        %v1429 = vadd.f32 %v1423, %v1425
        %v1430 = vld [vmem:[%s4 + $0x1] sm:$0x3]
        %v1431 = vld [vmem:[#allocation2 + $0x8] sm:$0xff]
        %v1432 = vld [vmem:[#allocation2 + $0x18] sm:$0xff]
        %v1433 = vld [vmem:[#allocation2 + $0x28] sm:$0xff]
        %v1434 = vld [vmem:[#allocation2 + $0x38] sm:$0xff]
        %v1435 = vld [vmem:[#allocation2 + $0x48] sm:$0xff]
        %v1436 = vld [vmem:[#allocation2 + $0x58] sm:$0xff]
        %v1437 = vld [vmem:[#allocation2 + $0x68] sm:$0xff]
        %v1438 = vld [vmem:[#allocation2 + $0x78] sm:$0xff]
        %v1439 = vld [vmem:[%s4 + $0x2] sm:$0x1]
        %v1441 = vperm.slane %v1430, 0
        %v1442 = vperm.slane %v1430, 1
        %1447 = vrot.lane.b32.xlu0 %v1299, 96
        %v1448 = vpop.permute.xlu0 %1447
        %1449 = vrot.lane.b32.xlu0 %v1300, 96
        %v1450 = vpop.permute.xlu0 %1449
        %1451 = vrot.lane.b32.xlu0 %v1301, 96
        %v1452 = vpop.permute.xlu0 %1451
        %1453 = vrot.lane.b32.xlu0 %v1302, 96
        %v1454 = vpop.permute.xlu0 %1453
        %1459 = vrot.lane.b32.xlu0 %v1441, 32
        %v1460 = vpop.permute.xlu0 %1459
        %1461 = vrot.lane.b32.xlu0 %v1442, 32
        %v1462 = vpop.permute.xlu0 %1461
        %v1463 = vsel %vm438, %v1460, %v1462
        %v1466 = vsel %vm438, %v1427, 0
        %v1469 = vsel %vm438, %v1428, 0
        %v1472 = vsel %vm438, %v1429, 0
        %1474 = vmatpush.msra.mxu0 0.0
        %1475 = vmatpush.msra.mxu0 0.0
        %1476 = vmatpush.msra.mxu0 0.0
        %1477 = vmatpush.msra.mxu0 0.0
        %1478 = vmatpush.msra.mxu0 0.0
        %1479 = vmatpush.msra.mxu0 0.0
        %1480 = vmatpush.msra.mxu0 0.0
        %1481 = vmatpush.msra.mxu0 0.0
        %1482 = vmatpush.msra.mxu0 0.0
        %1483 = vmatpush.msra.mxu0 0.0
        %1484 = vmatpush.msra.mxu0 0.0
        %1485 = vmatpush.msra.mxu0 0.0
        %1486 = vmatpush.msra.mxu0 %v1454
        %1487 = vmatpush.msra.mxu0 %v1452
        %1488 = vmatpush.msra.mxu0 %v1450
        %1489 = vmatpush.msra.mxu0 %v1448
        %1490 = vmatmul.f32.gmra.mxu0 %v1466
        %v1491 = vpop.f32.mrf.mxu0
        %v1492 = vadd.f32 %v1463, %v1491
        %1493 = vmatmul.f32.gmra.mxu0 %v1469
        %v1494 = vpop.f32.mrf.mxu0
        %v1495 = vadd.f32 %v1463, %v1494
        %1496 = vmatmul.f32.gmra.mxu0 %v1472
        %v1497 = vpop.f32.mrf.mxu0
        %v1498 = vadd.f32 %v1463, %v1497
        %1499 = vdwg.mxu0
        %v1500 = vmax.f32 %v1492, 0.0
        %v1501 = vmax.f32 %v1495, 0.0
        %v1502 = vmax.f32 %v1498, 0.0
        %v1504 = vperm.slane %v1439, 0
        %1513 = vrot.lane.b32.xlu0 %v1431, 32
        %v1514 = vpop.permute.xlu0 %1513
        %1515 = vrot.lane.b32.xlu0 %v1432, 32
        %v1516 = vpop.permute.xlu0 %1515
        %1517 = vrot.lane.b32.xlu0 %v1433, 32
        %v1518 = vpop.permute.xlu0 %1517
        %1519 = vrot.lane.b32.xlu0 %v1434, 32
        %v1520 = vpop.permute.xlu0 %1519
        %1521 = vrot.lane.b32.xlu0 %v1435, 32
        %v1522 = vpop.permute.xlu0 %1521
        %1523 = vrot.lane.b32.xlu0 %v1436, 32
        %v1524 = vpop.permute.xlu0 %1523
        %1525 = vrot.lane.b32.xlu0 %v1437, 32
        %v1526 = vpop.permute.xlu0 %1525
        %1527 = vrot.lane.b32.xlu0 %v1438, 32
        %v1528 = vpop.permute.xlu0 %1527
        %1537 = vrot.lane.b32.xlu0 %v1504, 96
        %v1538 = vpop.permute.xlu0 %1537
        %vm1540 = vcmask 523264
        %v1542 = vsel %vm1540, %v1500, 0
        %v1545 = vsel %vm1540, %v1501, 0
        %v1548 = vsel %vm1540, %v1502, 0
        %1550 = vmatpush.msra.mxu0 0.0
        %1551 = vmatpush.msra.mxu0 0.0
        %1552 = vmatpush.msra.mxu0 0.0
        %1553 = vmatpush.msra.mxu0 0.0
        %1554 = vmatpush.msra.mxu0 0.0
        %1555 = vmatpush.msra.mxu0 0.0
        %1556 = vmatpush.msra.mxu0 0.0
        %1557 = vmatpush.msra.mxu0 0.0
        %1558 = vmatpush.msra.mxu0 %v1528
        %1559 = vmatpush.msra.mxu0 %v1526
        %1560 = vmatpush.msra.mxu0 %v1524
        %1561 = vmatpush.msra.mxu0 %v1522
        %1562 = vmatpush.msra.mxu0 %v1520
        %1563 = vmatpush.msra.mxu0 %v1518
        %1564 = vmatpush.msra.mxu0 %v1516
        %1565 = vmatpush.msra.mxu0 %v1514
        %1566 = vmatmul.f32.gmra.mxu0 %v1542
        %v1567 = vpop.f32.mrf.mxu0
        %v1568 = vadd.f32 %v1538, %v1567
        %1569 = vmatmul.f32.gmra.mxu0 %v1545
        %v1570 = vpop.f32.mrf.mxu0
        %v1571 = vadd.f32 %v1538, %v1570
        %1572 = vmatmul.f32.gmra.mxu0 %v1548
        %v1573 = vpop.f32.mrf.mxu0
        %v1574 = vadd.f32 %v1538, %v1573
        %1575 = vdwg.mxu0
        %v1576 = vadd.f32 %v1427, %v1568
        %v1577 = vadd.f32 %v1428, %v1571
        %v1578 = vadd.f32 %v1429, %v1574
        %v1579 = vsel %vm438, %v1576, 0.0
        %1580 = vadd.xlane.f32.xlu0 %v1579
        %v1581 = vpop.xlane.xlu0 %1580
        %v1582 = vsel %vm438, %v1577, 0.0
        %1583 = vadd.xlane.f32.xlu0 %v1582
        %v1584 = vpop.xlane.xlu0 %1583
        %v1585 = vsel %vm438, %v1578, 0.0
        %1586 = vadd.xlane.f32.xlu0 %v1585
        %v1587 = vpop.xlane.xlu0 %1586
        %v1588 = vmul.f32 %v1581, %v1360
        %v1589 = vmul.f32 %v1584, %v1360
        %v1590 = vmul.f32 %v1587, %v1360
        %v1591 = vsub.f32 %v1576, %v1588
        %v1592 = vsub.f32 %v1577, %v1589
        %v1593 = vsub.f32 %v1578, %v1590
        %v1594 = vmul.f32 %v1591, %v1591
        %v1595 = vmul.f32 %v1592, %v1592
        %v1596 = vmul.f32 %v1593, %v1593
        %v1597 = vsel %vm438, %v1594, 0.0
        %1598 = vadd.xlane.f32.xlu0 %v1597
        %v1599 = vpop.xlane.xlu0 %1598
        %v1600 = vsel %vm438, %v1595, 0.0
        %1601 = vadd.xlane.f32.xlu0 %v1600
        %v1602 = vpop.xlane.xlu0 %1601
        %v1603 = vsel %vm438, %v1596, 0.0
        %1604 = vadd.xlane.f32.xlu0 %v1603
        %v1605 = vpop.xlane.xlu0 %1604
        %v1606 = vmul.f32 %v1599, %v1360
        %v1607 = vmul.f32 %v1602, %v1360
        %v1608 = vmul.f32 %v1605, %v1360
        %v1609 = vadd.f32 %v1606, 1e-05
        %v1610 = vadd.f32 %v1607, 1e-05
        %v1611 = vadd.f32 %v1608, 1e-05
        %v1612 = vrsqrt.pop %v1609
        %v1613 = vmul.f32 %v1612, %v1609
        %v1614 = vmul.f32 %v1613, %v1612
        %v1615 = vmul.f32 0.5, %v1614
        %v1616 = vsub.f32 1.5, %v1615
        %v1617 = vmul.f32 %v1612, %v1616
        %vm1618 = vweird.f32 %v1609
        %vm1619 = vweird.f32 %v1612
        %vm1620 = vmor %vm1618, %vm1619
        %v1621 = vsel %vm1620, %v1612, %v1617
        %v1622 = vrsqrt.pop %v1610
        %v1623 = vmul.f32 %v1622, %v1610
        %v1624 = vmul.f32 %v1623, %v1622
        %v1625 = vmul.f32 0.5, %v1624
        %v1626 = vsub.f32 1.5, %v1625
        %v1627 = vmul.f32 %v1622, %v1626
        %vm1628 = vweird.f32 %v1610
        %vm1629 = vweird.f32 %v1622
        %vm1630 = vmor %vm1628, %vm1629
        %v1631 = vsel %vm1630, %v1622, %v1627
        %v1632 = vrsqrt.pop %v1611
        %v1633 = vmul.f32 %v1632, %v1611
        %v1634 = vmul.f32 %v1633, %v1632
        %v1635 = vmul.f32 0.5, %v1634
        %v1636 = vsub.f32 1.5, %v1635
        %v1637 = vmul.f32 %v1632, %v1636
        %vm1638 = vweird.f32 %v1611
        %vm1639 = vweird.f32 %v1632
        %vm1640 = vmor %vm1638, %vm1639
        %v1641 = vsel %vm1640, %v1632, %v1637
        %v1642 = vmul.f32 %v1591, %v1621
        %v1643 = vmul.f32 %v1592, %v1631
        %v1644 = vmul.f32 %v1593, %v1641
        %1645 = vrot.lane.b32.xlu0 %v1504, 64
        %v1646 = vpop.permute.xlu0 %1645
        %v1648 = vmul.f32 %v1642, %v1646
        %v1649 = vmul.f32 %v1643, %v1646
        %v1650 = vmul.f32 %v1644, %v1646
        %1651 = vrot.lane.b32.xlu0 %v1504, 32
        %v1652 = vpop.permute.xlu0 %1651
        %v1654 = vadd.f32 %v1648, %v1652
        %v1655 = vadd.f32 %v1649, %v1652
        %v1656 = vadd.f32 %v1650, %v1652
        %s1657 = scalar_lea.vmem [#allocation2], 128
        %v1658 = vld [vmem:[%s1657] sm:$0xff]
        %v1659 = vld [vmem:[%s1657 + $0x10] sm:$0xff]
        %v1660 = vld [vmem:[%s1657 + $0x20] sm:$0xff]
        %v1661 = vld [vmem:[%s1657 + $0x30] sm:$0xff]
        %s1662 = scalar_lea.vmem %s4, 3
        %v1663 = vld [vmem:[%s1662] sm:$0x1]
        %v1665 = vperm.slane %v1663, 0
        %v1668 = vsel %vm438, %v1654, 0
        %v1671 = vsel %vm438, %v1655, 0
        %v1674 = vsel %vm438, %v1656, 0
        %1676 = vmatpush.msra.mxu0 0.0
        %1677 = vmatpush.msra.mxu0 0.0
        %1678 = vmatpush.msra.mxu0 0.0
        %1679 = vmatpush.msra.mxu0 0.0
        %1680 = vmatpush.msra.mxu0 0.0
        %1681 = vmatpush.msra.mxu0 0.0
        %1682 = vmatpush.msra.mxu0 0.0
        %1683 = vmatpush.msra.mxu0 0.0
        %1684 = vmatpush.msra.mxu0 0.0
        %1685 = vmatpush.msra.mxu0 0.0
        %1686 = vmatpush.msra.mxu0 0.0
        %1687 = vmatpush.msra.mxu0 0.0
        %1688 = vmatpush.msra.mxu0 %v1661
        %1689 = vmatpush.msra.mxu0 %v1660
        %1690 = vmatpush.msra.mxu0 %v1659
        %1691 = vmatpush.msra.mxu0 %v1658
        %1692 = vmatmul.f32.gmra.mxu0 %v1668
        %v1693 = vpop.f32.mrf.mxu0
        %v1694 = vadd.f32 %v1665, %v1693
        %1695 = vmatmul.f32.gmra.mxu0 %v1671
        %v1696 = vpop.f32.mrf.mxu0
        %v1697 = vadd.f32 %v1665, %v1696
        %1698 = vmatmul.f32.gmra.mxu0 %v1674
        %v1699 = vpop.f32.mrf.mxu0
        %v1700 = vadd.f32 %v1665, %v1699
        %1701 = vdwg.mxu0
        %1703 = vrot.lane.b32.xlu0 %v1694, 96
        %v1704 = vpop.permute.xlu0 %1703
        %v1705 = vsel %vm477, %v1694, 0
        %v1707 = vsel %vm477, %v1704, 0
        %1709 = vmatpush.xpose.msra.mxu0 0.0
        %1710 = vmatpush.xpose.msra.mxu0 0.0
        %1711 = vmatpush.xpose.msra.mxu0 0.0
        %1712 = vmatpush.xpose.msra.mxu0 0.0
        %1713 = vmatpush.xpose.msra.mxu0 0.0
        %1714 = vmatpush.xpose.msra.mxu0 0.0
        %1715 = vmatpush.xpose.msra.mxu0 0.0
        %1716 = vmatpush.xpose.msra.mxu0 0.0
        %1717 = vmatpush.xpose.msra.mxu0 0.0
        %1718 = vmatpush.xpose.msra.mxu0 0.0
        %1719 = vmatpush.xpose.msra.mxu0 0.0
        %1720 = vmatpush.xpose.msra.mxu0 0.0
        %1721 = vmatpush.xpose.msra.mxu0 0.0
        %1722 = vmatpush.xpose.msra.mxu0 0.0
        %1723 = vmatpush.xpose.msra.mxu0 0.0
        %1724 = vmatpush.xpose.msra.mxu0 %v1707
        %1725 = vmatmul.f32.gmra.mxu0 %v1705
        %v1726 = vpop.f32.mrf.mxu0
        %v1727 = vadd.f32 0.0, %v1726
        %1728 = vdwg.mxu0
        %1730 = vrot.lane.b32.xlu0 %v1697, 96
        %v1731 = vpop.permute.xlu0 %1730
        %v1732 = vsel %vm477, %v1697, 0
        %v1734 = vsel %vm477, %v1731, 0
        %1736 = vmatpush.xpose.msra.mxu0 0.0
        %1737 = vmatpush.xpose.msra.mxu0 0.0
        %1738 = vmatpush.xpose.msra.mxu0 0.0
        %1739 = vmatpush.xpose.msra.mxu0 0.0
        %1740 = vmatpush.xpose.msra.mxu0 0.0
        %1741 = vmatpush.xpose.msra.mxu0 0.0
        %1742 = vmatpush.xpose.msra.mxu0 0.0
        %1743 = vmatpush.xpose.msra.mxu0 0.0
        %1744 = vmatpush.xpose.msra.mxu0 0.0
        %1745 = vmatpush.xpose.msra.mxu0 0.0
        %1746 = vmatpush.xpose.msra.mxu0 0.0
        %1747 = vmatpush.xpose.msra.mxu0 0.0
        %1748 = vmatpush.xpose.msra.mxu0 0.0
        %1749 = vmatpush.xpose.msra.mxu0 0.0
        %1750 = vmatpush.xpose.msra.mxu0 0.0
        %1751 = vmatpush.xpose.msra.mxu0 %v1734
        %1752 = vmatmul.f32.gmra.mxu0 %v1732
        %v1753 = vpop.f32.mrf.mxu0
        %v1754 = vadd.f32 0.0, %v1753
        %1755 = vdwg.mxu0
        %1757 = vrot.lane.b32.xlu0 %v1700, 96
        %v1758 = vpop.permute.xlu0 %1757
        %v1759 = vsel %vm477, %v1700, 0
        %v1761 = vsel %vm477, %v1758, 0
        %1763 = vmatpush.xpose.msra.mxu0 0.0
        %1764 = vmatpush.xpose.msra.mxu0 0.0
        %1765 = vmatpush.xpose.msra.mxu0 0.0
        %1766 = vmatpush.xpose.msra.mxu0 0.0
        %1767 = vmatpush.xpose.msra.mxu0 0.0
        %1768 = vmatpush.xpose.msra.mxu0 0.0
        %1769 = vmatpush.xpose.msra.mxu0 0.0
        %1770 = vmatpush.xpose.msra.mxu0 0.0
        %1771 = vmatpush.xpose.msra.mxu0 0.0
        %1772 = vmatpush.xpose.msra.mxu0 0.0
        %1773 = vmatpush.xpose.msra.mxu0 0.0
        %1774 = vmatpush.xpose.msra.mxu0 0.0
        %1775 = vmatpush.xpose.msra.mxu0 0.0
        %1776 = vmatpush.xpose.msra.mxu0 0.0
        %1777 = vmatpush.xpose.msra.mxu0 0.0
        %1778 = vmatpush.xpose.msra.mxu0 %v1761
        %1779 = vmatmul.f32.gmra.mxu0 %v1759
        %v1780 = vpop.f32.mrf.mxu0
        %v1781 = vadd.f32 0.0, %v1780
        %1782 = vdwg.mxu0
        %v1783 = vsel %vm477, %v1727, -inf
        %1784 = vmax.xlane.f32.xlu0 %v1783
        %v1785 = vpop.xlane.xlu0 %1784
        %v1786 = vsel %vm477, %v1754, -inf
        %1787 = vmax.xlane.f32.xlu0 %v1786
        %v1788 = vpop.xlane.xlu0 %1787
        %v1789 = vsel %vm477, %v1781, -inf
        %1790 = vmax.xlane.f32.xlu0 %v1789
        %v1791 = vpop.xlane.xlu0 %1790
        %v1792 = vsub.f32 %v1727, %v1785
        %v1793 = vsub.f32 %v1754, %v1788
        %v1794 = vsub.f32 %v1781, %v1791
        %v1795 = vmul.f32 %v1792, 1.442695
        %v1796 = vpow.pop %v1795
        %v1797 = vmul.f32 %v1793, 1.442695
        %v1798 = vpow.pop %v1797
        %v1799 = vmul.f32 %v1794, 1.442695
        %v1800 = vpow.pop %v1799
        %v1801 = vsel %vm477, %v1796, 0.0
        %1802 = vadd.xlane.f32.xlu0 %v1801
        %v1803 = vpop.xlane.xlu0 %1802
        %v1804 = vsel %vm477, %v1798, 0.0
        %1805 = vadd.xlane.f32.xlu0 %v1804
        %v1806 = vpop.xlane.xlu0 %1805
        %v1807 = vsel %vm477, %v1800, 0.0
        %1808 = vadd.xlane.f32.xlu0 %v1807
        %v1809 = vpop.xlane.xlu0 %1808
        %v1810 = vrcp.pop %v1803
        %v1811 = vrcp.pop %v1806
        %v1812 = vrcp.pop %v1809
        %v1813 = vmul.f32 %v1796, %v1810
        %v1814 = vmul.f32 %v1798, %v1811
        %v1815 = vmul.f32 %v1800, %v1812
        %1816 = vrot.lane.b32.xlu0 %v1694, 64
        %v1817 = vpop.permute.xlu0 %1816
        %v1820 = vsel %vm477, %v1813, 0
        %1822 = vmatpush.msra.mxu0 0.0
        %1823 = vmatpush.msra.mxu0 0.0
        %1824 = vmatpush.msra.mxu0 0.0
        %1825 = vmatpush.msra.mxu0 0.0
        %1826 = vmatpush.msra.mxu0 0.0
        %1827 = vmatpush.msra.mxu0 0.0
        %1828 = vmatpush.msra.mxu0 0.0
        %1829 = vmatpush.msra.mxu0 0.0
        %1830 = vmatpush.msra.mxu0 0.0
        %1831 = vmatpush.msra.mxu0 0.0
        %1832 = vmatpush.msra.mxu0 0.0
        %1833 = vmatpush.msra.mxu0 0.0
        %1834 = vmatpush.msra.mxu0 0.0
        %1835 = vmatpush.msra.mxu0 0.0
        %1836 = vmatpush.msra.mxu0 0.0
        %1837 = vmatpush.msra.mxu0 %v1817
        %1838 = vmatmul.f32.gmra.mxu0 %v1820
        %v1839 = vpop.f32.mrf.mxu0
        %v1840 = vadd.f32 0.0, %v1839
        %1841 = vdwg.mxu0
        %1842 = vrot.lane.b32.xlu0 %v1697, 64
        %v1843 = vpop.permute.xlu0 %1842
        %v1846 = vsel %vm477, %v1814, 0
        %1848 = vmatpush.msra.mxu0 0.0
        %1849 = vmatpush.msra.mxu0 0.0
        %1850 = vmatpush.msra.mxu0 0.0
        %1851 = vmatpush.msra.mxu0 0.0
        %1852 = vmatpush.msra.mxu0 0.0
        %1853 = vmatpush.msra.mxu0 0.0
        %1854 = vmatpush.msra.mxu0 0.0
        %1855 = vmatpush.msra.mxu0 0.0
        %1856 = vmatpush.msra.mxu0 0.0
        %1857 = vmatpush.msra.mxu0 0.0
        %1858 = vmatpush.msra.mxu0 0.0
        %1859 = vmatpush.msra.mxu0 0.0
        %1860 = vmatpush.msra.mxu0 0.0
        %1861 = vmatpush.msra.mxu0 0.0
        %1862 = vmatpush.msra.mxu0 0.0
        %1863 = vmatpush.msra.mxu0 %v1843
        %1864 = vmatmul.f32.gmra.mxu0 %v1846
        %v1865 = vpop.f32.mrf.mxu0
        %v1866 = vadd.f32 0.0, %v1865
        %1867 = vdwg.mxu0
        %1868 = vrot.lane.b32.xlu0 %v1700, 64
        %v1869 = vpop.permute.xlu0 %1868
        %v1872 = vsel %vm477, %v1815, 0
        %1874 = vmatpush.msra.mxu0 0.0
        %1875 = vmatpush.msra.mxu0 0.0
        %1876 = vmatpush.msra.mxu0 0.0
        %1877 = vmatpush.msra.mxu0 0.0
        %1878 = vmatpush.msra.mxu0 0.0
        %1879 = vmatpush.msra.mxu0 0.0
        %1880 = vmatpush.msra.mxu0 0.0
        %1881 = vmatpush.msra.mxu0 0.0
        %1882 = vmatpush.msra.mxu0 0.0
        %1883 = vmatpush.msra.mxu0 0.0
        %1884 = vmatpush.msra.mxu0 0.0
        %1885 = vmatpush.msra.mxu0 0.0
        %1886 = vmatpush.msra.mxu0 0.0
        %1887 = vmatpush.msra.mxu0 0.0
        %1888 = vmatpush.msra.mxu0 0.0
        %1889 = vmatpush.msra.mxu0 %v1869
        %1890 = vmatmul.f32.gmra.mxu0 %v1872
        %v1891 = vpop.f32.mrf.mxu0
        %v1892 = vadd.f32 0.0, %v1891
        %1893 = vdwg.mxu0
        %1894 = vrot.lane.b32.xlu0 %v1694, 120
        %v1895 = vpop.permute.xlu0 %1894
        %1896 = vrot.lane.b32.xlu0 %v1694, 88
        %v1897 = vpop.permute.xlu0 %1896
        %v1898 = vsel %vm477, %v1895, 0
        %v1900 = vsel %vm477, %v1897, 0
        %1902 = vmatpush.xpose.msra.mxu0 0.0
        %1903 = vmatpush.xpose.msra.mxu0 0.0
        %1904 = vmatpush.xpose.msra.mxu0 0.0
        %1905 = vmatpush.xpose.msra.mxu0 0.0
        %1906 = vmatpush.xpose.msra.mxu0 0.0
        %1907 = vmatpush.xpose.msra.mxu0 0.0
        %1908 = vmatpush.xpose.msra.mxu0 0.0
        %1909 = vmatpush.xpose.msra.mxu0 0.0
        %1910 = vmatpush.xpose.msra.mxu0 0.0
        %1911 = vmatpush.xpose.msra.mxu0 0.0
        %1912 = vmatpush.xpose.msra.mxu0 0.0
        %1913 = vmatpush.xpose.msra.mxu0 0.0
        %1914 = vmatpush.xpose.msra.mxu0 0.0
        %1915 = vmatpush.xpose.msra.mxu0 0.0
        %1916 = vmatpush.xpose.msra.mxu0 0.0
        %1917 = vmatpush.xpose.msra.mxu0 %v1900
        %1918 = vmatmul.f32.gmra.mxu0 %v1898
        %v1919 = vpop.f32.mrf.mxu0
        %v1920 = vadd.f32 0.0, %v1919
        %1921 = vdwg.mxu0
        %1922 = vrot.lane.b32.xlu0 %v1697, 120
        %v1923 = vpop.permute.xlu0 %1922
        %1924 = vrot.lane.b32.xlu0 %v1697, 88
        %v1925 = vpop.permute.xlu0 %1924
        %v1926 = vsel %vm477, %v1923, 0
        %v1928 = vsel %vm477, %v1925, 0
        %1930 = vmatpush.xpose.msra.mxu0 0.0
        %1931 = vmatpush.xpose.msra.mxu0 0.0
        %1932 = vmatpush.xpose.msra.mxu0 0.0
        %1933 = vmatpush.xpose.msra.mxu0 0.0
        %1934 = vmatpush.xpose.msra.mxu0 0.0
        %1935 = vmatpush.xpose.msra.mxu0 0.0
        %1936 = vmatpush.xpose.msra.mxu0 0.0
        %1937 = vmatpush.xpose.msra.mxu0 0.0
        %1938 = vmatpush.xpose.msra.mxu0 0.0
        %1939 = vmatpush.xpose.msra.mxu0 0.0
        %1940 = vmatpush.xpose.msra.mxu0 0.0
        %1941 = vmatpush.xpose.msra.mxu0 0.0
        %1942 = vmatpush.xpose.msra.mxu0 0.0
        %1943 = vmatpush.xpose.msra.mxu0 0.0
        %1944 = vmatpush.xpose.msra.mxu0 0.0
        %1945 = vmatpush.xpose.msra.mxu0 %v1928
        %1946 = vmatmul.f32.gmra.mxu0 %v1926
        %v1947 = vpop.f32.mrf.mxu0
        %v1948 = vadd.f32 0.0, %v1947
        %1949 = vdwg.mxu0
        %1950 = vrot.lane.b32.xlu0 %v1700, 120
        %v1951 = vpop.permute.xlu0 %1950
        %1952 = vrot.lane.b32.xlu0 %v1700, 88
        %v1953 = vpop.permute.xlu0 %1952
        %v1954 = vsel %vm477, %v1951, 0
        %v1956 = vsel %vm477, %v1953, 0
        %1958 = vmatpush.xpose.msra.mxu0 0.0
        %1959 = vmatpush.xpose.msra.mxu0 0.0
        %1960 = vmatpush.xpose.msra.mxu0 0.0
        %1961 = vmatpush.xpose.msra.mxu0 0.0
        %1962 = vmatpush.xpose.msra.mxu0 0.0
        %1963 = vmatpush.xpose.msra.mxu0 0.0
        %1964 = vmatpush.xpose.msra.mxu0 0.0
        %1965 = vmatpush.xpose.msra.mxu0 0.0
        %1966 = vmatpush.xpose.msra.mxu0 0.0
        %1967 = vmatpush.xpose.msra.mxu0 0.0
        %1968 = vmatpush.xpose.msra.mxu0 0.0
        %1969 = vmatpush.xpose.msra.mxu0 0.0
        %1970 = vmatpush.xpose.msra.mxu0 0.0
        %1971 = vmatpush.xpose.msra.mxu0 0.0
        %1972 = vmatpush.xpose.msra.mxu0 0.0
        %1973 = vmatpush.xpose.msra.mxu0 %v1956
        %1974 = vmatmul.f32.gmra.mxu0 %v1954
        %v1975 = vpop.f32.mrf.mxu0
        %v1976 = vadd.f32 0.0, %v1975
        %1977 = vdwg.mxu0
        %v1978 = vsel %vm477, %v1920, -inf
        %1979 = vmax.xlane.f32.xlu0 %v1978
        %v1980 = vpop.xlane.xlu0 %1979
        %v1981 = vsel %vm477, %v1948, -inf
        %1982 = vmax.xlane.f32.xlu0 %v1981
        %v1983 = vpop.xlane.xlu0 %1982
        %v1984 = vsel %vm477, %v1976, -inf
        %1985 = vmax.xlane.f32.xlu0 %v1984
        %v1986 = vpop.xlane.xlu0 %1985
        %v1987 = vsub.f32 %v1920, %v1980
        %v1988 = vsub.f32 %v1948, %v1983
        %v1989 = vsub.f32 %v1976, %v1986
        %v1990 = vmul.f32 %v1987, 1.442695
        %v1991 = vpow.pop %v1990
        %v1992 = vmul.f32 %v1988, 1.442695
        %v1993 = vpow.pop %v1992
        %v1994 = vmul.f32 %v1989, 1.442695
        %v1995 = vpow.pop %v1994
        %v1996 = vsel %vm477, %v1991, 0.0
        %1997 = vadd.xlane.f32.xlu0 %v1996
        %v1998 = vpop.xlane.xlu0 %1997
        %v1999 = vsel %vm477, %v1993, 0.0
        %2000 = vadd.xlane.f32.xlu0 %v1999
        %v2001 = vpop.xlane.xlu0 %2000
        %v2002 = vsel %vm477, %v1995, 0.0
        %2003 = vadd.xlane.f32.xlu0 %v2002
        %v2004 = vpop.xlane.xlu0 %2003
        %v2005 = vrcp.pop %v1998
        %v2006 = vrcp.pop %v2001
        %v2007 = vrcp.pop %v2004
        %v2008 = vmul.f32 %v1991, %v2005
        %v2009 = vmul.f32 %v1993, %v2006
        %v2010 = vmul.f32 %v1995, %v2007
        %2011 = vrot.lane.b32.xlu0 %v1694, 56
        %v2012 = vpop.permute.xlu0 %2011
        %v2015 = vsel %vm477, %v2008, 0
        %2017 = vmatpush.msra.mxu0 0.0
        %2018 = vmatpush.msra.mxu0 0.0
        %2019 = vmatpush.msra.mxu0 0.0
        %2020 = vmatpush.msra.mxu0 0.0
        %2021 = vmatpush.msra.mxu0 0.0
        %2022 = vmatpush.msra.mxu0 0.0
        %2023 = vmatpush.msra.mxu0 0.0
        %2024 = vmatpush.msra.mxu0 0.0
        %2025 = vmatpush.msra.mxu0 0.0
        %2026 = vmatpush.msra.mxu0 0.0
        %2027 = vmatpush.msra.mxu0 0.0
        %2028 = vmatpush.msra.mxu0 0.0
        %2029 = vmatpush.msra.mxu0 0.0
        %2030 = vmatpush.msra.mxu0 0.0
        %2031 = vmatpush.msra.mxu0 0.0
        %2032 = vmatpush.msra.mxu0 %v2012
        %2033 = vmatmul.f32.gmra.mxu0 %v2015
        %v2034 = vpop.f32.mrf.mxu0
        %v2035 = vadd.f32 0.0, %v2034
        %2036 = vdwg.mxu0
        %2037 = vrot.lane.b32.xlu0 %v1697, 56
        %v2038 = vpop.permute.xlu0 %2037
        %v2041 = vsel %vm477, %v2009, 0
        %2043 = vmatpush.msra.mxu0 0.0
        %2044 = vmatpush.msra.mxu0 0.0
        %2045 = vmatpush.msra.mxu0 0.0
        %2046 = vmatpush.msra.mxu0 0.0
        %2047 = vmatpush.msra.mxu0 0.0
        %2048 = vmatpush.msra.mxu0 0.0
        %2049 = vmatpush.msra.mxu0 0.0
        %2050 = vmatpush.msra.mxu0 0.0
        %2051 = vmatpush.msra.mxu0 0.0
        %2052 = vmatpush.msra.mxu0 0.0
        %2053 = vmatpush.msra.mxu0 0.0
        %2054 = vmatpush.msra.mxu0 0.0
        %2055 = vmatpush.msra.mxu0 0.0
        %2056 = vmatpush.msra.mxu0 0.0
        %2057 = vmatpush.msra.mxu0 0.0
        %2058 = vmatpush.msra.mxu0 %v2038
        %2059 = vmatmul.f32.gmra.mxu0 %v2041
        %v2060 = vpop.f32.mrf.mxu0
        %v2061 = vadd.f32 0.0, %v2060
        %2062 = vdwg.mxu0
        %2063 = vrot.lane.b32.xlu0 %v1700, 56
        %v2064 = vpop.permute.xlu0 %2063
        %v2067 = vsel %vm477, %v2010, 0
        %2069 = vmatpush.msra.mxu0 0.0
        %2070 = vmatpush.msra.mxu0 0.0
        %2071 = vmatpush.msra.mxu0 0.0
        %2072 = vmatpush.msra.mxu0 0.0
        %2073 = vmatpush.msra.mxu0 0.0
        %2074 = vmatpush.msra.mxu0 0.0
        %2075 = vmatpush.msra.mxu0 0.0
        %2076 = vmatpush.msra.mxu0 0.0
        %2077 = vmatpush.msra.mxu0 0.0
        %2078 = vmatpush.msra.mxu0 0.0
        %2079 = vmatpush.msra.mxu0 0.0
        %2080 = vmatpush.msra.mxu0 0.0
        %2081 = vmatpush.msra.mxu0 0.0
        %2082 = vmatpush.msra.mxu0 0.0
        %2083 = vmatpush.msra.mxu0 0.0
        %2084 = vmatpush.msra.mxu0 %v2064
        %2085 = vmatmul.f32.gmra.mxu0 %v2067
        %v2086 = vpop.f32.mrf.mxu0
        %v2087 = vadd.f32 0.0, %v2086
        %2088 = vdwg.mxu0
        %2089 = vrot.lane.b32.xlu0 %v1694, 112
        %v2090 = vpop.permute.xlu0 %2089
        %2091 = vrot.lane.b32.xlu0 %v1694, 80
        %v2092 = vpop.permute.xlu0 %2091
        %v2093 = vsel %vm477, %v2090, 0
        %v2095 = vsel %vm477, %v2092, 0
        %2097 = vmatpush.xpose.msra.mxu0 0.0
        %2098 = vmatpush.xpose.msra.mxu0 0.0
        %2099 = vmatpush.xpose.msra.mxu0 0.0
        %2100 = vmatpush.xpose.msra.mxu0 0.0
        %2101 = vmatpush.xpose.msra.mxu0 0.0
        %2102 = vmatpush.xpose.msra.mxu0 0.0
        %2103 = vmatpush.xpose.msra.mxu0 0.0
        %2104 = vmatpush.xpose.msra.mxu0 0.0
        %2105 = vmatpush.xpose.msra.mxu0 0.0
        %2106 = vmatpush.xpose.msra.mxu0 0.0
        %2107 = vmatpush.xpose.msra.mxu0 0.0
        %2108 = vmatpush.xpose.msra.mxu0 0.0
        %2109 = vmatpush.xpose.msra.mxu0 0.0
        %2110 = vmatpush.xpose.msra.mxu0 0.0
        %2111 = vmatpush.xpose.msra.mxu0 0.0
        %2112 = vmatpush.xpose.msra.mxu0 %v2095
        %2113 = vmatmul.f32.gmra.mxu0 %v2093
        %v2114 = vpop.f32.mrf.mxu0
        %v2115 = vadd.f32 0.0, %v2114
        %2116 = vdwg.mxu0
        %2117 = vrot.lane.b32.xlu0 %v1697, 112
        %v2118 = vpop.permute.xlu0 %2117
        %2119 = vrot.lane.b32.xlu0 %v1697, 80
        %v2120 = vpop.permute.xlu0 %2119
        %v2121 = vsel %vm477, %v2118, 0
        %v2123 = vsel %vm477, %v2120, 0
        %2125 = vmatpush.xpose.msra.mxu0 0.0
        %2126 = vmatpush.xpose.msra.mxu0 0.0
        %2127 = vmatpush.xpose.msra.mxu0 0.0
        %2128 = vmatpush.xpose.msra.mxu0 0.0
        %2129 = vmatpush.xpose.msra.mxu0 0.0
        %2130 = vmatpush.xpose.msra.mxu0 0.0
        %2131 = vmatpush.xpose.msra.mxu0 0.0
        %2132 = vmatpush.xpose.msra.mxu0 0.0
        %2133 = vmatpush.xpose.msra.mxu0 0.0
        %2134 = vmatpush.xpose.msra.mxu0 0.0
        %2135 = vmatpush.xpose.msra.mxu0 0.0
        %2136 = vmatpush.xpose.msra.mxu0 0.0
        %2137 = vmatpush.xpose.msra.mxu0 0.0
        %2138 = vmatpush.xpose.msra.mxu0 0.0
        %2139 = vmatpush.xpose.msra.mxu0 0.0
        %2140 = vmatpush.xpose.msra.mxu0 %v2123
        %2141 = vmatmul.f32.gmra.mxu0 %v2121
        %v2142 = vpop.f32.mrf.mxu0
        %v2143 = vadd.f32 0.0, %v2142
        %2144 = vdwg.mxu0
        %2145 = vrot.lane.b32.xlu0 %v1700, 112
        %v2146 = vpop.permute.xlu0 %2145
        %2147 = vrot.lane.b32.xlu0 %v1700, 80
        %v2148 = vpop.permute.xlu0 %2147
        %v2149 = vsel %vm477, %v2146, 0
        %v2151 = vsel %vm477, %v2148, 0
        %2153 = vmatpush.xpose.msra.mxu0 0.0
        %2154 = vmatpush.xpose.msra.mxu0 0.0
        %2155 = vmatpush.xpose.msra.mxu0 0.0
        %2156 = vmatpush.xpose.msra.mxu0 0.0
        %2157 = vmatpush.xpose.msra.mxu0 0.0
        %2158 = vmatpush.xpose.msra.mxu0 0.0
        %2159 = vmatpush.xpose.msra.mxu0 0.0
        %2160 = vmatpush.xpose.msra.mxu0 0.0
        %2161 = vmatpush.xpose.msra.mxu0 0.0
        %2162 = vmatpush.xpose.msra.mxu0 0.0
        %2163 = vmatpush.xpose.msra.mxu0 0.0
        %2164 = vmatpush.xpose.msra.mxu0 0.0
        %2165 = vmatpush.xpose.msra.mxu0 0.0
        %2166 = vmatpush.xpose.msra.mxu0 0.0
        %2167 = vmatpush.xpose.msra.mxu0 0.0
        %2168 = vmatpush.xpose.msra.mxu0 %v2151
        %2169 = vmatmul.f32.gmra.mxu0 %v2149
        %v2170 = vpop.f32.mrf.mxu0
        %v2171 = vadd.f32 0.0, %v2170
        %2172 = vdwg.mxu0
        %v2173 = vsel %vm477, %v2115, -inf
        %2174 = vmax.xlane.f32.xlu0 %v2173
        %v2175 = vpop.xlane.xlu0 %2174
        %v2176 = vsel %vm477, %v2143, -inf
        %2177 = vmax.xlane.f32.xlu0 %v2176
        %v2178 = vpop.xlane.xlu0 %2177
        %v2179 = vsel %vm477, %v2171, -inf
        %2180 = vmax.xlane.f32.xlu0 %v2179
        %v2181 = vpop.xlane.xlu0 %2180
        %v2182 = vsub.f32 %v2115, %v2175
        %v2183 = vsub.f32 %v2143, %v2178
        %v2184 = vsub.f32 %v2171, %v2181
        %v2185 = vmul.f32 %v2182, 1.442695
        %v2186 = vpow.pop %v2185
        %v2187 = vmul.f32 %v2183, 1.442695
        %v2188 = vpow.pop %v2187
        %v2189 = vmul.f32 %v2184, 1.442695
        %v2190 = vpow.pop %v2189
        %v2191 = vsel %vm477, %v2186, 0.0
        %2192 = vadd.xlane.f32.xlu0 %v2191
        %v2193 = vpop.xlane.xlu0 %2192
        %v2194 = vsel %vm477, %v2188, 0.0
        %2195 = vadd.xlane.f32.xlu0 %v2194
        %v2196 = vpop.xlane.xlu0 %2195
        %v2197 = vsel %vm477, %v2190, 0.0
        %2198 = vadd.xlane.f32.xlu0 %v2197
        %v2199 = vpop.xlane.xlu0 %2198
        %v2200 = vrcp.pop %v2193
        %v2201 = vrcp.pop %v2196
        %v2202 = vrcp.pop %v2199
        %v2203 = vmul.f32 %v2186, %v2200
        %v2204 = vmul.f32 %v2188, %v2201
        %v2205 = vmul.f32 %v2190, %v2202
        %2206 = vrot.lane.b32.xlu0 %v1694, 48
        %v2207 = vpop.permute.xlu0 %2206
        %v2210 = vsel %vm477, %v2203, 0
        %2212 = vmatpush.msra.mxu0 0.0
        %2213 = vmatpush.msra.mxu0 0.0
        %2214 = vmatpush.msra.mxu0 0.0
        %2215 = vmatpush.msra.mxu0 0.0
        %2216 = vmatpush.msra.mxu0 0.0
        %2217 = vmatpush.msra.mxu0 0.0
        %2218 = vmatpush.msra.mxu0 0.0
        %2219 = vmatpush.msra.mxu0 0.0
        %2220 = vmatpush.msra.mxu0 0.0
        %2221 = vmatpush.msra.mxu0 0.0
        %2222 = vmatpush.msra.mxu0 0.0
        %2223 = vmatpush.msra.mxu0 0.0
        %2224 = vmatpush.msra.mxu0 0.0
        %2225 = vmatpush.msra.mxu0 0.0
        %2226 = vmatpush.msra.mxu0 0.0
        %2227 = vmatpush.msra.mxu0 %v2207
        %2228 = vmatmul.f32.gmra.mxu0 %v2210
        %v2229 = vpop.f32.mrf.mxu0
        %v2230 = vadd.f32 0.0, %v2229
        %2231 = vdwg.mxu0
        %2232 = vrot.lane.b32.xlu0 %v1697, 48
        %v2233 = vpop.permute.xlu0 %2232
        %v2236 = vsel %vm477, %v2204, 0
        %2238 = vmatpush.msra.mxu0 0.0
        %2239 = vmatpush.msra.mxu0 0.0
        %2240 = vmatpush.msra.mxu0 0.0
        %2241 = vmatpush.msra.mxu0 0.0
        %2242 = vmatpush.msra.mxu0 0.0
        %2243 = vmatpush.msra.mxu0 0.0
        %2244 = vmatpush.msra.mxu0 0.0
        %2245 = vmatpush.msra.mxu0 0.0
        %2246 = vmatpush.msra.mxu0 0.0
        %2247 = vmatpush.msra.mxu0 0.0
        %2248 = vmatpush.msra.mxu0 0.0
        %2249 = vmatpush.msra.mxu0 0.0
        %2250 = vmatpush.msra.mxu0 0.0
        %2251 = vmatpush.msra.mxu0 0.0
        %2252 = vmatpush.msra.mxu0 0.0
        %2253 = vmatpush.msra.mxu0 %v2233
        %2254 = vmatmul.f32.gmra.mxu0 %v2236
        %v2255 = vpop.f32.mrf.mxu0
        %v2256 = vadd.f32 0.0, %v2255
        %2257 = vdwg.mxu0
        %2258 = vrot.lane.b32.xlu0 %v1700, 48
        %v2259 = vpop.permute.xlu0 %2258
        %v2262 = vsel %vm477, %v2205, 0
        %2264 = vmatpush.msra.mxu0 0.0
        %2265 = vmatpush.msra.mxu0 0.0
        %2266 = vmatpush.msra.mxu0 0.0
        %2267 = vmatpush.msra.mxu0 0.0
        %2268 = vmatpush.msra.mxu0 0.0
        %2269 = vmatpush.msra.mxu0 0.0
        %2270 = vmatpush.msra.mxu0 0.0
        %2271 = vmatpush.msra.mxu0 0.0
        %2272 = vmatpush.msra.mxu0 0.0
        %2273 = vmatpush.msra.mxu0 0.0
        %2274 = vmatpush.msra.mxu0 0.0
        %2275 = vmatpush.msra.mxu0 0.0
        %2276 = vmatpush.msra.mxu0 0.0
        %2277 = vmatpush.msra.mxu0 0.0
        %2278 = vmatpush.msra.mxu0 0.0
        %2279 = vmatpush.msra.mxu0 %v2259
        %2280 = vmatmul.f32.gmra.mxu0 %v2262
        %v2281 = vpop.f32.mrf.mxu0
        %v2282 = vadd.f32 0.0, %v2281
        %2283 = vdwg.mxu0
        %2284 = vrot.lane.b32.xlu0 %v1694, 104
        %v2285 = vpop.permute.xlu0 %2284
        %2286 = vrot.lane.b32.xlu0 %v1694, 72
        %v2287 = vpop.permute.xlu0 %2286
        %v2288 = vsel %vm477, %v2285, 0
        %v2290 = vsel %vm477, %v2287, 0
        %2292 = vmatpush.xpose.msra.mxu0 0.0
        %2293 = vmatpush.xpose.msra.mxu0 0.0
        %2294 = vmatpush.xpose.msra.mxu0 0.0
        %2295 = vmatpush.xpose.msra.mxu0 0.0
        %2296 = vmatpush.xpose.msra.mxu0 0.0
        %2297 = vmatpush.xpose.msra.mxu0 0.0
        %2298 = vmatpush.xpose.msra.mxu0 0.0
        %2299 = vmatpush.xpose.msra.mxu0 0.0
        %2300 = vmatpush.xpose.msra.mxu0 0.0
        %2301 = vmatpush.xpose.msra.mxu0 0.0
        %2302 = vmatpush.xpose.msra.mxu0 0.0
        %2303 = vmatpush.xpose.msra.mxu0 0.0
        %2304 = vmatpush.xpose.msra.mxu0 0.0
        %2305 = vmatpush.xpose.msra.mxu0 0.0
        %2306 = vmatpush.xpose.msra.mxu0 0.0
        %2307 = vmatpush.xpose.msra.mxu0 %v2290
        %2308 = vmatmul.f32.gmra.mxu0 %v2288
        %v2309 = vpop.f32.mrf.mxu0
        %v2310 = vadd.f32 0.0, %v2309
        %2311 = vdwg.mxu0
        %2312 = vrot.lane.b32.xlu0 %v1697, 104
        %v2313 = vpop.permute.xlu0 %2312
        %2314 = vrot.lane.b32.xlu0 %v1697, 72
        %v2315 = vpop.permute.xlu0 %2314
        %v2316 = vsel %vm477, %v2313, 0
        %v2318 = vsel %vm477, %v2315, 0
        %2320 = vmatpush.xpose.msra.mxu0 0.0
        %2321 = vmatpush.xpose.msra.mxu0 0.0
        %2322 = vmatpush.xpose.msra.mxu0 0.0
        %2323 = vmatpush.xpose.msra.mxu0 0.0
        %2324 = vmatpush.xpose.msra.mxu0 0.0
        %2325 = vmatpush.xpose.msra.mxu0 0.0
        %2326 = vmatpush.xpose.msra.mxu0 0.0
        %2327 = vmatpush.xpose.msra.mxu0 0.0
        %2328 = vmatpush.xpose.msra.mxu0 0.0
        %2329 = vmatpush.xpose.msra.mxu0 0.0
        %2330 = vmatpush.xpose.msra.mxu0 0.0
        %2331 = vmatpush.xpose.msra.mxu0 0.0
        %2332 = vmatpush.xpose.msra.mxu0 0.0
        %2333 = vmatpush.xpose.msra.mxu0 0.0
        %2334 = vmatpush.xpose.msra.mxu0 0.0
        %2335 = vmatpush.xpose.msra.mxu0 %v2318
        %2336 = vmatmul.f32.gmra.mxu0 %v2316
        %v2337 = vpop.f32.mrf.mxu0
        %v2338 = vadd.f32 0.0, %v2337
        %2339 = vdwg.mxu0
        %2340 = vrot.lane.b32.xlu0 %v1700, 104
        %v2341 = vpop.permute.xlu0 %2340
        %2342 = vrot.lane.b32.xlu0 %v1700, 72
        %v2343 = vpop.permute.xlu0 %2342
        %v2344 = vsel %vm477, %v2341, 0
        %v2346 = vsel %vm477, %v2343, 0
        %2348 = vmatpush.xpose.msra.mxu0 0.0
        %2349 = vmatpush.xpose.msra.mxu0 0.0
        %2350 = vmatpush.xpose.msra.mxu0 0.0
        %2351 = vmatpush.xpose.msra.mxu0 0.0
        %2352 = vmatpush.xpose.msra.mxu0 0.0
        %2353 = vmatpush.xpose.msra.mxu0 0.0
        %2354 = vmatpush.xpose.msra.mxu0 0.0
        %2355 = vmatpush.xpose.msra.mxu0 0.0
        %2356 = vmatpush.xpose.msra.mxu0 0.0
        %2357 = vmatpush.xpose.msra.mxu0 0.0
        %2358 = vmatpush.xpose.msra.mxu0 0.0
        %2359 = vmatpush.xpose.msra.mxu0 0.0
        %2360 = vmatpush.xpose.msra.mxu0 0.0
        %2361 = vmatpush.xpose.msra.mxu0 0.0
        %2362 = vmatpush.xpose.msra.mxu0 0.0
        %2363 = vmatpush.xpose.msra.mxu0 %v2346
        %2364 = vmatmul.f32.gmra.mxu0 %v2344
        %v2365 = vpop.f32.mrf.mxu0
        %v2366 = vadd.f32 0.0, %v2365
        %2367 = vdwg.mxu0
        %v2368 = vsel %vm477, %v2310, -inf
        %2369 = vmax.xlane.f32.xlu0 %v2368
        %v2370 = vpop.xlane.xlu0 %2369
        %v2371 = vsel %vm477, %v2338, -inf
        %2372 = vmax.xlane.f32.xlu0 %v2371
        %v2373 = vpop.xlane.xlu0 %2372
        %v2374 = vsel %vm477, %v2366, -inf
        %2375 = vmax.xlane.f32.xlu0 %v2374
        %v2376 = vpop.xlane.xlu0 %2375
        %v2377 = vsub.f32 %v2310, %v2370
        %v2378 = vsub.f32 %v2338, %v2373
        %v2379 = vsub.f32 %v2366, %v2376
        %v2380 = vmul.f32 %v2377, 1.442695
        %v2381 = vpow.pop %v2380
        %v2382 = vmul.f32 %v2378, 1.442695
        %v2383 = vpow.pop %v2382
        %v2384 = vmul.f32 %v2379, 1.442695
        %v2385 = vpow.pop %v2384
        %v2386 = vsel %vm477, %v2381, 0.0
        %2387 = vadd.xlane.f32.xlu0 %v2386
        %v2388 = vpop.xlane.xlu0 %2387
        %v2389 = vsel %vm477, %v2383, 0.0
        %2390 = vadd.xlane.f32.xlu0 %v2389
        %v2391 = vpop.xlane.xlu0 %2390
        %v2392 = vsel %vm477, %v2385, 0.0
        %2393 = vadd.xlane.f32.xlu0 %v2392
        %v2394 = vpop.xlane.xlu0 %2393
        %v2395 = vrcp.pop %v2388
        %v2396 = vrcp.pop %v2391
        %v2397 = vrcp.pop %v2394
        %v2398 = vmul.f32 %v2381, %v2395
        %v2399 = vmul.f32 %v2383, %v2396
        %v2400 = vmul.f32 %v2385, %v2397
        %2401 = vrot.lane.b32.xlu0 %v1694, 40
        %v2402 = vpop.permute.xlu0 %2401
        %v2405 = vsel %vm477, %v2398, 0
        %2407 = vmatpush.msra.mxu0 0.0
        %2408 = vmatpush.msra.mxu0 0.0
        %2409 = vmatpush.msra.mxu0 0.0
        %2410 = vmatpush.msra.mxu0 0.0
        %2411 = vmatpush.msra.mxu0 0.0
        %2412 = vmatpush.msra.mxu0 0.0
        %2413 = vmatpush.msra.mxu0 0.0
        %2414 = vmatpush.msra.mxu0 0.0
        %2415 = vmatpush.msra.mxu0 0.0
        %2416 = vmatpush.msra.mxu0 0.0
        %2417 = vmatpush.msra.mxu0 0.0
        %2418 = vmatpush.msra.mxu0 0.0
        %2419 = vmatpush.msra.mxu0 0.0
        %2420 = vmatpush.msra.mxu0 0.0
        %2421 = vmatpush.msra.mxu0 0.0
        %2422 = vmatpush.msra.mxu0 %v2402
        %2423 = vmatmul.f32.gmra.mxu0 %v2405
        %v2424 = vpop.f32.mrf.mxu0
        %v2425 = vadd.f32 0.0, %v2424
        %2426 = vdwg.mxu0
        %2427 = vrot.lane.b32.xlu0 %v1697, 40
        %v2428 = vpop.permute.xlu0 %2427
        %v2431 = vsel %vm477, %v2399, 0
        %2433 = vmatpush.msra.mxu0 0.0
        %2434 = vmatpush.msra.mxu0 0.0
        %2435 = vmatpush.msra.mxu0 0.0
        %2436 = vmatpush.msra.mxu0 0.0
        %2437 = vmatpush.msra.mxu0 0.0
        %2438 = vmatpush.msra.mxu0 0.0
        %2439 = vmatpush.msra.mxu0 0.0
        %2440 = vmatpush.msra.mxu0 0.0
        %2441 = vmatpush.msra.mxu0 0.0
        %2442 = vmatpush.msra.mxu0 0.0
        %2443 = vmatpush.msra.mxu0 0.0
        %2444 = vmatpush.msra.mxu0 0.0
        %2445 = vmatpush.msra.mxu0 0.0
        %2446 = vmatpush.msra.mxu0 0.0
        %2447 = vmatpush.msra.mxu0 0.0
        %2448 = vmatpush.msra.mxu0 %v2428
        %2449 = vmatmul.f32.gmra.mxu0 %v2431
        %v2450 = vpop.f32.mrf.mxu0
        %v2451 = vadd.f32 0.0, %v2450
        %2452 = vdwg.mxu0
        %2453 = vrot.lane.b32.xlu0 %v1700, 40
        %v2454 = vpop.permute.xlu0 %2453
        %v2457 = vsel %vm477, %v2400, 0
        %2459 = vmatpush.msra.mxu0 0.0
        %2460 = vmatpush.msra.mxu0 0.0
        %2461 = vmatpush.msra.mxu0 0.0
        %2462 = vmatpush.msra.mxu0 0.0
        %2463 = vmatpush.msra.mxu0 0.0
        %2464 = vmatpush.msra.mxu0 0.0
        %2465 = vmatpush.msra.mxu0 0.0
        %2466 = vmatpush.msra.mxu0 0.0
        %2467 = vmatpush.msra.mxu0 0.0
        %2468 = vmatpush.msra.mxu0 0.0
        %2469 = vmatpush.msra.mxu0 0.0
        %2470 = vmatpush.msra.mxu0 0.0
        %2471 = vmatpush.msra.mxu0 0.0
        %2472 = vmatpush.msra.mxu0 0.0
        %2473 = vmatpush.msra.mxu0 0.0
        %2474 = vmatpush.msra.mxu0 %v2454
        %2475 = vmatmul.f32.gmra.mxu0 %v2457
        %v2476 = vpop.f32.mrf.mxu0
        %v2477 = vadd.f32 0.0, %v2476
        %2478 = vdwg.mxu0
        %2482 = vrot.lane.b32.xlu0 %v2035, 8
        %v2483 = vpop.permute.xlu0 %2482
        %2484 = vrot.lane.b32.xlu0 %v2061, 8
        %v2485 = vpop.permute.xlu0 %2484
        %2486 = vrot.lane.b32.xlu0 %v2087, 8
        %v2487 = vpop.permute.xlu0 %2486
        %2494 = vrot.lane.b32.xlu0 %v2230, 16
        %v2495 = vpop.permute.xlu0 %2494
        %2496 = vrot.lane.b32.xlu0 %v2256, 16
        %v2497 = vpop.permute.xlu0 %2496
        %2498 = vrot.lane.b32.xlu0 %v2282, 16
        %v2499 = vpop.permute.xlu0 %2498
        %2506 = vrot.lane.b32.xlu0 %v2425, 24
        %v2507 = vpop.permute.xlu0 %2506
        %2508 = vrot.lane.b32.xlu0 %v2451, 24
        %v2509 = vpop.permute.xlu0 %2508
        %2510 = vrot.lane.b32.xlu0 %v2477, 24
        %v2511 = vpop.permute.xlu0 %2510
        %v2515 = vsel %vm477, %v1840, %v2483
        %v2516 = vsel %vm477, %v1866, %v2485
        %v2517 = vsel %vm477, %v1892, %v2487
        %v2518 = vsel %vm1291, %v2515, %v2495
        %v2519 = vsel %vm1291, %v2516, %v2497
        %v2520 = vsel %vm1291, %v2517, %v2499
        %v2521 = vsel %vm1295, %v2518, %v2507
        %v2522 = vsel %vm1295, %v2519, %v2509
        %v2523 = vsel %vm1295, %v2520, %v2511
        %v2524 = vld [vmem:[%s1657 + $0x8] sm:$0xff]
        %v2525 = vld [vmem:[%s1657 + $0x18] sm:$0xff]
        %v2526 = vld [vmem:[%s1657 + $0x28] sm:$0xff]
        %v2527 = vld [vmem:[%s1657 + $0x38] sm:$0xff]
        %v2528 = vld [vmem:[%s1662 + $0x1] sm:$0x1]
        %v2530 = vperm.slane %v2528, 0
        %v2533 = vsel %vm438, %v2521, 0
        %v2536 = vsel %vm438, %v2522, 0
        %v2539 = vsel %vm438, %v2523, 0
        %2541 = vmatpush.msra.mxu0 0.0
        %2542 = vmatpush.msra.mxu0 0.0
        %2543 = vmatpush.msra.mxu0 0.0
        %2544 = vmatpush.msra.mxu0 0.0
        %2545 = vmatpush.msra.mxu0 0.0
        %2546 = vmatpush.msra.mxu0 0.0
        %2547 = vmatpush.msra.mxu0 0.0
        %2548 = vmatpush.msra.mxu0 0.0
        %2549 = vmatpush.msra.mxu0 0.0
        %2550 = vmatpush.msra.mxu0 0.0
        %2551 = vmatpush.msra.mxu0 0.0
        %2552 = vmatpush.msra.mxu0 0.0
        %2553 = vmatpush.msra.mxu0 %v2527
        %2554 = vmatpush.msra.mxu0 %v2526
        %2555 = vmatpush.msra.mxu0 %v2525
        %2556 = vmatpush.msra.mxu0 %v2524
        %2557 = vmatmul.f32.gmra.mxu0 %v2533
        %v2558 = vpop.f32.mrf.mxu0
        %v2559 = vadd.f32 %v2530, %v2558
        %2560 = vmatmul.f32.gmra.mxu0 %v2536
        %v2561 = vpop.f32.mrf.mxu0
        %v2562 = vadd.f32 %v2530, %v2561
        %2563 = vmatmul.f32.gmra.mxu0 %v2539
        %v2564 = vpop.f32.mrf.mxu0
        %v2565 = vadd.f32 %v2530, %v2564
        %2566 = vdwg.mxu0
        %v2567 = vadd.f32 %v1654, %v2559
        %v2568 = vadd.f32 %v1655, %v2562
        %v2569 = vadd.f32 %v1656, %v2565
        %v2570 = vsel %vm438, %v2567, 0.0
        %2571 = vadd.xlane.f32.xlu0 %v2570
        %v2572 = vpop.xlane.xlu0 %2571
        %v2573 = vsel %vm438, %v2568, 0.0
        %2574 = vadd.xlane.f32.xlu0 %v2573
        %v2575 = vpop.xlane.xlu0 %2574
        %v2576 = vsel %vm438, %v2569, 0.0
        %2577 = vadd.xlane.f32.xlu0 %v2576
        %v2578 = vpop.xlane.xlu0 %2577
        %v2579 = vmul.f32 %v2572, %v1360
        %v2580 = vmul.f32 %v2575, %v1360
        %v2581 = vmul.f32 %v2578, %v1360
        %v2582 = vsub.f32 %v2567, %v2579
        %v2583 = vsub.f32 %v2568, %v2580
        %v2584 = vsub.f32 %v2569, %v2581
        %v2585 = vmul.f32 %v2582, %v2582
        %v2586 = vmul.f32 %v2583, %v2583
        %v2587 = vmul.f32 %v2584, %v2584
        %v2588 = vsel %vm438, %v2585, 0.0
        %2589 = vadd.xlane.f32.xlu0 %v2588
        %v2590 = vpop.xlane.xlu0 %2589
        %v2591 = vsel %vm438, %v2586, 0.0
        %2592 = vadd.xlane.f32.xlu0 %v2591
        %v2593 = vpop.xlane.xlu0 %2592
        %v2594 = vsel %vm438, %v2587, 0.0
        %2595 = vadd.xlane.f32.xlu0 %v2594
        %v2596 = vpop.xlane.xlu0 %2595
        %v2597 = vmul.f32 %v2590, %v1360
        %v2598 = vmul.f32 %v2593, %v1360
        %v2599 = vmul.f32 %v2596, %v1360
        %v2600 = vadd.f32 %v2597, 1e-05
        %v2601 = vadd.f32 %v2598, 1e-05
        %v2602 = vadd.f32 %v2599, 1e-05
        %v2603 = vrsqrt.pop %v2600
        %v2604 = vmul.f32 %v2603, %v2600
        %v2605 = vmul.f32 %v2604, %v2603
        %v2606 = vmul.f32 0.5, %v2605
        %v2607 = vsub.f32 1.5, %v2606
        %v2608 = vmul.f32 %v2603, %v2607
        %vm2609 = vweird.f32 %v2600
        %vm2610 = vweird.f32 %v2603
        %vm2611 = vmor %vm2609, %vm2610
        %v2612 = vsel %vm2611, %v2603, %v2608
        %v2613 = vrsqrt.pop %v2601
        %v2614 = vmul.f32 %v2613, %v2601
        %v2615 = vmul.f32 %v2614, %v2613
        %v2616 = vmul.f32 0.5, %v2615
        %v2617 = vsub.f32 1.5, %v2616
        %v2618 = vmul.f32 %v2613, %v2617
        %vm2619 = vweird.f32 %v2601
        %vm2620 = vweird.f32 %v2613
        %vm2621 = vmor %vm2619, %vm2620
        %v2622 = vsel %vm2621, %v2613, %v2618
        %v2623 = vrsqrt.pop %v2602
        %v2624 = vmul.f32 %v2623, %v2602
        %v2625 = vmul.f32 %v2624, %v2623
        %v2626 = vmul.f32 0.5, %v2625
        %v2627 = vsub.f32 1.5, %v2626
        %v2628 = vmul.f32 %v2623, %v2627
        %vm2629 = vweird.f32 %v2602
        %vm2630 = vweird.f32 %v2623
        %vm2631 = vmor %vm2629, %vm2630
        %v2632 = vsel %vm2631, %v2623, %v2628
        %v2633 = vmul.f32 %v2582, %v2612
        %v2634 = vmul.f32 %v2583, %v2622
        %v2635 = vmul.f32 %v2584, %v2632
        %2636 = vrot.lane.b32.xlu0 %v2530, 96
        %v2637 = vpop.permute.xlu0 %2636
        %v2639 = vmul.f32 %v2633, %v2637
        %v2640 = vmul.f32 %v2634, %v2637
        %v2641 = vmul.f32 %v2635, %v2637
        %2642 = vrot.lane.b32.xlu0 %v2530, 64
        %v2643 = vpop.permute.xlu0 %2642
        %v2645 = vadd.f32 %v2639, %v2643
        %v2646 = vadd.f32 %v2640, %v2643
        %v2647 = vadd.f32 %v2641, %v2643
        %v2648 = vld [vmem:[%s1662 + $0x1] sm:$0x3]
        %v2649 = vld [vmem:[%s1657 + $0x8] sm:$0xff]
        %v2650 = vld [vmem:[%s1657 + $0x18] sm:$0xff]
        %v2651 = vld [vmem:[%s1657 + $0x28] sm:$0xff]
        %v2652 = vld [vmem:[%s1657 + $0x38] sm:$0xff]
        %v2653 = vld [vmem:[%s1657 + $0x48] sm:$0xff]
        %v2654 = vld [vmem:[%s1657 + $0x58] sm:$0xff]
        %v2655 = vld [vmem:[%s1657 + $0x68] sm:$0xff]
        %v2656 = vld [vmem:[%s1657 + $0x78] sm:$0xff]
        %v2657 = vld [vmem:[%s1662 + $0x2] sm:$0x1]
        %v2659 = vperm.slane %v2648, 0
        %v2660 = vperm.slane %v2648, 1
        %2665 = vrot.lane.b32.xlu0 %v2524, 96
        %v2666 = vpop.permute.xlu0 %2665
        %2667 = vrot.lane.b32.xlu0 %v2525, 96
        %v2668 = vpop.permute.xlu0 %2667
        %2669 = vrot.lane.b32.xlu0 %v2526, 96
        %v2670 = vpop.permute.xlu0 %2669
        %2671 = vrot.lane.b32.xlu0 %v2527, 96
        %v2672 = vpop.permute.xlu0 %2671
        %2677 = vrot.lane.b32.xlu0 %v2659, 32
        %v2678 = vpop.permute.xlu0 %2677
        %2679 = vrot.lane.b32.xlu0 %v2660, 32
        %v2680 = vpop.permute.xlu0 %2679
        %v2681 = vsel %vm438, %v2678, %v2680
        %v2684 = vsel %vm438, %v2645, 0
        %v2687 = vsel %vm438, %v2646, 0
        %v2690 = vsel %vm438, %v2647, 0
        %2692 = vmatpush.msra.mxu0 0.0
        %2693 = vmatpush.msra.mxu0 0.0
        %2694 = vmatpush.msra.mxu0 0.0
        %2695 = vmatpush.msra.mxu0 0.0
        %2696 = vmatpush.msra.mxu0 0.0
        %2697 = vmatpush.msra.mxu0 0.0
        %2698 = vmatpush.msra.mxu0 0.0
        %2699 = vmatpush.msra.mxu0 0.0
        %2700 = vmatpush.msra.mxu0 0.0
        %2701 = vmatpush.msra.mxu0 0.0
        %2702 = vmatpush.msra.mxu0 0.0
        %2703 = vmatpush.msra.mxu0 0.0
        %2704 = vmatpush.msra.mxu0 %v2672
        %2705 = vmatpush.msra.mxu0 %v2670
        %2706 = vmatpush.msra.mxu0 %v2668
        %2707 = vmatpush.msra.mxu0 %v2666
        %2708 = vmatmul.f32.gmra.mxu0 %v2684
        %v2709 = vpop.f32.mrf.mxu0
        %v2710 = vadd.f32 %v2681, %v2709
        %2711 = vmatmul.f32.gmra.mxu0 %v2687
        %v2712 = vpop.f32.mrf.mxu0
        %v2713 = vadd.f32 %v2681, %v2712
        %2714 = vmatmul.f32.gmra.mxu0 %v2690
        %v2715 = vpop.f32.mrf.mxu0
        %v2716 = vadd.f32 %v2681, %v2715
        %2717 = vdwg.mxu0
        %v2718 = vmax.f32 %v2710, 0.0
        %v2719 = vmax.f32 %v2713, 0.0
        %v2720 = vmax.f32 %v2716, 0.0
        %v2722 = vperm.slane %v2657, 0
        %2731 = vrot.lane.b32.xlu0 %v2649, 32
        %v2732 = vpop.permute.xlu0 %2731
        %2733 = vrot.lane.b32.xlu0 %v2650, 32
        %v2734 = vpop.permute.xlu0 %2733
        %2735 = vrot.lane.b32.xlu0 %v2651, 32
        %v2736 = vpop.permute.xlu0 %2735
        %2737 = vrot.lane.b32.xlu0 %v2652, 32
        %v2738 = vpop.permute.xlu0 %2737
        %2739 = vrot.lane.b32.xlu0 %v2653, 32
        %v2740 = vpop.permute.xlu0 %2739
        %2741 = vrot.lane.b32.xlu0 %v2654, 32
        %v2742 = vpop.permute.xlu0 %2741
        %2743 = vrot.lane.b32.xlu0 %v2655, 32
        %v2744 = vpop.permute.xlu0 %2743
        %2745 = vrot.lane.b32.xlu0 %v2656, 32
        %v2746 = vpop.permute.xlu0 %2745
        %2755 = vrot.lane.b32.xlu0 %v2722, 96
        %v2756 = vpop.permute.xlu0 %2755
        %v2759 = vsel %vm1540, %v2718, 0
        %v2762 = vsel %vm1540, %v2719, 0
        %v2765 = vsel %vm1540, %v2720, 0
        %2767 = vmatpush.msra.mxu0 0.0
        %2768 = vmatpush.msra.mxu0 0.0
        %2769 = vmatpush.msra.mxu0 0.0
        %2770 = vmatpush.msra.mxu0 0.0
        %2771 = vmatpush.msra.mxu0 0.0
        %2772 = vmatpush.msra.mxu0 0.0
        %2773 = vmatpush.msra.mxu0 0.0
        %2774 = vmatpush.msra.mxu0 0.0
        %2775 = vmatpush.msra.mxu0 %v2746
        %2776 = vmatpush.msra.mxu0 %v2744
        %2777 = vmatpush.msra.mxu0 %v2742
        %2778 = vmatpush.msra.mxu0 %v2740
        %2779 = vmatpush.msra.mxu0 %v2738
        %2780 = vmatpush.msra.mxu0 %v2736
        %2781 = vmatpush.msra.mxu0 %v2734
        %2782 = vmatpush.msra.mxu0 %v2732
        %2783 = vmatmul.f32.gmra.mxu0 %v2759
        %v2784 = vpop.f32.mrf.mxu0
        %v2785 = vadd.f32 %v2756, %v2784
        %2786 = vmatmul.f32.gmra.mxu0 %v2762
        %v2787 = vpop.f32.mrf.mxu0
        %v2788 = vadd.f32 %v2756, %v2787
        %2789 = vmatmul.f32.gmra.mxu0 %v2765
        %v2790 = vpop.f32.mrf.mxu0
        %v2791 = vadd.f32 %v2756, %v2790
        %2792 = vdwg.mxu0
        %v2793 = vadd.f32 %v2645, %v2785
        %v2794 = vadd.f32 %v2646, %v2788
        %v2795 = vadd.f32 %v2647, %v2791
        %v2796 = vsel %vm438, %v2793, 0.0
        %2797 = vadd.xlane.f32.xlu0 %v2796
        %v2798 = vpop.xlane.xlu0 %2797
        %v2799 = vsel %vm438, %v2794, 0.0
        %2800 = vadd.xlane.f32.xlu0 %v2799
        %v2801 = vpop.xlane.xlu0 %2800
        %v2802 = vsel %vm438, %v2795, 0.0
        %2803 = vadd.xlane.f32.xlu0 %v2802
        %v2804 = vpop.xlane.xlu0 %2803
        %v2805 = vmul.f32 %v2798, %v1360
        %v2806 = vmul.f32 %v2801, %v1360
        %v2807 = vmul.f32 %v2804, %v1360
        %v2808 = vsub.f32 %v2793, %v2805
        %v2809 = vsub.f32 %v2794, %v2806
        %v2810 = vsub.f32 %v2795, %v2807
        %v2811 = vmul.f32 %v2808, %v2808
        %v2812 = vmul.f32 %v2809, %v2809
        %v2813 = vmul.f32 %v2810, %v2810
        %v2814 = vsel %vm438, %v2811, 0.0
        %2815 = vadd.xlane.f32.xlu0 %v2814
        %v2816 = vpop.xlane.xlu0 %2815
        %v2817 = vsel %vm438, %v2812, 0.0
        %2818 = vadd.xlane.f32.xlu0 %v2817
        %v2819 = vpop.xlane.xlu0 %2818
        %v2820 = vsel %vm438, %v2813, 0.0
        %2821 = vadd.xlane.f32.xlu0 %v2820
        %v2822 = vpop.xlane.xlu0 %2821
        %v2823 = vmul.f32 %v2816, %v1360
        %v2824 = vmul.f32 %v2819, %v1360
        %v2825 = vmul.f32 %v2822, %v1360
        %v2826 = vadd.f32 %v2823, 1e-05
        %v2827 = vadd.f32 %v2824, 1e-05
        %v2828 = vadd.f32 %v2825, 1e-05
        %v2829 = vrsqrt.pop %v2826
        %v2830 = vmul.f32 %v2829, %v2826
        %v2831 = vmul.f32 %v2830, %v2829
        %v2832 = vmul.f32 0.5, %v2831
        %v2833 = vsub.f32 1.5, %v2832
        %v2834 = vmul.f32 %v2829, %v2833
        %vm2835 = vweird.f32 %v2826
        %vm2836 = vweird.f32 %v2829
        %vm2837 = vmor %vm2835, %vm2836
        %v2838 = vsel %vm2837, %v2829, %v2834
        %v2839 = vrsqrt.pop %v2827
        %v2840 = vmul.f32 %v2839, %v2827
        %v2841 = vmul.f32 %v2840, %v2839
        %v2842 = vmul.f32 0.5, %v2841
        %v2843 = vsub.f32 1.5, %v2842
        %v2844 = vmul.f32 %v2839, %v2843
        %vm2845 = vweird.f32 %v2827
        %vm2846 = vweird.f32 %v2839
        %vm2847 = vmor %vm2845, %vm2846
        %v2848 = vsel %vm2847, %v2839, %v2844
        %v2849 = vrsqrt.pop %v2828
        %v2850 = vmul.f32 %v2849, %v2828
        %v2851 = vmul.f32 %v2850, %v2849
        %v2852 = vmul.f32 0.5, %v2851
        %v2853 = vsub.f32 1.5, %v2852
        %v2854 = vmul.f32 %v2849, %v2853
        %vm2855 = vweird.f32 %v2828
        %vm2856 = vweird.f32 %v2849
        %vm2857 = vmor %vm2855, %vm2856
        %v2858 = vsel %vm2857, %v2849, %v2854
        %v2859 = vmul.f32 %v2808, %v2838
        %v2860 = vmul.f32 %v2809, %v2848
        %v2861 = vmul.f32 %v2810, %v2858
        %2862 = vrot.lane.b32.xlu0 %v2722, 64
        %v2863 = vpop.permute.xlu0 %2862
        %v2865 = vmul.f32 %v2859, %v2863
        %v2866 = vmul.f32 %v2860, %v2863
        %v2867 = vmul.f32 %v2861, %v2863
        %2868 = vrot.lane.b32.xlu0 %v2722, 32
        %v2869 = vpop.permute.xlu0 %2868
        %v2871 = vadd.f32 %v2865, %v2869
        %v2872 = vadd.f32 %v2866, %v2869
        %v2873 = vadd.f32 %v2867, %v2869
        %v2874 = vld [vmem:[%s377] sm:$0x1]
        %v2876 = vperm.slane %v2874, 0
        %v2878 = vld [vmem:[#allocation5] sm:$0xff]
        %v2879 = vld [vmem:[#allocation5 + $0x10] sm:$0xff]
        %v2880 = vld [vmem:[#allocation5 + $0x20] sm:$0xff]
        %v2881 = vld [vmem:[#allocation5 + $0x30] sm:$0xff]
        %v2882 = vld [vmem:[%s6] sm:$0x1]
        %v2884 = vperm.slane %v2882, 0
        %v2889 = vrot.slane %v2871, 7
        %v2890 = vrot.slane %v2872, 6
        %vm2891 = vcmask 1041409
        %v2892 = vsel %vm2891, %v2890, %v2889
        %v2893 = vrot.slane %v2873, 5
        %vm2894 = vcmask 1042434
        %v2895 = vsel %vm2894, %v2893, %v2892
        %v2896 = vsel %vm438, %v2895, 0
        %2898 = vmatpush.msra.mxu0 0.0
        %2899 = vmatpush.msra.mxu0 0.0
        %2900 = vmatpush.msra.mxu0 0.0
        %2901 = vmatpush.msra.mxu0 0.0
        %2902 = vmatpush.msra.mxu0 0.0
        %2903 = vmatpush.msra.mxu0 0.0
        %2904 = vmatpush.msra.mxu0 0.0
        %2905 = vmatpush.msra.mxu0 0.0
        %2906 = vmatpush.msra.mxu0 0.0
        %2907 = vmatpush.msra.mxu0 0.0
        %2908 = vmatpush.msra.mxu0 0.0
        %2909 = vmatpush.msra.mxu0 0.0
        %2910 = vmatpush.msra.mxu0 %v2881
        %2911 = vmatpush.msra.mxu0 %v2880
        %2912 = vmatpush.msra.mxu0 %v2879
        %2913 = vmatpush.msra.mxu0 %v2878
        %2914 = vmatmul.f32.gmra.mxu0 %v2896
        %v2915 = vpop.f32.mrf.mxu0
        %v2916 = vadd.f32 %v2884, %v2915
        %2917 = vdwg.mxu0
        %2919 = vrot.lane.b32.xlu0 %v2916, 96
        %v2920 = vpop.permute.xlu0 %2919
        %v2921 = vsel %vm477, %v2916, 0
        %v2923 = vsel %vm477, %v2920, 0
        %2925 = vmatpush.xpose.msra.mxu0 0.0
        %2926 = vmatpush.xpose.msra.mxu0 0.0
        %2927 = vmatpush.xpose.msra.mxu0 0.0
        %2928 = vmatpush.xpose.msra.mxu0 0.0
        %2929 = vmatpush.xpose.msra.mxu0 0.0
        %2930 = vmatpush.xpose.msra.mxu0 0.0
        %2931 = vmatpush.xpose.msra.mxu0 0.0
        %2932 = vmatpush.xpose.msra.mxu0 0.0
        %2933 = vmatpush.xpose.msra.mxu0 0.0
        %2934 = vmatpush.xpose.msra.mxu0 0.0
        %2935 = vmatpush.xpose.msra.mxu0 0.0
        %2936 = vmatpush.xpose.msra.mxu0 0.0
        %2937 = vmatpush.xpose.msra.mxu0 0.0
        %2938 = vmatpush.xpose.msra.mxu0 0.0
        %2939 = vmatpush.xpose.msra.mxu0 0.0
        %2940 = vmatpush.xpose.msra.mxu0 %v2923
        %2941 = vmatmul.f32.gmra.mxu0 %v2921
        %v2942 = vpop.f32.mrf.mxu0
        %v2943 = vadd.f32 %v2876, %v2942
        %2944 = vdwg.mxu0
        %vm2945 = vcmask 18432
        %v2946 = vsel %vm2945, %v2943, -inf
        %2947 = vmax.xlane.f32.xlu0 %v2946
        %v2948 = vpop.xlane.xlu0 %2947
        %v2949 = vsub.f32 %v2943, %v2948
        %v2950 = vmul.f32 %v2949, 1.442695
        %v2951 = vpow.pop %v2950
        %v2952 = vsel %vm2945, %v2951, 0.0
        %2953 = vadd.xlane.f32.xlu0 %v2952
        %v2954 = vpop.xlane.xlu0 %2953
        %v2955 = vrcp.pop %v2954
        %v2956 = vmul.f32 %v2951, %v2955
        %2957 = vrot.lane.b32.xlu0 %v2916, 64
        %v2958 = vpop.permute.xlu0 %2957
        %vm2959 = vcmask 23552
        %v2961 = vsel %vm2959, %v2956, 0
        %vm2963 = vcmask 1042432
        %v2964 = vsel %vm2963, %v2958, 0
        %2966 = vmatpush.msra.mxu0 0.0
        %2967 = vmatpush.msra.mxu0 0.0
        %2968 = vmatpush.msra.mxu0 0.0
        %2969 = vmatpush.msra.mxu0 0.0
        %2970 = vmatpush.msra.mxu0 0.0
        %2971 = vmatpush.msra.mxu0 0.0
        %2972 = vmatpush.msra.mxu0 0.0
        %2973 = vmatpush.msra.mxu0 0.0
        %2974 = vmatpush.msra.mxu0 0.0
        %2975 = vmatpush.msra.mxu0 0.0
        %2976 = vmatpush.msra.mxu0 0.0
        %2977 = vmatpush.msra.mxu0 0.0
        %2978 = vmatpush.msra.mxu0 0.0
        %2979 = vmatpush.msra.mxu0 0.0
        %2980 = vmatpush.msra.mxu0 0.0
        %2981 = vmatpush.msra.mxu0 %v2964
        %2982 = vmatmul.f32.gmra.mxu0 %v2961
        %v2983 = vpop.f32.mrf.mxu0
        %v2984 = vadd.f32 0.0, %v2983
        %2985 = vdwg.mxu0
        %2986 = vrot.lane.b32.xlu0 %v2916, 120
        %v2987 = vpop.permute.xlu0 %2986
        %2988 = vrot.lane.b32.xlu0 %v2916, 88
        %v2989 = vpop.permute.xlu0 %2988
        %v2990 = vsel %vm477, %v2987, 0
        %v2992 = vsel %vm477, %v2989, 0
        %2994 = vmatpush.xpose.msra.mxu0 0.0
        %2995 = vmatpush.xpose.msra.mxu0 0.0
        %2996 = vmatpush.xpose.msra.mxu0 0.0
        %2997 = vmatpush.xpose.msra.mxu0 0.0
        %2998 = vmatpush.xpose.msra.mxu0 0.0
        %2999 = vmatpush.xpose.msra.mxu0 0.0
        %3000 = vmatpush.xpose.msra.mxu0 0.0
        %3001 = vmatpush.xpose.msra.mxu0 0.0
        %3002 = vmatpush.xpose.msra.mxu0 0.0
        %3003 = vmatpush.xpose.msra.mxu0 0.0
        %3004 = vmatpush.xpose.msra.mxu0 0.0
        %3005 = vmatpush.xpose.msra.mxu0 0.0
        %3006 = vmatpush.xpose.msra.mxu0 0.0
        %3007 = vmatpush.xpose.msra.mxu0 0.0
        %3008 = vmatpush.xpose.msra.mxu0 0.0
        %3009 = vmatpush.xpose.msra.mxu0 %v2992
        %3010 = vmatmul.f32.gmra.mxu0 %v2990
        %v3011 = vpop.f32.mrf.mxu0
        %v3012 = vadd.f32 %v2876, %v3011
        %3013 = vdwg.mxu0
        %v3014 = vsel %vm2945, %v3012, -inf
        %3015 = vmax.xlane.f32.xlu0 %v3014
        %v3016 = vpop.xlane.xlu0 %3015
        %v3017 = vsub.f32 %v3012, %v3016
        %v3018 = vmul.f32 %v3017, 1.442695
        %v3019 = vpow.pop %v3018
        %v3020 = vsel %vm2945, %v3019, 0.0
        %3021 = vadd.xlane.f32.xlu0 %v3020
        %v3022 = vpop.xlane.xlu0 %3021
        %v3023 = vrcp.pop %v3022
        %v3024 = vmul.f32 %v3019, %v3023
        %3025 = vrot.lane.b32.xlu0 %v2916, 56
        %v3026 = vpop.permute.xlu0 %3025
        %v3028 = vsel %vm2959, %v3024, 0
        %v3030 = vsel %vm2963, %v3026, 0
        %3032 = vmatpush.msra.mxu0 0.0
        %3033 = vmatpush.msra.mxu0 0.0
        %3034 = vmatpush.msra.mxu0 0.0
        %3035 = vmatpush.msra.mxu0 0.0
        %3036 = vmatpush.msra.mxu0 0.0
        %3037 = vmatpush.msra.mxu0 0.0
        %3038 = vmatpush.msra.mxu0 0.0
        %3039 = vmatpush.msra.mxu0 0.0
        %3040 = vmatpush.msra.mxu0 0.0
        %3041 = vmatpush.msra.mxu0 0.0
        %3042 = vmatpush.msra.mxu0 0.0
        %3043 = vmatpush.msra.mxu0 0.0
        %3044 = vmatpush.msra.mxu0 0.0
        %3045 = vmatpush.msra.mxu0 0.0
        %3046 = vmatpush.msra.mxu0 0.0
        %3047 = vmatpush.msra.mxu0 %v3030
        %3048 = vmatmul.f32.gmra.mxu0 %v3028
        %v3049 = vpop.f32.mrf.mxu0
        %v3050 = vadd.f32 0.0, %v3049
        %3051 = vdwg.mxu0
        %3052 = vrot.lane.b32.xlu0 %v2916, 112
        %v3053 = vpop.permute.xlu0 %3052
        %3054 = vrot.lane.b32.xlu0 %v2916, 80
        %v3055 = vpop.permute.xlu0 %3054
        %v3056 = vsel %vm477, %v3053, 0
        %v3058 = vsel %vm477, %v3055, 0
        %3060 = vmatpush.xpose.msra.mxu0 0.0
        %3061 = vmatpush.xpose.msra.mxu0 0.0
        %3062 = vmatpush.xpose.msra.mxu0 0.0
        %3063 = vmatpush.xpose.msra.mxu0 0.0
        %3064 = vmatpush.xpose.msra.mxu0 0.0
        %3065 = vmatpush.xpose.msra.mxu0 0.0
        %3066 = vmatpush.xpose.msra.mxu0 0.0
        %3067 = vmatpush.xpose.msra.mxu0 0.0
        %3068 = vmatpush.xpose.msra.mxu0 0.0
        %3069 = vmatpush.xpose.msra.mxu0 0.0
        %3070 = vmatpush.xpose.msra.mxu0 0.0
        %3071 = vmatpush.xpose.msra.mxu0 0.0
        %3072 = vmatpush.xpose.msra.mxu0 0.0
        %3073 = vmatpush.xpose.msra.mxu0 0.0
        %3074 = vmatpush.xpose.msra.mxu0 0.0
        %3075 = vmatpush.xpose.msra.mxu0 %v3058
        %3076 = vmatmul.f32.gmra.mxu0 %v3056
        %v3077 = vpop.f32.mrf.mxu0
        %v3078 = vadd.f32 %v2876, %v3077
        %3079 = vdwg.mxu0
        %v3080 = vsel %vm2945, %v3078, -inf
        %3081 = vmax.xlane.f32.xlu0 %v3080
        %v3082 = vpop.xlane.xlu0 %3081
        %v3083 = vsub.f32 %v3078, %v3082
        %v3084 = vmul.f32 %v3083, 1.442695
        %v3085 = vpow.pop %v3084
        %v3086 = vsel %vm2945, %v3085, 0.0
        %3087 = vadd.xlane.f32.xlu0 %v3086
        %v3088 = vpop.xlane.xlu0 %3087
        %v3089 = vrcp.pop %v3088
        %v3090 = vmul.f32 %v3085, %v3089
        %3091 = vrot.lane.b32.xlu0 %v2916, 48
        %v3092 = vpop.permute.xlu0 %3091
        %v3094 = vsel %vm2959, %v3090, 0
        %v3096 = vsel %vm2963, %v3092, 0
        %3098 = vmatpush.msra.mxu0 0.0
        %3099 = vmatpush.msra.mxu0 0.0
        %3100 = vmatpush.msra.mxu0 0.0
        %3101 = vmatpush.msra.mxu0 0.0
        %3102 = vmatpush.msra.mxu0 0.0
        %3103 = vmatpush.msra.mxu0 0.0
        %3104 = vmatpush.msra.mxu0 0.0
        %3105 = vmatpush.msra.mxu0 0.0
        %3106 = vmatpush.msra.mxu0 0.0
        %3107 = vmatpush.msra.mxu0 0.0
        %3108 = vmatpush.msra.mxu0 0.0
        %3109 = vmatpush.msra.mxu0 0.0
        %3110 = vmatpush.msra.mxu0 0.0
        %3111 = vmatpush.msra.mxu0 0.0
        %3112 = vmatpush.msra.mxu0 0.0
        %3113 = vmatpush.msra.mxu0 %v3096
        %3114 = vmatmul.f32.gmra.mxu0 %v3094
        %v3115 = vpop.f32.mrf.mxu0
        %v3116 = vadd.f32 0.0, %v3115
        %3117 = vdwg.mxu0
        %3118 = vrot.lane.b32.xlu0 %v2916, 104
        %v3119 = vpop.permute.xlu0 %3118
        %3120 = vrot.lane.b32.xlu0 %v2916, 72
        %v3121 = vpop.permute.xlu0 %3120
        %v3122 = vsel %vm477, %v3119, 0
        %v3124 = vsel %vm477, %v3121, 0
        %3126 = vmatpush.xpose.msra.mxu0 0.0
        %3127 = vmatpush.xpose.msra.mxu0 0.0
        %3128 = vmatpush.xpose.msra.mxu0 0.0
        %3129 = vmatpush.xpose.msra.mxu0 0.0
        %3130 = vmatpush.xpose.msra.mxu0 0.0
        %3131 = vmatpush.xpose.msra.mxu0 0.0
        %3132 = vmatpush.xpose.msra.mxu0 0.0
        %3133 = vmatpush.xpose.msra.mxu0 0.0
        %3134 = vmatpush.xpose.msra.mxu0 0.0
        %3135 = vmatpush.xpose.msra.mxu0 0.0
        %3136 = vmatpush.xpose.msra.mxu0 0.0
        %3137 = vmatpush.xpose.msra.mxu0 0.0
        %3138 = vmatpush.xpose.msra.mxu0 0.0
        %3139 = vmatpush.xpose.msra.mxu0 0.0
        %3140 = vmatpush.xpose.msra.mxu0 0.0
        %3141 = vmatpush.xpose.msra.mxu0 %v3124
        %3142 = vmatmul.f32.gmra.mxu0 %v3122
        %v3143 = vpop.f32.mrf.mxu0
        %v3144 = vadd.f32 %v2876, %v3143
        %3145 = vdwg.mxu0
        %v3146 = vsel %vm2945, %v3144, -inf
        %3147 = vmax.xlane.f32.xlu0 %v3146
        %v3148 = vpop.xlane.xlu0 %3147
        %v3149 = vsub.f32 %v3144, %v3148
        %v3150 = vmul.f32 %v3149, 1.442695
        %v3151 = vpow.pop %v3150
        %v3152 = vsel %vm2945, %v3151, 0.0
        %3153 = vadd.xlane.f32.xlu0 %v3152
        %v3154 = vpop.xlane.xlu0 %3153
        %v3155 = vrcp.pop %v3154
        %v3156 = vmul.f32 %v3151, %v3155
        %3157 = vrot.lane.b32.xlu0 %v2916, 40
        %v3158 = vpop.permute.xlu0 %3157
        %v3160 = vsel %vm2959, %v3156, 0
        %v3162 = vsel %vm2963, %v3158, 0
        %3164 = vmatpush.msra.mxu0 0.0
        %3165 = vmatpush.msra.mxu0 0.0
        %3166 = vmatpush.msra.mxu0 0.0
        %3167 = vmatpush.msra.mxu0 0.0
        %3168 = vmatpush.msra.mxu0 0.0
        %3169 = vmatpush.msra.mxu0 0.0
        %3170 = vmatpush.msra.mxu0 0.0
        %3171 = vmatpush.msra.mxu0 0.0
        %3172 = vmatpush.msra.mxu0 0.0
        %3173 = vmatpush.msra.mxu0 0.0
        %3174 = vmatpush.msra.mxu0 0.0
        %3175 = vmatpush.msra.mxu0 0.0
        %3176 = vmatpush.msra.mxu0 0.0
        %3177 = vmatpush.msra.mxu0 0.0
        %3178 = vmatpush.msra.mxu0 0.0
        %3179 = vmatpush.msra.mxu0 %v3162
        %3180 = vmatmul.f32.gmra.mxu0 %v3160
        %v3181 = vpop.f32.mrf.mxu0
        %v3182 = vadd.f32 0.0, %v3181
        %3183 = vdwg.mxu0
        %3185 = vrot.lane.b32.xlu0 %v3050, 8
        %v3186 = vpop.permute.xlu0 %3185
        %3189 = vrot.lane.b32.xlu0 %v3116, 16
        %v3190 = vpop.permute.xlu0 %3189
        %3193 = vrot.lane.b32.xlu0 %v3182, 24
        %v3194 = vpop.permute.xlu0 %3193
        %v3196 = vsel %vm477, %v2984, %v3186
        %v3197 = vsel %vm1291, %v3196, %v3190
        %v3198 = vsel %vm1295, %v3197, %v3194
        %v3199 = vld [vmem:[#allocation5 + $0x8] sm:$0xff]
        %v3200 = vld [vmem:[#allocation5 + $0x18] sm:$0xff]
        %v3201 = vld [vmem:[#allocation5 + $0x28] sm:$0xff]
        %v3202 = vld [vmem:[#allocation5 + $0x38] sm:$0xff]
        %v3203 = vld [vmem:[%s6 + $0x1] sm:$0x1]
        %v3205 = vperm.slane %v3203, 0
        %v3208 = vsel %vm438, %v3198, 0
        %3210 = vmatpush.msra.mxu0 0.0
        %3211 = vmatpush.msra.mxu0 0.0
        %3212 = vmatpush.msra.mxu0 0.0
        %3213 = vmatpush.msra.mxu0 0.0
        %3214 = vmatpush.msra.mxu0 0.0
        %3215 = vmatpush.msra.mxu0 0.0
        %3216 = vmatpush.msra.mxu0 0.0
        %3217 = vmatpush.msra.mxu0 0.0
        %3218 = vmatpush.msra.mxu0 0.0
        %3219 = vmatpush.msra.mxu0 0.0
        %3220 = vmatpush.msra.mxu0 0.0
        %3221 = vmatpush.msra.mxu0 0.0
        %3222 = vmatpush.msra.mxu0 %v3202
        %3223 = vmatpush.msra.mxu0 %v3201
        %3224 = vmatpush.msra.mxu0 %v3200
        %3225 = vmatpush.msra.mxu0 %v3199
        %3226 = vmatmul.f32.gmra.mxu0 %v3208
        %v3227 = vpop.f32.mrf.mxu0
        %v3228 = vadd.f32 %v3205, %v3227
        %3229 = vdwg.mxu0
        %v3231 = vrot.slane %v3228, 1
        %v3232 = vrot.slane %v3228, 2
        %v3233 = vrot.slane %v3228, 3
        %v3237 = vadd.f32 %v2871, %v3231
        %v3238 = vadd.f32 %v2872, %v3232
        %v3239 = vadd.f32 %v2873, %v3233
        %v3243 = vrot.slane %v3238, 7
        %v3244 = vrot.slane %v3239, 6
        %v3245 = vsel %vm2891, %v3244, %v3243
        %vm3248 = vcmask 261127
        %v3249 = vsel %vm3248, %v3237, 0.0
        %3250 = vadd.xlane.f32.xlu0 %v3249
        %v3251 = vpop.xlane.xlu0 %3250
        %vm3252 = vcmask 254976
        %v3253 = vsel %vm3252, %v3245, 0.0
        %3254 = vadd.xlane.f32.xlu0 %v3253
        %v3255 = vpop.xlane.xlu0 %3254
        %v3256 = vmul.f32 %v3251, %v1360
        %v3257 = vmul.f32 %v3255, %v1360
        %v3260 = vrot.slane %v3257, 1
        %v3261 = vrot.slane %v3257, 2
        %v3265 = vsub.f32 %v3237, %v3256
        %v3266 = vsub.f32 %v3238, %v3260
        %v3267 = vsub.f32 %v3239, %v3261
        %v3268 = vmul.f32 %v3265, %v3265
        %v3269 = vmul.f32 %v3266, %v3266
        %v3270 = vmul.f32 %v3267, %v3267
        %v3274 = vrot.slane %v3269, 7
        %v3275 = vrot.slane %v3270, 6
        %v3276 = vsel %vm2891, %v3275, %v3274
        %v3279 = vsel %vm3248, %v3268, 0.0
        %3280 = vadd.xlane.f32.xlu0 %v3279
        %v3281 = vpop.xlane.xlu0 %3280
        %v3282 = vsel %vm3252, %v3276, 0.0
        %3283 = vadd.xlane.f32.xlu0 %v3282
        %v3284 = vpop.xlane.xlu0 %3283
        %v3285 = vmul.f32 %v3281, %v1360
        %v3286 = vmul.f32 %v3284, %v1360
        %v3287 = vadd.f32 %v3285, 1e-05
        %v3288 = vadd.f32 %v3286, 1e-05
        %v3289 = vrsqrt.pop %v3287
        %v3290 = vmul.f32 %v3289, %v3287
        %v3291 = vmul.f32 %v3290, %v3289
        %v3292 = vmul.f32 0.5, %v3291
        %v3293 = vsub.f32 1.5, %v3292
        %v3294 = vmul.f32 %v3289, %v3293
        %vm3295 = vweird.f32 %v3287
        %vm3296 = vweird.f32 %v3289
        %vm3297 = vmor %vm3295, %vm3296
        %v3298 = vsel %vm3297, %v3289, %v3294
        %v3299 = vrsqrt.pop %v3288
        %v3300 = vmul.f32 %v3299, %v3288
        %v3301 = vmul.f32 %v3300, %v3299
        %v3302 = vmul.f32 0.5, %v3301
        %v3303 = vsub.f32 1.5, %v3302
        %v3304 = vmul.f32 %v3299, %v3303
        %vm3305 = vweird.f32 %v3288
        %vm3306 = vweird.f32 %v3299
        %vm3307 = vmor %vm3305, %vm3306
        %v3308 = vsel %vm3307, %v3299, %v3304
        %v3311 = vrot.slane %v3308, 1
        %v3312 = vrot.slane %v3308, 2
        %v3316 = vmul.f32 %v3265, %v3298
        %v3317 = vmul.f32 %v3266, %v3311
        %v3318 = vmul.f32 %v3267, %v3312
        %3319 = vrot.lane.b32.xlu0 %v3205, 96
        %v3320 = vpop.permute.xlu0 %3319
        %v3322 = vmul.f32 %v3316, %v3320
        %v3323 = vmul.f32 %v3317, %v3320
        %v3324 = vmul.f32 %v3318, %v3320
        %3325 = vrot.lane.b32.xlu0 %v3205, 64
        %v3326 = vpop.permute.xlu0 %3325
        %v3328 = vadd.f32 %v3322, %v3326
        %v3329 = vadd.f32 %v3323, %v3326
        %v3330 = vadd.f32 %v3324, %v3326
        %v3331 = vld [vmem:[%s6 + $0x1] sm:$0x3]
        %v3332 = vld [vmem:[#allocation5 + $0x8] sm:$0xff]
        %v3333 = vld [vmem:[#allocation5 + $0x18] sm:$0xff]
        %v3334 = vld [vmem:[#allocation5 + $0x28] sm:$0xff]
        %v3335 = vld [vmem:[#allocation5 + $0x38] sm:$0xff]
        %v3336 = vld [vmem:[#allocation5 + $0x48] sm:$0xff]
        %v3337 = vld [vmem:[#allocation5 + $0x58] sm:$0xff]
        %v3338 = vld [vmem:[#allocation5 + $0x68] sm:$0xff]
        %v3339 = vld [vmem:[#allocation5 + $0x78] sm:$0xff]
        %v3340 = vld [vmem:[%s6 + $0x2] sm:$0x1]
        %v3342 = vperm.slane %v3331, 0
        %v3343 = vperm.slane %v3331, 1
        %v3347 = vrot.slane %v3328, 7
        %v3348 = vrot.slane %v3329, 6
        %v3349 = vsel %vm2891, %v3348, %v3347
        %v3350 = vrot.slane %v3330, 5
        %v3351 = vsel %vm2894, %v3350, %v3349
        %3356 = vrot.lane.b32.xlu0 %v3199, 96
        %v3357 = vpop.permute.xlu0 %3356
        %3358 = vrot.lane.b32.xlu0 %v3200, 96
        %v3359 = vpop.permute.xlu0 %3358
        %3360 = vrot.lane.b32.xlu0 %v3201, 96
        %v3361 = vpop.permute.xlu0 %3360
        %3362 = vrot.lane.b32.xlu0 %v3202, 96
        %v3363 = vpop.permute.xlu0 %3362
        %3368 = vrot.lane.b32.xlu0 %v3342, 32
        %v3369 = vpop.permute.xlu0 %3368
        %3370 = vrot.lane.b32.xlu0 %v3343, 32
        %v3371 = vpop.permute.xlu0 %3370
        %v3372 = vsel %vm438, %v3369, %v3371
        %v3374 = vsel %vm438, %v3351, 0
        %3376 = vmatpush.msra.mxu0 0.0
        %3377 = vmatpush.msra.mxu0 0.0
        %3378 = vmatpush.msra.mxu0 0.0
        %3379 = vmatpush.msra.mxu0 0.0
        %3380 = vmatpush.msra.mxu0 0.0
        %3381 = vmatpush.msra.mxu0 0.0
        %3382 = vmatpush.msra.mxu0 0.0
        %3383 = vmatpush.msra.mxu0 0.0
        %3384 = vmatpush.msra.mxu0 0.0
        %3385 = vmatpush.msra.mxu0 0.0
        %3386 = vmatpush.msra.mxu0 0.0
        %3387 = vmatpush.msra.mxu0 0.0
        %3388 = vmatpush.msra.mxu0 %v3363
        %3389 = vmatpush.msra.mxu0 %v3361
        %3390 = vmatpush.msra.mxu0 %v3359
        %3391 = vmatpush.msra.mxu0 %v3357
        %3392 = vmatmul.f32.gmra.mxu0 %v3374
        %v3393 = vpop.f32.mrf.mxu0
        %v3394 = vadd.f32 %v3372, %v3393
        %3395 = vdwg.mxu0
        %v3396 = vmax.f32 %v3394, 0.0
        %v3398 = vperm.slane %v3340, 0
        %3407 = vrot.lane.b32.xlu0 %v3332, 32
        %v3408 = vpop.permute.xlu0 %3407
        %3409 = vrot.lane.b32.xlu0 %v3333, 32
        %v3410 = vpop.permute.xlu0 %3409
        %3411 = vrot.lane.b32.xlu0 %v3334, 32
        %v3412 = vpop.permute.xlu0 %3411
        %3413 = vrot.lane.b32.xlu0 %v3335, 32
        %v3414 = vpop.permute.xlu0 %3413
        %3415 = vrot.lane.b32.xlu0 %v3336, 32
        %v3416 = vpop.permute.xlu0 %3415
        %3417 = vrot.lane.b32.xlu0 %v3337, 32
        %v3418 = vpop.permute.xlu0 %3417
        %3419 = vrot.lane.b32.xlu0 %v3338, 32
        %v3420 = vpop.permute.xlu0 %3419
        %3421 = vrot.lane.b32.xlu0 %v3339, 32
        %v3422 = vpop.permute.xlu0 %3421
        %3431 = vrot.lane.b32.xlu0 %v3398, 96
        %v3432 = vpop.permute.xlu0 %3431
        %v3435 = vsel %vm1540, %v3396, 0
        %3437 = vmatpush.msra.mxu0 0.0
        %3438 = vmatpush.msra.mxu0 0.0
        %3439 = vmatpush.msra.mxu0 0.0
        %3440 = vmatpush.msra.mxu0 0.0
        %3441 = vmatpush.msra.mxu0 0.0
        %3442 = vmatpush.msra.mxu0 0.0
        %3443 = vmatpush.msra.mxu0 0.0
        %3444 = vmatpush.msra.mxu0 0.0
        %3445 = vmatpush.msra.mxu0 %v3422
        %3446 = vmatpush.msra.mxu0 %v3420
        %3447 = vmatpush.msra.mxu0 %v3418
        %3448 = vmatpush.msra.mxu0 %v3416
        %3449 = vmatpush.msra.mxu0 %v3414
        %3450 = vmatpush.msra.mxu0 %v3412
        %3451 = vmatpush.msra.mxu0 %v3410
        %3452 = vmatpush.msra.mxu0 %v3408
        %3453 = vmatmul.f32.gmra.mxu0 %v3435
        %v3454 = vpop.f32.mrf.mxu0
        %v3455 = vadd.f32 %v3432, %v3454
        %3456 = vdwg.mxu0
        %v3458 = vrot.slane %v3455, 1
        %v3459 = vrot.slane %v3455, 2
        %v3460 = vrot.slane %v3455, 3
        %v3464 = vadd.f32 %v3328, %v3458
        %v3465 = vadd.f32 %v3329, %v3459
        %v3466 = vadd.f32 %v3330, %v3460
        %v3470 = vrot.slane %v3465, 7
        %v3471 = vrot.slane %v3466, 6
        %v3472 = vsel %vm2891, %v3471, %v3470
        %v3475 = vsel %vm3248, %v3464, 0.0
        %3476 = vadd.xlane.f32.xlu0 %v3475
        %v3477 = vpop.xlane.xlu0 %3476
        %v3478 = vsel %vm3252, %v3472, 0.0
        %3479 = vadd.xlane.f32.xlu0 %v3478
        %v3480 = vpop.xlane.xlu0 %3479
        %v3481 = vmul.f32 %v3477, %v1360
        %v3482 = vmul.f32 %v3480, %v1360
        %v3485 = vrot.slane %v3482, 1
        %v3486 = vrot.slane %v3482, 2
        %v3490 = vsub.f32 %v3464, %v3481
        %v3491 = vsub.f32 %v3465, %v3485
        %v3492 = vsub.f32 %v3466, %v3486
        %v3493 = vmul.f32 %v3490, %v3490
        %v3494 = vmul.f32 %v3491, %v3491
        %v3495 = vmul.f32 %v3492, %v3492
        %v3499 = vrot.slane %v3494, 7
        %v3500 = vrot.slane %v3495, 6
        %v3501 = vsel %vm2891, %v3500, %v3499
        %v3504 = vsel %vm3248, %v3493, 0.0
        %3505 = vadd.xlane.f32.xlu0 %v3504
        %v3506 = vpop.xlane.xlu0 %3505
        %v3507 = vsel %vm3252, %v3501, 0.0
        %3508 = vadd.xlane.f32.xlu0 %v3507
        %v3509 = vpop.xlane.xlu0 %3508
        %v3510 = vmul.f32 %v3506, %v1360
        %v3511 = vmul.f32 %v3509, %v1360
        %v3512 = vadd.f32 %v3510, 1e-05
        %v3513 = vadd.f32 %v3511, 1e-05
        %v3514 = vrsqrt.pop %v3512
        %v3515 = vmul.f32 %v3514, %v3512
        %v3516 = vmul.f32 %v3515, %v3514
        %v3517 = vmul.f32 0.5, %v3516
        %v3518 = vsub.f32 1.5, %v3517
        %v3519 = vmul.f32 %v3514, %v3518
        %vm3520 = vweird.f32 %v3512
        %vm3521 = vweird.f32 %v3514
        %vm3522 = vmor %vm3520, %vm3521
        %v3523 = vsel %vm3522, %v3514, %v3519
        %v3524 = vrsqrt.pop %v3513
        %v3525 = vmul.f32 %v3524, %v3513
        %v3526 = vmul.f32 %v3525, %v3524
        %v3527 = vmul.f32 0.5, %v3526
        %v3528 = vsub.f32 1.5, %v3527
        %v3529 = vmul.f32 %v3524, %v3528
        %vm3530 = vweird.f32 %v3513
        %vm3531 = vweird.f32 %v3524
        %vm3532 = vmor %vm3530, %vm3531
        %v3533 = vsel %vm3532, %v3524, %v3529
        %v3536 = vrot.slane %v3533, 1
        %v3537 = vrot.slane %v3533, 2
        %v3541 = vmul.f32 %v3490, %v3523
        %v3542 = vmul.f32 %v3491, %v3536
        %v3543 = vmul.f32 %v3492, %v3537
        %3544 = vrot.lane.b32.xlu0 %v3398, 64
        %v3545 = vpop.permute.xlu0 %3544
        %v3547 = vmul.f32 %v3541, %v3545
        %v3548 = vmul.f32 %v3542, %v3545
        %v3549 = vmul.f32 %v3543, %v3545
        %3550 = vrot.lane.b32.xlu0 %v3398, 32
        %v3551 = vpop.permute.xlu0 %3550
        %v3553 = vadd.f32 %v3547, %v3551
        %v3554 = vadd.f32 %v3548, %v3551
        %v3555 = vadd.f32 %v3549, %v3551
        %s3556 = scalar_lea.vmem [#allocation5], 128
        %v3557 = vld [vmem:[%s3556] sm:$0xff]
        %v3558 = vld [vmem:[%s3556 + $0x10] sm:$0xff]
        %v3559 = vld [vmem:[%s3556 + $0x20] sm:$0xff]
        %v3560 = vld [vmem:[%s3556 + $0x30] sm:$0xff]
        %s3561 = scalar_lea.vmem %s6, 3
        %v3562 = vld [vmem:[%s3561] sm:$0x1]
        %v3564 = vperm.slane %v3562, 0
        %v3569 = vrot.slane %v3553, 7
        %v3570 = vrot.slane %v3554, 6
        %v3571 = vsel %vm2891, %v3570, %v3569
        %v3572 = vrot.slane %v3555, 5
        %v3573 = vsel %vm2894, %v3572, %v3571
        %v3574 = vsel %vm438, %v3573, 0
        %3576 = vmatpush.msra.mxu0 0.0
        %3577 = vmatpush.msra.mxu0 0.0
        %3578 = vmatpush.msra.mxu0 0.0
        %3579 = vmatpush.msra.mxu0 0.0
        %3580 = vmatpush.msra.mxu0 0.0
        %3581 = vmatpush.msra.mxu0 0.0
        %3582 = vmatpush.msra.mxu0 0.0
        %3583 = vmatpush.msra.mxu0 0.0
        %3584 = vmatpush.msra.mxu0 0.0
        %3585 = vmatpush.msra.mxu0 0.0
        %3586 = vmatpush.msra.mxu0 0.0
        %3587 = vmatpush.msra.mxu0 0.0
        %3588 = vmatpush.msra.mxu0 %v3560
        %3589 = vmatpush.msra.mxu0 %v3559
        %3590 = vmatpush.msra.mxu0 %v3558
        %3591 = vmatpush.msra.mxu0 %v3557
        %3592 = vmatmul.f32.gmra.mxu0 %v3574
        %v3593 = vpop.f32.mrf.mxu0
        %v3594 = vadd.f32 %v3564, %v3593
        %3595 = vdwg.mxu0
        %3597 = vrot.lane.b32.xlu0 %v3594, 96
        %v3598 = vpop.permute.xlu0 %3597
        %v3599 = vsel %vm477, %v3594, 0
        %v3601 = vsel %vm477, %v3598, 0
        %3603 = vmatpush.xpose.msra.mxu0 0.0
        %3604 = vmatpush.xpose.msra.mxu0 0.0
        %3605 = vmatpush.xpose.msra.mxu0 0.0
        %3606 = vmatpush.xpose.msra.mxu0 0.0
        %3607 = vmatpush.xpose.msra.mxu0 0.0
        %3608 = vmatpush.xpose.msra.mxu0 0.0
        %3609 = vmatpush.xpose.msra.mxu0 0.0
        %3610 = vmatpush.xpose.msra.mxu0 0.0
        %3611 = vmatpush.xpose.msra.mxu0 0.0
        %3612 = vmatpush.xpose.msra.mxu0 0.0
        %3613 = vmatpush.xpose.msra.mxu0 0.0
        %3614 = vmatpush.xpose.msra.mxu0 0.0
        %3615 = vmatpush.xpose.msra.mxu0 0.0
        %3616 = vmatpush.xpose.msra.mxu0 0.0
        %3617 = vmatpush.xpose.msra.mxu0 0.0
        %3618 = vmatpush.xpose.msra.mxu0 %v3601
        %3619 = vmatmul.f32.gmra.mxu0 %v3599
        %v3620 = vpop.f32.mrf.mxu0
        %v3621 = vadd.f32 %v2876, %v3620
        %3622 = vdwg.mxu0
        %v3623 = vsel %vm2945, %v3621, -inf
        %3624 = vmax.xlane.f32.xlu0 %v3623
        %v3625 = vpop.xlane.xlu0 %3624
        %v3626 = vsub.f32 %v3621, %v3625
        %v3627 = vmul.f32 %v3626, 1.442695
        %v3628 = vpow.pop %v3627
        %v3629 = vsel %vm2945, %v3628, 0.0
        %3630 = vadd.xlane.f32.xlu0 %v3629
        %v3631 = vpop.xlane.xlu0 %3630
        %v3632 = vrcp.pop %v3631
        %v3633 = vmul.f32 %v3628, %v3632
        %3634 = vrot.lane.b32.xlu0 %v3594, 64
        %v3635 = vpop.permute.xlu0 %3634
        %v3637 = vsel %vm2959, %v3633, 0
        %v3639 = vsel %vm2963, %v3635, 0
        %3641 = vmatpush.msra.mxu0 0.0
        %3642 = vmatpush.msra.mxu0 0.0
        %3643 = vmatpush.msra.mxu0 0.0
        %3644 = vmatpush.msra.mxu0 0.0
        %3645 = vmatpush.msra.mxu0 0.0
        %3646 = vmatpush.msra.mxu0 0.0
        %3647 = vmatpush.msra.mxu0 0.0
        %3648 = vmatpush.msra.mxu0 0.0
        %3649 = vmatpush.msra.mxu0 0.0
        %3650 = vmatpush.msra.mxu0 0.0
        %3651 = vmatpush.msra.mxu0 0.0
        %3652 = vmatpush.msra.mxu0 0.0
        %3653 = vmatpush.msra.mxu0 0.0
        %3654 = vmatpush.msra.mxu0 0.0
        %3655 = vmatpush.msra.mxu0 0.0
        %3656 = vmatpush.msra.mxu0 %v3639
        %3657 = vmatmul.f32.gmra.mxu0 %v3637
        %v3658 = vpop.f32.mrf.mxu0
        %v3659 = vadd.f32 0.0, %v3658
        %3660 = vdwg.mxu0
        %3661 = vrot.lane.b32.xlu0 %v3594, 120
        %v3662 = vpop.permute.xlu0 %3661
        %3663 = vrot.lane.b32.xlu0 %v3594, 88
        %v3664 = vpop.permute.xlu0 %3663
        %v3665 = vsel %vm477, %v3662, 0
        %v3667 = vsel %vm477, %v3664, 0
        %3669 = vmatpush.xpose.msra.mxu0 0.0
        %3670 = vmatpush.xpose.msra.mxu0 0.0
        %3671 = vmatpush.xpose.msra.mxu0 0.0
        %3672 = vmatpush.xpose.msra.mxu0 0.0
        %3673 = vmatpush.xpose.msra.mxu0 0.0
        %3674 = vmatpush.xpose.msra.mxu0 0.0
        %3675 = vmatpush.xpose.msra.mxu0 0.0
        %3676 = vmatpush.xpose.msra.mxu0 0.0
        %3677 = vmatpush.xpose.msra.mxu0 0.0
        %3678 = vmatpush.xpose.msra.mxu0 0.0
        %3679 = vmatpush.xpose.msra.mxu0 0.0
        %3680 = vmatpush.xpose.msra.mxu0 0.0
        %3681 = vmatpush.xpose.msra.mxu0 0.0
        %3682 = vmatpush.xpose.msra.mxu0 0.0
        %3683 = vmatpush.xpose.msra.mxu0 0.0
        %3684 = vmatpush.xpose.msra.mxu0 %v3667
        %3685 = vmatmul.f32.gmra.mxu0 %v3665
        %v3686 = vpop.f32.mrf.mxu0
        %v3687 = vadd.f32 %v2876, %v3686
        %3688 = vdwg.mxu0
        %v3689 = vsel %vm2945, %v3687, -inf
        %3690 = vmax.xlane.f32.xlu0 %v3689
        %v3691 = vpop.xlane.xlu0 %3690
        %v3692 = vsub.f32 %v3687, %v3691
        %v3693 = vmul.f32 %v3692, 1.442695
        %v3694 = vpow.pop %v3693
        %v3695 = vsel %vm2945, %v3694, 0.0
        %3696 = vadd.xlane.f32.xlu0 %v3695
        %v3697 = vpop.xlane.xlu0 %3696
        %v3698 = vrcp.pop %v3697
        %v3699 = vmul.f32 %v3694, %v3698
        %3700 = vrot.lane.b32.xlu0 %v3594, 56
        %v3701 = vpop.permute.xlu0 %3700
        %v3703 = vsel %vm2959, %v3699, 0
        %v3705 = vsel %vm2963, %v3701, 0
        %3707 = vmatpush.msra.mxu0 0.0
        %3708 = vmatpush.msra.mxu0 0.0
        %3709 = vmatpush.msra.mxu0 0.0
        %3710 = vmatpush.msra.mxu0 0.0
        %3711 = vmatpush.msra.mxu0 0.0
        %3712 = vmatpush.msra.mxu0 0.0
        %3713 = vmatpush.msra.mxu0 0.0
        %3714 = vmatpush.msra.mxu0 0.0
        %3715 = vmatpush.msra.mxu0 0.0
        %3716 = vmatpush.msra.mxu0 0.0
        %3717 = vmatpush.msra.mxu0 0.0
        %3718 = vmatpush.msra.mxu0 0.0
        %3719 = vmatpush.msra.mxu0 0.0
        %3720 = vmatpush.msra.mxu0 0.0
        %3721 = vmatpush.msra.mxu0 0.0
        %3722 = vmatpush.msra.mxu0 %v3705
        %3723 = vmatmul.f32.gmra.mxu0 %v3703
        %v3724 = vpop.f32.mrf.mxu0
        %v3725 = vadd.f32 0.0, %v3724
        %3726 = vdwg.mxu0
        %3727 = vrot.lane.b32.xlu0 %v3594, 112
        %v3728 = vpop.permute.xlu0 %3727
        %3729 = vrot.lane.b32.xlu0 %v3594, 80
        %v3730 = vpop.permute.xlu0 %3729
        %v3731 = vsel %vm477, %v3728, 0
        %v3733 = vsel %vm477, %v3730, 0
        %3735 = vmatpush.xpose.msra.mxu0 0.0
        %3736 = vmatpush.xpose.msra.mxu0 0.0
        %3737 = vmatpush.xpose.msra.mxu0 0.0
        %3738 = vmatpush.xpose.msra.mxu0 0.0
        %3739 = vmatpush.xpose.msra.mxu0 0.0
        %3740 = vmatpush.xpose.msra.mxu0 0.0
        %3741 = vmatpush.xpose.msra.mxu0 0.0
        %3742 = vmatpush.xpose.msra.mxu0 0.0
        %3743 = vmatpush.xpose.msra.mxu0 0.0
        %3744 = vmatpush.xpose.msra.mxu0 0.0
        %3745 = vmatpush.xpose.msra.mxu0 0.0
        %3746 = vmatpush.xpose.msra.mxu0 0.0
        %3747 = vmatpush.xpose.msra.mxu0 0.0
        %3748 = vmatpush.xpose.msra.mxu0 0.0
        %3749 = vmatpush.xpose.msra.mxu0 0.0
        %3750 = vmatpush.xpose.msra.mxu0 %v3733
        %3751 = vmatmul.f32.gmra.mxu0 %v3731
        %v3752 = vpop.f32.mrf.mxu0
        %v3753 = vadd.f32 %v2876, %v3752
        %3754 = vdwg.mxu0
        %v3755 = vsel %vm2945, %v3753, -inf
        %3756 = vmax.xlane.f32.xlu0 %v3755
        %v3757 = vpop.xlane.xlu0 %3756
        %v3758 = vsub.f32 %v3753, %v3757
        %v3759 = vmul.f32 %v3758, 1.442695
        %v3760 = vpow.pop %v3759
        %v3761 = vsel %vm2945, %v3760, 0.0
        %3762 = vadd.xlane.f32.xlu0 %v3761
        %v3763 = vpop.xlane.xlu0 %3762
        %v3764 = vrcp.pop %v3763
        %v3765 = vmul.f32 %v3760, %v3764
        %3766 = vrot.lane.b32.xlu0 %v3594, 48
        %v3767 = vpop.permute.xlu0 %3766
        %v3769 = vsel %vm2959, %v3765, 0
        %v3771 = vsel %vm2963, %v3767, 0
        %3773 = vmatpush.msra.mxu0 0.0
        %3774 = vmatpush.msra.mxu0 0.0
        %3775 = vmatpush.msra.mxu0 0.0
        %3776 = vmatpush.msra.mxu0 0.0
        %3777 = vmatpush.msra.mxu0 0.0
        %3778 = vmatpush.msra.mxu0 0.0
        %3779 = vmatpush.msra.mxu0 0.0
        %3780 = vmatpush.msra.mxu0 0.0
        %3781 = vmatpush.msra.mxu0 0.0
        %3782 = vmatpush.msra.mxu0 0.0
        %3783 = vmatpush.msra.mxu0 0.0
        %3784 = vmatpush.msra.mxu0 0.0
        %3785 = vmatpush.msra.mxu0 0.0
        %3786 = vmatpush.msra.mxu0 0.0
        %3787 = vmatpush.msra.mxu0 0.0
        %3788 = vmatpush.msra.mxu0 %v3771
        %3789 = vmatmul.f32.gmra.mxu0 %v3769
        %v3790 = vpop.f32.mrf.mxu0
        %v3791 = vadd.f32 0.0, %v3790
        %3792 = vdwg.mxu0
        %3793 = vrot.lane.b32.xlu0 %v3594, 104
        %v3794 = vpop.permute.xlu0 %3793
        %3795 = vrot.lane.b32.xlu0 %v3594, 72
        %v3796 = vpop.permute.xlu0 %3795
        %v3797 = vsel %vm477, %v3794, 0
        %v3799 = vsel %vm477, %v3796, 0
        %3801 = vmatpush.xpose.msra.mxu0 0.0
        %3802 = vmatpush.xpose.msra.mxu0 0.0
        %3803 = vmatpush.xpose.msra.mxu0 0.0
        %3804 = vmatpush.xpose.msra.mxu0 0.0
        %3805 = vmatpush.xpose.msra.mxu0 0.0
        %3806 = vmatpush.xpose.msra.mxu0 0.0
        %3807 = vmatpush.xpose.msra.mxu0 0.0
        %3808 = vmatpush.xpose.msra.mxu0 0.0
        %3809 = vmatpush.xpose.msra.mxu0 0.0
        %3810 = vmatpush.xpose.msra.mxu0 0.0
        %3811 = vmatpush.xpose.msra.mxu0 0.0
        %3812 = vmatpush.xpose.msra.mxu0 0.0
        %3813 = vmatpush.xpose.msra.mxu0 0.0
        %3814 = vmatpush.xpose.msra.mxu0 0.0
        %3815 = vmatpush.xpose.msra.mxu0 0.0
        %3816 = vmatpush.xpose.msra.mxu0 %v3799
        %3817 = vmatmul.f32.gmra.mxu0 %v3797
        %v3818 = vpop.f32.mrf.mxu0
        %v3819 = vadd.f32 %v2876, %v3818
        %3820 = vdwg.mxu0
        %v3821 = vsel %vm2945, %v3819, -inf
        %3822 = vmax.xlane.f32.xlu0 %v3821
        %v3823 = vpop.xlane.xlu0 %3822
        %v3824 = vsub.f32 %v3819, %v3823
        %v3825 = vmul.f32 %v3824, 1.442695
        %v3826 = vpow.pop %v3825
        %v3827 = vsel %vm2945, %v3826, 0.0
        %3828 = vadd.xlane.f32.xlu0 %v3827
        %v3829 = vpop.xlane.xlu0 %3828
        %v3830 = vrcp.pop %v3829
        %v3831 = vmul.f32 %v3826, %v3830
        %3832 = vrot.lane.b32.xlu0 %v3594, 40
        %v3833 = vpop.permute.xlu0 %3832
        %v3835 = vsel %vm2959, %v3831, 0
        %v3837 = vsel %vm2963, %v3833, 0
        %3839 = vmatpush.msra.mxu0 0.0
        %3840 = vmatpush.msra.mxu0 0.0
        %3841 = vmatpush.msra.mxu0 0.0
        %3842 = vmatpush.msra.mxu0 0.0
        %3843 = vmatpush.msra.mxu0 0.0
        %3844 = vmatpush.msra.mxu0 0.0
        %3845 = vmatpush.msra.mxu0 0.0
        %3846 = vmatpush.msra.mxu0 0.0
        %3847 = vmatpush.msra.mxu0 0.0
        %3848 = vmatpush.msra.mxu0 0.0
        %3849 = vmatpush.msra.mxu0 0.0
        %3850 = vmatpush.msra.mxu0 0.0
        %3851 = vmatpush.msra.mxu0 0.0
        %3852 = vmatpush.msra.mxu0 0.0
        %3853 = vmatpush.msra.mxu0 0.0
        %3854 = vmatpush.msra.mxu0 %v3837
        %3855 = vmatmul.f32.gmra.mxu0 %v3835
        %v3856 = vpop.f32.mrf.mxu0
        %v3857 = vadd.f32 0.0, %v3856
        %3858 = vdwg.mxu0
        %3860 = vrot.lane.b32.xlu0 %v3725, 8
        %v3861 = vpop.permute.xlu0 %3860
        %3864 = vrot.lane.b32.xlu0 %v3791, 16
        %v3865 = vpop.permute.xlu0 %3864
        %3868 = vrot.lane.b32.xlu0 %v3857, 24
        %v3869 = vpop.permute.xlu0 %3868
        %v3871 = vsel %vm477, %v3659, %v3861
        %v3872 = vsel %vm1291, %v3871, %v3865
        %v3873 = vsel %vm1295, %v3872, %v3869
        %v3874 = vld [vmem:[%s3556 + $0x8] sm:$0xff]
        %v3875 = vld [vmem:[%s3556 + $0x18] sm:$0xff]
        %v3876 = vld [vmem:[%s3556 + $0x28] sm:$0xff]
        %v3877 = vld [vmem:[%s3556 + $0x38] sm:$0xff]
        %v3878 = vld [vmem:[%s3561 + $0x1] sm:$0x1]
        %v3880 = vperm.slane %v3878, 0
        %v3883 = vsel %vm438, %v3873, 0
        %3885 = vmatpush.msra.mxu0 0.0
        %3886 = vmatpush.msra.mxu0 0.0
        %3887 = vmatpush.msra.mxu0 0.0
        %3888 = vmatpush.msra.mxu0 0.0
        %3889 = vmatpush.msra.mxu0 0.0
        %3890 = vmatpush.msra.mxu0 0.0
        %3891 = vmatpush.msra.mxu0 0.0
        %3892 = vmatpush.msra.mxu0 0.0
        %3893 = vmatpush.msra.mxu0 0.0
        %3894 = vmatpush.msra.mxu0 0.0
        %3895 = vmatpush.msra.mxu0 0.0
        %3896 = vmatpush.msra.mxu0 0.0
        %3897 = vmatpush.msra.mxu0 %v3877
        %3898 = vmatpush.msra.mxu0 %v3876
        %3899 = vmatpush.msra.mxu0 %v3875
        %3900 = vmatpush.msra.mxu0 %v3874
        %3901 = vmatmul.f32.gmra.mxu0 %v3883
        %v3902 = vpop.f32.mrf.mxu0
        %v3903 = vadd.f32 %v3880, %v3902
        %3904 = vdwg.mxu0
        %v3906 = vrot.slane %v3903, 1
        %v3907 = vrot.slane %v3903, 2
        %v3908 = vrot.slane %v3903, 3
        %v3912 = vadd.f32 %v3553, %v3906
        %v3913 = vadd.f32 %v3554, %v3907
        %v3914 = vadd.f32 %v3555, %v3908
        %v3918 = vrot.slane %v3913, 7
        %v3919 = vrot.slane %v3914, 6
        %v3920 = vsel %vm2891, %v3919, %v3918
        %v3923 = vsel %vm3248, %v3912, 0.0
        %3924 = vadd.xlane.f32.xlu0 %v3923
        %v3925 = vpop.xlane.xlu0 %3924
        %v3926 = vsel %vm3252, %v3920, 0.0
        %3927 = vadd.xlane.f32.xlu0 %v3926
        %v3928 = vpop.xlane.xlu0 %3927
        %v3929 = vmul.f32 %v3925, %v1360
        %v3930 = vmul.f32 %v3928, %v1360
        %v3933 = vrot.slane %v3930, 1
        %v3934 = vrot.slane %v3930, 2
        %v3938 = vsub.f32 %v3912, %v3929
        %v3939 = vsub.f32 %v3913, %v3933
        %v3940 = vsub.f32 %v3914, %v3934
        %v3941 = vmul.f32 %v3938, %v3938
        %v3942 = vmul.f32 %v3939, %v3939
        %v3943 = vmul.f32 %v3940, %v3940
        %v3947 = vrot.slane %v3942, 7
        %v3948 = vrot.slane %v3943, 6
        %v3949 = vsel %vm2891, %v3948, %v3947
        %v3952 = vsel %vm3248, %v3941, 0.0
        %3953 = vadd.xlane.f32.xlu0 %v3952
        %v3954 = vpop.xlane.xlu0 %3953
        %v3955 = vsel %vm3252, %v3949, 0.0
        %3956 = vadd.xlane.f32.xlu0 %v3955
        %v3957 = vpop.xlane.xlu0 %3956
        %v3958 = vmul.f32 %v3954, %v1360
        %v3959 = vmul.f32 %v3957, %v1360
        %v3960 = vadd.f32 %v3958, 1e-05
        %v3961 = vadd.f32 %v3959, 1e-05
        %v3962 = vrsqrt.pop %v3960
        %v3963 = vmul.f32 %v3962, %v3960
        %v3964 = vmul.f32 %v3963, %v3962
        %v3965 = vmul.f32 0.5, %v3964
        %v3966 = vsub.f32 1.5, %v3965
        %v3967 = vmul.f32 %v3962, %v3966
        %vm3968 = vweird.f32 %v3960
        %vm3969 = vweird.f32 %v3962
        %vm3970 = vmor %vm3968, %vm3969
        %v3971 = vsel %vm3970, %v3962, %v3967
        %v3972 = vrsqrt.pop %v3961
        %v3973 = vmul.f32 %v3972, %v3961
        %v3974 = vmul.f32 %v3973, %v3972
        %v3975 = vmul.f32 0.5, %v3974
        %v3976 = vsub.f32 1.5, %v3975
        %v3977 = vmul.f32 %v3972, %v3976
        %vm3978 = vweird.f32 %v3961
        %vm3979 = vweird.f32 %v3972
        %vm3980 = vmor %vm3978, %vm3979
        %v3981 = vsel %vm3980, %v3972, %v3977
        %v3984 = vrot.slane %v3981, 1
        %v3985 = vrot.slane %v3981, 2
        %v3989 = vmul.f32 %v3938, %v3971
        %v3990 = vmul.f32 %v3939, %v3984
        %v3991 = vmul.f32 %v3940, %v3985
        %3992 = vrot.lane.b32.xlu0 %v3880, 96
        %v3993 = vpop.permute.xlu0 %3992
        %v3995 = vmul.f32 %v3989, %v3993
        %v3996 = vmul.f32 %v3990, %v3993
        %v3997 = vmul.f32 %v3991, %v3993
        %3998 = vrot.lane.b32.xlu0 %v3880, 64
        %v3999 = vpop.permute.xlu0 %3998
        %v4001 = vadd.f32 %v3995, %v3999
        %v4002 = vadd.f32 %v3996, %v3999
        %v4003 = vadd.f32 %v3997, %v3999
        %v4004 = vld [vmem:[%s3561 + $0x1] sm:$0x3]
        %v4005 = vld [vmem:[%s3556 + $0x8] sm:$0xff]
        %v4006 = vld [vmem:[%s3556 + $0x18] sm:$0xff]
        %v4007 = vld [vmem:[%s3556 + $0x28] sm:$0xff]
        %v4008 = vld [vmem:[%s3556 + $0x38] sm:$0xff]
        %v4009 = vld [vmem:[%s3556 + $0x48] sm:$0xff]
        %v4010 = vld [vmem:[%s3556 + $0x58] sm:$0xff]
        %v4011 = vld [vmem:[%s3556 + $0x68] sm:$0xff]
        %v4012 = vld [vmem:[%s3556 + $0x78] sm:$0xff]
        %v4013 = vld [vmem:[%s3561 + $0x2] sm:$0x1]
        %v4015 = vperm.slane %v4004, 0
        %v4016 = vperm.slane %v4004, 1
        %v4020 = vrot.slane %v4001, 7
        %v4021 = vrot.slane %v4002, 6
        %v4022 = vsel %vm2891, %v4021, %v4020
        %v4023 = vrot.slane %v4003, 5
        %v4024 = vsel %vm2894, %v4023, %v4022
        %4029 = vrot.lane.b32.xlu0 %v3874, 96
        %v4030 = vpop.permute.xlu0 %4029
        %4031 = vrot.lane.b32.xlu0 %v3875, 96
        %v4032 = vpop.permute.xlu0 %4031
        %4033 = vrot.lane.b32.xlu0 %v3876, 96
        %v4034 = vpop.permute.xlu0 %4033
        %4035 = vrot.lane.b32.xlu0 %v3877, 96
        %v4036 = vpop.permute.xlu0 %4035
        %4041 = vrot.lane.b32.xlu0 %v4015, 32
        %v4042 = vpop.permute.xlu0 %4041
        %4043 = vrot.lane.b32.xlu0 %v4016, 32
        %v4044 = vpop.permute.xlu0 %4043
        %v4045 = vsel %vm438, %v4042, %v4044
        %v4047 = vsel %vm438, %v4024, 0
        %4049 = vmatpush.msra.mxu0 0.0
        %4050 = vmatpush.msra.mxu0 0.0
        %4051 = vmatpush.msra.mxu0 0.0
        %4052 = vmatpush.msra.mxu0 0.0
        %4053 = vmatpush.msra.mxu0 0.0
        %4054 = vmatpush.msra.mxu0 0.0
        %4055 = vmatpush.msra.mxu0 0.0
        %4056 = vmatpush.msra.mxu0 0.0
        %4057 = vmatpush.msra.mxu0 0.0
        %4058 = vmatpush.msra.mxu0 0.0
        %4059 = vmatpush.msra.mxu0 0.0
        %4060 = vmatpush.msra.mxu0 0.0
        %4061 = vmatpush.msra.mxu0 %v4036
        %4062 = vmatpush.msra.mxu0 %v4034
        %4063 = vmatpush.msra.mxu0 %v4032
        %4064 = vmatpush.msra.mxu0 %v4030
        %4065 = vmatmul.f32.gmra.mxu0 %v4047
        %v4066 = vpop.f32.mrf.mxu0
        %v4067 = vadd.f32 %v4045, %v4066
        %4068 = vdwg.mxu0
        %v4069 = vmax.f32 %v4067, 0.0
        %v4071 = vperm.slane %v4013, 0
        %4080 = vrot.lane.b32.xlu0 %v4005, 32
        %v4081 = vpop.permute.xlu0 %4080
        %4082 = vrot.lane.b32.xlu0 %v4006, 32
        %v4083 = vpop.permute.xlu0 %4082
        %4084 = vrot.lane.b32.xlu0 %v4007, 32
        %v4085 = vpop.permute.xlu0 %4084
        %4086 = vrot.lane.b32.xlu0 %v4008, 32
        %v4087 = vpop.permute.xlu0 %4086
        %4088 = vrot.lane.b32.xlu0 %v4009, 32
        %v4089 = vpop.permute.xlu0 %4088
        %4090 = vrot.lane.b32.xlu0 %v4010, 32
        %v4091 = vpop.permute.xlu0 %4090
        %4092 = vrot.lane.b32.xlu0 %v4011, 32
        %v4093 = vpop.permute.xlu0 %4092
        %4094 = vrot.lane.b32.xlu0 %v4012, 32
        %v4095 = vpop.permute.xlu0 %4094
        %4104 = vrot.lane.b32.xlu0 %v4071, 96
        %v4105 = vpop.permute.xlu0 %4104
        %v4108 = vsel %vm1540, %v4069, 0
        %4110 = vmatpush.msra.mxu0 0.0
        %4111 = vmatpush.msra.mxu0 0.0
        %4112 = vmatpush.msra.mxu0 0.0
        %4113 = vmatpush.msra.mxu0 0.0
        %4114 = vmatpush.msra.mxu0 0.0
        %4115 = vmatpush.msra.mxu0 0.0
        %4116 = vmatpush.msra.mxu0 0.0
        %4117 = vmatpush.msra.mxu0 0.0
        %4118 = vmatpush.msra.mxu0 %v4095
        %4119 = vmatpush.msra.mxu0 %v4093
        %4120 = vmatpush.msra.mxu0 %v4091
        %4121 = vmatpush.msra.mxu0 %v4089
        %4122 = vmatpush.msra.mxu0 %v4087
        %4123 = vmatpush.msra.mxu0 %v4085
        %4124 = vmatpush.msra.mxu0 %v4083
        %4125 = vmatpush.msra.mxu0 %v4081
        %4126 = vmatmul.f32.gmra.mxu0 %v4108
        %v4127 = vpop.f32.mrf.mxu0
        %v4128 = vadd.f32 %v4105, %v4127
        %4129 = vdwg.mxu0
        %v4131 = vrot.slane %v4128, 1
        %v4133 = vadd.f32 %v4001, %v4131
        %v4136 = vsel %vm3248, %v4133, 0.0
        %4137 = vadd.xlane.f32.xlu0 %v4136
        %v4138 = vpop.xlane.xlu0 %4137
        %v4139 = vmul.f32 %v4138, %v1360
        %v4142 = vsub.f32 %v4133, %v4139
        %v4143 = vmul.f32 %v4142, %v4142
        %v4146 = vsel %vm3248, %v4143, 0.0
        %4147 = vadd.xlane.f32.xlu0 %v4146
        %v4148 = vpop.xlane.xlu0 %4147
        %v4149 = vmul.f32 %v4148, %v1360
        %v4150 = vadd.f32 %v4149, 1e-05
        %v4151 = vrsqrt.pop %v4150
        %v4152 = vmul.f32 %v4151, %v4150
        %v4153 = vmul.f32 %v4152, %v4151
        %v4154 = vmul.f32 0.5, %v4153
        %v4155 = vsub.f32 1.5, %v4154
        %v4156 = vmul.f32 %v4151, %v4155
        %vm4157 = vweird.f32 %v4150
        %vm4158 = vweird.f32 %v4151
        %vm4159 = vmor %vm4157, %vm4158
        %v4160 = vsel %vm4159, %v4151, %v4156
        %v4163 = vmul.f32 %v4142, %v4160
        %4164 = vrot.lane.b32.xlu0 %v4071, 64
        %v4165 = vpop.permute.xlu0 %4164
        %v4167 = vmul.f32 %v4163, %v4165
        %4168 = vrot.lane.b32.xlu0 %v4071, 32
        %v4169 = vpop.permute.xlu0 %4168
        %v4171 = vadd.f32 %v4167, %v4169
        %v4172 = vld [vmem:[%s7] sm:$0xff]
        %v4173 = vld [vmem:[%s7 + $0x10] sm:$0xff]
        %v4174 = vld [vmem:[%s7 + $0x20] sm:$0xff]
        %v4175 = vld [vmem:[%s7 + $0x30] sm:$0xff]
        %v4176 = vld [vmem:[%s8] sm:$0x1]
        %v4177 = vld [vmem:[%s7 + $0x40] sm:$0xff]
        %v4178 = vld [vmem:[%s7 + $0x50] sm:$0xff]
        %v4179 = vld [vmem:[%s7 + $0x60] sm:$0xff]
        %v4180 = vld [vmem:[%s7 + $0x70] sm:$0xff]
        %v4181 = vld [vmem:[%s7 + $0x8] sm:$0xff]
        %v4182 = vld [vmem:[%s7 + $0x18] sm:$0xff]
        %v4183 = vld [vmem:[%s7 + $0x28] sm:$0xff]
        %v4184 = vld [vmem:[%s7 + $0x38] sm:$0xff]
        %v4185 = vld [vmem:[%s8] sm:$0x3]
        %v4187 = vrot.slane %v4171, 7
        %v4188 = vsel %vm438, %v4187, 0
        %4190 = vmatpush.msra.mxu0 0.0
        %4191 = vmatpush.msra.mxu0 0.0
        %4192 = vmatpush.msra.mxu0 0.0
        %4193 = vmatpush.msra.mxu0 0.0
        %4194 = vmatpush.msra.mxu0 0.0
        %4195 = vmatpush.msra.mxu0 0.0
        %4196 = vmatpush.msra.mxu0 0.0
        %4197 = vmatpush.msra.mxu0 0.0
        %4198 = vmatpush.msra.mxu0 0.0
        %4199 = vmatpush.msra.mxu0 0.0
        %4200 = vmatpush.msra.mxu0 0.0
        %4201 = vmatpush.msra.mxu0 0.0
        %4202 = vmatpush.msra.mxu0 %v4175
        %4203 = vmatpush.msra.mxu0 %v4174
        %4204 = vmatpush.msra.mxu0 %v4173
        %4205 = vmatpush.msra.mxu0 %v4172
        %4206 = vmatmul.f32.gmra.mxu0 %v4188
        %v4207 = vpop.f32.mrf.mxu0
        %v4208 = vadd.f32 %v4176, %v4207
        %4209 = vdwg.mxu0
        %v4210 = vmul.f32 %v4208, 0.5
        %v4211 = vmul.f32 %v4208, 0.044715
        %v4212 = vmul.f32 %v4211, %v4208
        %v4213 = vmul.f32 %v4212, %v4208
        %v4214 = vadd.f32 %v4208, %v4213
        %v4215 = vmul.f32 %v4214, 0.7978846
        %v4216 = vtanh.pop %v4215
        %v4217 = vadd.f32 %v4216, 1.0
        %v4218 = vmul.f32 %v4210, %v4217
        %4227 = vrot.lane.b32.xlu0 %v4172, 64
        %v4228 = vpop.permute.xlu0 %4227
        %4229 = vrot.lane.b32.xlu0 %v4173, 64
        %v4230 = vpop.permute.xlu0 %4229
        %4231 = vrot.lane.b32.xlu0 %v4174, 64
        %v4232 = vpop.permute.xlu0 %4231
        %4233 = vrot.lane.b32.xlu0 %v4175, 64
        %v4234 = vpop.permute.xlu0 %4233
        %4235 = vrot.lane.b32.xlu0 %v4177, 64
        %v4236 = vpop.permute.xlu0 %4235
        %4237 = vrot.lane.b32.xlu0 %v4178, 64
        %v4238 = vpop.permute.xlu0 %4237
        %4239 = vrot.lane.b32.xlu0 %v4179, 64
        %v4240 = vpop.permute.xlu0 %4239
        %4241 = vrot.lane.b32.xlu0 %v4180, 64
        %v4242 = vpop.permute.xlu0 %4241
        %v4252 = vperm.slane %v4176, 0
        %4253 = vrot.lane.b32.xlu0 %v4252, 64
        %v4254 = vpop.permute.xlu0 %4253
        %v4257 = vsel %vm1540, %v4218, 0
        %4259 = vmatpush.msra.mxu0 0.0
        %4260 = vmatpush.msra.mxu0 0.0
        %4261 = vmatpush.msra.mxu0 0.0
        %4262 = vmatpush.msra.mxu0 0.0
        %4263 = vmatpush.msra.mxu0 0.0
        %4264 = vmatpush.msra.mxu0 0.0
        %4265 = vmatpush.msra.mxu0 0.0
        %4266 = vmatpush.msra.mxu0 0.0
        %4267 = vmatpush.msra.mxu0 %v4242
        %4268 = vmatpush.msra.mxu0 %v4240
        %4269 = vmatpush.msra.mxu0 %v4238
        %4270 = vmatpush.msra.mxu0 %v4236
        %4271 = vmatpush.msra.mxu0 %v4234
        %4272 = vmatpush.msra.mxu0 %v4232
        %4273 = vmatpush.msra.mxu0 %v4230
        %4274 = vmatpush.msra.mxu0 %v4228
        %4275 = vmatmul.f32.gmra.mxu0 %v4257
        %v4276 = vpop.f32.mrf.mxu0
        %v4277 = vadd.f32 %v4254, %v4276
        %4278 = vdwg.mxu0
        %v4279 = vmul.f32 %v4277, 0.5
        %v4280 = vmul.f32 %v4277, 0.044715
        %v4281 = vmul.f32 %v4280, %v4277
        %v4282 = vmul.f32 %v4281, %v4277
        %v4283 = vadd.f32 %v4277, %v4282
        %v4284 = vmul.f32 %v4283, 0.7978846
        %v4285 = vtanh.pop %v4284
        %v4286 = vadd.f32 %v4285, 1.0
        %v4287 = vmul.f32 %v4279, %v4286
        %4292 = vrot.lane.b32.xlu0 %v4172, 32
        %v4293 = vpop.permute.xlu0 %4292
        %4294 = vrot.lane.b32.xlu0 %v4181, 32
        %v4295 = vpop.permute.xlu0 %4294
        %4296 = vrot.lane.b32.xlu0 %v4173, 32
        %v4297 = vpop.permute.xlu0 %4296
        %4298 = vrot.lane.b32.xlu0 %v4182, 32
        %v4299 = vpop.permute.xlu0 %4298
        %4300 = vrot.lane.b32.xlu0 %v4174, 32
        %v4301 = vpop.permute.xlu0 %4300
        %4302 = vrot.lane.b32.xlu0 %v4183, 32
        %v4303 = vpop.permute.xlu0 %4302
        %4304 = vrot.lane.b32.xlu0 %v4175, 32
        %v4305 = vpop.permute.xlu0 %4304
        %4306 = vrot.lane.b32.xlu0 %v4184, 32
        %v4307 = vpop.permute.xlu0 %4306
        %v4308 = vsel %vm438, %v4293, %v4295
        %v4309 = vsel %vm438, %v4297, %v4299
        %v4310 = vsel %vm438, %v4301, %v4303
        %v4311 = vsel %vm438, %v4305, %v4307
        %v4317 = vperm.slane %v4185, 0
        %v4318 = vperm.slane %v4185, 1
        %4319 = vrot.lane.b32.xlu0 %v4317, 32
        %v4320 = vpop.permute.xlu0 %4319
        %4321 = vrot.lane.b32.xlu0 %v4318, 32
        %v4322 = vpop.permute.xlu0 %4321
        %v4323 = vsel %vm438, %v4320, %v4322
        %v4326 = vsel %vm438, %v4287, 0
        %4328 = vmatpush.msra.mxu0 0.0
        %4329 = vmatpush.msra.mxu0 0.0
        %4330 = vmatpush.msra.mxu0 0.0
        %4331 = vmatpush.msra.mxu0 0.0
        %4332 = vmatpush.msra.mxu0 0.0
        %4333 = vmatpush.msra.mxu0 0.0
        %4334 = vmatpush.msra.mxu0 0.0
        %4335 = vmatpush.msra.mxu0 0.0
        %4336 = vmatpush.msra.mxu0 0.0
        %4337 = vmatpush.msra.mxu0 0.0
        %4338 = vmatpush.msra.mxu0 0.0
        %4339 = vmatpush.msra.mxu0 0.0
        %4340 = vmatpush.msra.mxu0 %v4311
        %4341 = vmatpush.msra.mxu0 %v4310
        %4342 = vmatpush.msra.mxu0 %v4309
        %4343 = vmatpush.msra.mxu0 %v4308
        %4344 = vmatmul.f32.gmra.mxu0 %v4326
        %v4345 = vpop.f32.mrf.mxu0
        %v4346 = vadd.f32 %v4323, %v4345
        %4347 = vdwg.mxu0
        %4348 = vst [vmem:[%s369] sm:$0x1] %v4346
        %s4349 = sand.u32 %s232, 1
        %s4350 = scalar_lea.sflag [#allocation4], %s4349
        %s4351 = sand.u32 %s232, 1
        %s4352 = scalar_lea.vmem [#allocation7], %s4351
        // Predicated region
        $region65: #{tpu_custom_call.1} parent=55 // pred_check
          %p4353 = pneg %p242
        $region66: #{tpu_custom_call.1} parent=55 // pred_check_branch
          %4355 = sbr.rel (%p4353) target = $region68
        $region67: #{tpu_custom_call.1} parent=55 // pred_region
          %4357 = vsyncadd %s4350, 0
          %s4358 = scalar_lea.hbm %s9, %s25
          %s4360 = sshll.u32 %s4352, 4
          %s4361 = int_to_ptr.vmem [resolvable:$true] %s4360
          %s4362 = sshll.u32 %s4358, 4
          %s4363 = int_to_ptr.hbm [resolvable:$true] %s4362
          %4365 = dma.vmem_to_hbm [thread:$0]  %s4361, 16, %s4363, %s4350
        $region68: #{tpu_custom_call.1} parent=55 // pred_fallthru
          _
      $region56: #{tpu_custom_call.1} parent=5 // pred_fallthru
        _
      %p4366 = scmp.le.s32.totalorder 2, %s20
      // Predicated region
      $region69: #{tpu_custom_call.1} parent=5 // pred_check
        %p4367 = pneg %p4366
      $region70: #{tpu_custom_call.1} parent=5 // pred_check_branch
        %4369 = sbr.rel (%p4367) target = $region72
      $region71: #{tpu_custom_call.1} parent=5 // pred_region
        %s4370 = ssub.s32 %s20, 2
        // Predicated region
        $region73: #{tpu_custom_call.1} parent=71 // pred_check
          %p4371 = pneg %p248
        $region74: #{tpu_custom_call.1} parent=71 // pred_check_branch
          %4373 = sbr.rel (%p4371) target = $region76
        $region75: #{tpu_custom_call.1} parent=71 // pred_region
          %s4374 = sand.u32 %s233, 1
          %s4375 = scalar_lea.sflag [#allocation4], %s4374
          %s4376 = sand.u32 %s233, 1
          %s4377 = scalar_lea.vmem [#allocation7], %s4376
          %4379 = dma.done %s4375, 16
        $region76: #{tpu_custom_call.1} parent=71 // pred_fallthru
          _
      $region72: #{tpu_custom_call.1} parent=5 // pred_fallthru
        _
    $region6: #{tpu_custom_call.1} parent=1 // loop_footer
      %s24 = sadd.s32 1, %s20
    $region7: #{tpu_custom_call.1} parent=1 // loop_footer_branch
      %19 = sbr.rel target = $region3
    $region8: #{tpu_custom_call.1} parent=1 // loop_exit
      _
    %4380 = vsyncpa [#allocation3], 1
    %s4381 = scalar_lea.sflag [#allocation3], 1
    %4382 = vsyncpa %s4381, 1
    %4383 = vsyncpa [#allocation6], 1
    %4384 = vsyncpa [#allocation4], 1
    %s4385 = scalar_lea.sflag [#allocation4], 1
    %4386 = vsyncpa %s4385, 1

</llo_original>
